<compile_context>
chip_gen: v7x
topology: tpu7x:2x2x1
jax: 0.10.0
libtpu: 0.0.40
codegen_flags: <defaults>
</compile_context>

<pallas_src>
import functools

import jax
import jax.numpy as jnp
from jax.experimental import pallas as pl
from jax.experimental.pallas import tpu as pltpu


# ---------------------------------------------------------------------------
# Fused Pallas kernel: whole Reconstructor for one batch tile (bt images)
# ---------------------------------------------------------------------------
def _reconstructor_kernel(x_ref,
                          r1_ref, mu1_ref, m1_ref, b1_ref,
                          r2_ref, mu2_ref, m2_ref, b2_ref,
                          r3_ref, mu3_ref, m3_ref, b3_ref,
                          v_ref, vb_ref,
                          o_ref, *, bt):
    """One grid step = `bt` images stacked along the row (sublane) axis.

    x_ref  : (1, bt*H0, W0*C)   f32   input, lane-dense
    r*     : (bt*2H, bt*H)      bf16  block-diag nearest-2x row duplication
    mu*    : (3*Win*C, Wout*C)  bf16  stage's 1st conv, taps K-stacked, with
                                      the upsample column-duplication folded in
    m*     : (2, 3*W*C, W*C)    bf16  stage's 2nd/3rd conv, taps K-stacked
    b*     : (3, 1, W*C)        f32   folded BN shift + conv bias per layer
    v, vb  : (W3*C, W3*OC) bf16 / (1, W3*OC) f32   final 1x1 conv
    o_ref  : (1, bt*H3, W3*OC)  f32
    """
    bf16 = jnp.bfloat16
    f32 = jnp.float32

    def taps(a, top_keep, bot_keep):
        # [x(h-1) | x(h) | x(h+1)] with zero rows at per-image boundaries.
        rows = a.shape[0]
        a_up = jnp.where(top_keep, pltpu.roll(a, 1, axis=0), 0.0)
        a_dn = jnp.where(bot_keep, pltpu.roll(a, rows - 1, axis=0), 0.0)
        return jnp.concatenate([a_up, a, a_dn], axis=1).astype(bf16)

    def stage(a, r_ref, mu_ref, m_ref, b_ref):
        # nearest-2x row duplication (block-diagonal over the bt stacked images)
        a = jnp.dot(r_ref[...], a.astype(bf16), preferred_element_type=f32)
        rows = a.shape[0]
        h_out = rows // bt
        rid = jax.lax.broadcasted_iota(jnp.int32, (rows, 1), 0) % h_out
        top_keep = rid != 0
        bot_keep = rid != (h_out - 1)
        # layer 0: conv3x3 with the column half of the upsample folded into mu
        y = jnp.dot(taps(a, top_keep, bot_keep), mu_ref[...],
                    preferred_element_type=f32) + b_ref[0]
        a = jnp.maximum(y, 0.0)
        # layers 1, 2 (ConvBlock)
        for l in range(2):
            y = jnp.dot(taps(a, top_keep, bot_keep), m_ref[l],
                        preferred_element_type=f32) + b_ref[l + 1]
            a = jnp.maximum(y, 0.0)
        return a

    a = x_ref[0]
    a = stage(a, r1_ref, mu1_ref, m1_ref, b1_ref)
    a = stage(a, r2_ref, mu2_ref, m2_ref, b2_ref)
    a = stage(a, r3_ref, mu3_ref, m3_ref, b3_ref)

    # final 1x1 conv (channel mixing as one (W*C, W*OC) matmul)
    out = jnp.dot(a.astype(bf16), v_ref[...], preferred_element_type=f32) + vb_ref[...]
    o_ref[0] = out


def reconstructor_forward(x_nchw, packed, *, batch_tile=None):
    """x_nchw: (N, C, H0, W0) float32 -> (N, OUT_CH, 8*H0, 8*W0) float32."""
    N, C, H0, W0 = x_nchw.shape
    H3, W3 = 8 * H0, 8 * W0
    oc = packed["Vb"].shape[-1] // W3

    # batch tile per grid step: default N/2 (keeps both v7x TCs busy while still
    # stacking images along rows to fatten the matmuls); whole batch if N is odd.
    if batch_tile is None:
        batch_tile = N // 2 if (N % 2 == 0 and N > 1) else N
    bt = batch_tile
    assert N % bt == 0, "batch size must be a multiple of batch_tile"
    grid_n = N // bt

    # tiny block-diagonal nearest-2x row-duplication matrices (shape-only)
    r_mats, h = [], H0
    for _ in range(3):
        r_mats.append(make_row_upsample_blockdiag(h, bt).astype(jnp.bfloat16))
        h *= 2

    # NCHW -> lane-dense (grid_n, bt*H0, W0*C): bt images stacked along rows.
    x = jnp.transpose(x_nchw, (0, 2, 3, 1)).reshape(grid_n, bt * H0, W0 * C)
    x = x.astype(jnp.float32)

    operands = [
        x,
        r_mats[0], packed["MU1"], packed["M1"], packed["B1"],
        r_mats[1], packed["MU2"], packed["M2"], packed["B2"],
        r_mats[2], packed["MU3"], packed["M3"], packed["B3"],
        packed["V"], packed["Vb"],
    ]

    in_specs = [pl.BlockSpec((1, bt * H0, W0 * C), lambda g: (g, 0, 0))] + [
        pl.BlockSpec(a.shape, lambda g, nd=a.ndim: (0,) * nd) for a in operands[1:]
    ]

    out = pl.pallas_call(
        functools.partial(_reconstructor_kernel, bt=bt),
        out_shape=jax.ShapeDtypeStruct((grid_n, bt * H3, W3 * oc), jnp.float32),
        grid=(grid_n,),
        in_specs=in_specs,
        out_specs=pl.BlockSpec((1, bt * H3, W3 * oc), lambda g: (g, 0, 0)),
        compiler_params=pltpu.CompilerParams(
            dimension_semantics=("parallel",),   # batch tiles over megacore TCs
            vmem_limit_bytes=32 * 1024 * 1024,   # ~1.3 MB of bf16 weights; headroom
        ),
    )(*operands)

    # (grid_n, bt*H3, W3*oc) -> (N, oc, H3, W3)
    return jnp.transpose(out.reshape(N, H3, W3, oc), (0, 3, 1, 2))


# ---------------------------------------------------------------------------
# Parameter construction (deterministic, synthetic) + packing for the kernel
# ---------------------------------------------------------------------------
def make_conv_bn_raw(key, cin, cout):
    ks = jax.random.split(key, 6)
    w = jax.random.normal(ks[0], (3, 3, cin, cout), jnp.float32) / jnp.sqrt(9.0 * cin)
    b = 0.05 * jax.random.normal(ks[1], (cout,), jnp.float32)
    gamma = 1.0 + 0.1 * jax.random.normal(ks[2], (cout,), jnp.float32)
    beta = 0.1 * jax.random.normal(ks[3], (cout,), jnp.float32)
    mean = 0.1 * jax.random.normal(ks[4], (cout,), jnp.float32)
    var = jax.random.uniform(ks[5], (cout,), jnp.float32, minval=0.5, maxval=1.5)
    return dict(w=w, b=b, gamma=gamma, beta=beta, mean=mean, var=var)


def make_reconstructor_raw_params(key, c, output_ch=1):
    keys = jax.random.split(key, 10)
    raw = {
        "up4": make_conv_bn_raw(keys[0], c, c),
        "up_conv4_1": make_conv_bn_raw(keys[1], c, c),
        "up_conv4_2": make_conv_bn_raw(keys[2], c, c),
        "up3": make_conv_bn_raw(keys[3], c, c),
        "up_conv3_1": make_conv_bn_raw(keys[4], c, c),
        "up_conv3_2": make_conv_bn_raw(keys[5], c, c),
        "up2": make_conv_bn_raw(keys[6], c, c),
        "up_conv2_1": make_conv_bn_raw(keys[7], c, c),
        "up_conv2_2": make_conv_bn_raw(keys[8], c, c),
    }
    kw, kb = jax.random.split(keys[9])
    raw["conv1x1_w"] = jax.random.normal(kw, (c, output_ch), jnp.float32) / jnp.sqrt(1.0 * c)
    raw["conv1x1_b"] = 0.05 * jax.random.normal(kb, (output_ch,), jnp.float32)
    return raw


def make_row_upsample_blockdiag(h_in, bt):
    """(bt*2*h_in, bt*h_in) block-diagonal nearest-2x row duplication."""
    r = jnp.arange(bt * 2 * h_in)[:, None]
    q = jnp.arange(bt * h_in)[None, :]
    same_img = (q // h_in) == (r // (2 * h_in))
    same_row = (q % h_in) == ((r % (2 * h_in)) // 2)
    return (same_img & same_row).astype(jnp.float32)


def make_col_upsample(w_in, c):
    """(w_in*C, 2*w_in*C) nearest-2x column duplication (channel-preserving)."""
    rows = jnp.arange(w_in * c)            # w'*c + c'
    cols = jnp.arange(2 * w_in * c)        # (2w+s)*c + cc
    same_w = (cols[None, :] // (2 * c)) == (rows[:, None] // c)
    same_c = (cols[None, :] % c) == (rows[:, None] % c)
    return (same_w & same_c).astype(jnp.float32)


def make_band_matrix(w_hwio, scale, w_out):
    """M[dy, wp*Cin+ci, w*Cout+co] = W[dy, wp-w+1, ci, co] * scale[co] (0 outside band)."""
    _, _, cin, cout = w_hwio.shape
    wp = jnp.arange(w_out)
    wc = jnp.arange(w_out)
    dx = wp[:, None] - wc[None, :] + 1                               # (W, W)
    valid = (dx >= 0) & (dx <= 2)
    g = w_hwio[:, jnp.clip(dx, 0, 2), :, :]                          # (3, W, W, cin, cout)
    g = jnp.where(valid[None, :, :, None, None], g, 0.0)
    g = g * scale[None, None, None, None, :]
    return jnp.transpose(g, (0, 1, 3, 2, 4)).reshape(3, w_out * cin, w_out * cout)


def pack_stage(layer_params, w_in, c, eps=1e-5):
    """-> MU (3*Win*C, Wout*C) bf16, M12 (2, 3*Wout*C, Wout*C) bf16, B (3,1,Wout*C) f32."""
    w_out = 2 * w_in
    u = make_col_upsample(w_in, c)
    ms, bs = [], []
    for p in layer_params:
        scale = p["gamma"] / jnp.sqrt(p["var"] + eps)
        shift = p["beta"] + scale * (p["b"] - p["mean"])
        ms.append(make_band_matrix(p["w"], scale, w_out))            # (3, WC, WC)
        bs.append(jnp.tile(shift, (w_out,)).reshape(1, w_out * c))
    # fold the column half of the nearest-2x upsample into the first conv (halves its K)
    mu = jnp.einsum("ik,dkj->dij", u, ms[0]).reshape(3 * w_in * c, w_out * c)
    m12 = jnp.stack([ms[1].reshape(3 * w_out * c, w_out * c),
                     ms[2].reshape(3 * w_out * c, w_out * c)], axis=0)
    b = jnp.stack(bs, axis=0)                                        # (3, 1, WC)
    return mu.astype(jnp.bfloat16), m12.astype(jnp.bfloat16), b


def pack_conv1x1(w1, b1, w_sp, c):
    oc = w1.shape[1]
    ridx = jnp.arange(w_sp * c)
    cidx = jnp.arange(w_sp * oc)
    same_w = (ridx[:, None] // c) == (cidx[None, :] // oc)
    vals = w1[ridx[:, None] % c, cidx[None, :] % oc]
    v = jnp.where(same_w, vals, 0.0)                                 # (W*C, W*oc)
    vb = jnp.tile(b1, (w_sp,)).reshape(1, w_sp * oc)                 # (1, W*oc)
    return v.astype(jnp.bfloat16), vb


def pack_reconstructor_params(raw, c, w0, eps=1e-5):
    packed = {}
    w_in = w0
    for i, s in enumerate(("4", "3", "2"), start=1):
        layers = [raw["up" + s], raw[f"up_conv{s}_1"], raw[f"up_conv{s}_2"]]
        packed[f"MU{i}"], packed[f"M{i}"], packed[f"B{i}"] = pack_stage(layers, w_in, c, eps)
        w_in *= 2
    packed["V"], packed["Vb"] = pack_conv1x1(raw["conv1x1_w"], raw["conv1x1_b"], w_in, c)
    return packed


# ---------------------------------------------------------------------------
# Pure-JAX reference (for correctness check only)
# ---------------------------------------------------------------------------
def reference_forward(x_nchw, raw, eps=1e-5):
    x = jnp.transpose(x_nchw, (0, 2, 3, 1)).astype(jnp.float32)

    def conv_bn_relu(h, p):
        y = jax.lax.conv_general_dilated(
            h, p["w"], (1, 1), "SAME",
            dimension_numbers=("NHWC", "HWIO", "NHWC"),
            precision=jax.lax.Precision.HIGHEST)
        y = y + p["b"]
        y = (y - p["mean"]) / jnp.sqrt(p["var"] + eps) * p["gamma"] + p["beta"]
        return jnp.maximum(y, 0.0)

    def up2(h):
        return jnp.repeat(jnp.repeat(h, 2, axis=1), 2, axis=2)

    for s in ("4", "3", "2"):
        x = conv_bn_relu(up2(x), raw["up" + s])
        x = conv_bn_relu(x, raw[f"up_conv{s}_1"])
        x = conv_bn_relu(x, raw[f"up_conv{s}_2"])

    y = jnp.einsum("nhwc,co->nhwo", x, raw["conv1x1_w"],
                   precision=jax.lax.Precision.HIGHEST) + raw["conv1x1_b"]
    return jnp.transpose(y, (0, 3, 1, 2))


# ---------------------------------------------------------------------------
if __name__ == "__main__":
    key = jax.random.PRNGKey(0)
    k_x, k_p = jax.random.split(key)

    N, C, H0, W0, OUT_CH = 4, 8, 4, 4, 1
    x = jax.random.normal(k_x, (N, C, H0, W0), jnp.float32)

    raw = make_reconstructor_raw_params(k_p, C, OUT_CH)
    packed = pack_reconstructor_params(raw, C, W0)

    fwd = jax.jit(reconstructor_forward)
    out = jax.block_until_ready(fwd(x, packed))

    assert out.shape == (N, OUT_CH, 8 * H0, 8 * W0), out.shape
    assert out.dtype == jnp.float32

    ref = jax.block_until_ready(reference_forward(x, raw))
    max_err = float(jnp.max(jnp.abs(out - ref)))
    # bf16 weights/activations with f32 accumulation over 10 layers: compare
    # against a tolerance scaled to the reference magnitude.
    tol = 5e-2 * max(1.0, float(jnp.max(jnp.abs(ref))))
    assert max_err < tol, f"kernel mismatch vs reference: max abs err {max_err} (tol {tol})"

    print("KERNEL_OK")
</pallas_src>

<mosaic_0001>
module attributes {stable_mosaic.version = 11 : i64} {
  func.func @_reconstructor_kernel(%arg0: i32, %arg1: memref<1x8x32xf32, #tpu.memory_space<vmem>>, %arg2: memref<16x8xbf16, #tpu.memory_space<vmem>>, %arg3: memref<96x64xbf16, #tpu.memory_space<vmem>>, %arg4: memref<2x192x64xbf16, #tpu.memory_space<vmem>>, %arg5: memref<3x1x64xf32, #tpu.memory_space<vmem>>, %arg6: memref<32x16xbf16, #tpu.memory_space<vmem>>, %arg7: memref<192x128xbf16, #tpu.memory_space<vmem>>, %arg8: memref<2x384x128xbf16, #tpu.memory_space<vmem>>, %arg9: memref<3x1x128xf32, #tpu.memory_space<vmem>>, %arg10: memref<64x32xbf16, #tpu.memory_space<vmem>>, %arg11: memref<384x256xbf16, #tpu.memory_space<vmem>>, %arg12: memref<2x768x256xbf16, #tpu.memory_space<vmem>>, %arg13: memref<3x1x256xf32, #tpu.memory_space<vmem>>, %arg14: memref<256x32xbf16, #tpu.memory_space<vmem>>, %arg15: memref<1x32xf32, #tpu.memory_space<vmem>>, %arg16: memref<1x64x32xf32, #tpu.memory_space<vmem>>) attributes {dimension_semantics = [#tpu.dimension_semantics<parallel>], iteration_bounds = array<i64: 2>, scalar_prefetch = 0 : i64, scratch_operands = 0 : i64, tpu.core_type = #tpu.core_type<tc>, window_params = [{transform_indices = @transform_0, window_bounds = array<i64: 1, 8, 32>}, {pipeline_mode = #tpu.pipeline_mode<synchronous>, transform_indices = @transform_1, window_bounds = array<i64: 16, 8>}, {pipeline_mode = #tpu.pipeline_mode<synchronous>, transform_indices = @transform_2, window_bounds = array<i64: 96, 64>}, {pipeline_mode = #tpu.pipeline_mode<synchronous>, transform_indices = @transform_3, window_bounds = array<i64: 2, 192, 64>}, {pipeline_mode = #tpu.pipeline_mode<synchronous>, transform_indices = @transform_4, window_bounds = array<i64: 3, 1, 64>}, {pipeline_mode = #tpu.pipeline_mode<synchronous>, transform_indices = @transform_5, window_bounds = array<i64: 32, 16>}, {pipeline_mode = #tpu.pipeline_mode<synchronous>, transform_indices = @transform_6, window_bounds = array<i64: 192, 128>}, {pipeline_mode = #tpu.pipeline_mode<synchronous>, transform_indices = @transform_7, window_bounds = array<i64: 2, 384, 128>}, {pipeline_mode = #tpu.pipeline_mode<synchronous>, transform_indices = @transform_8, window_bounds = array<i64: 3, 1, 128>}, {pipeline_mode = #tpu.pipeline_mode<synchronous>, transform_indices = @transform_9, window_bounds = array<i64: 64, 32>}, {pipeline_mode = #tpu.pipeline_mode<synchronous>, transform_indices = @transform_10, window_bounds = array<i64: 384, 256>}, {pipeline_mode = #tpu.pipeline_mode<synchronous>, transform_indices = @transform_11, window_bounds = array<i64: 2, 768, 256>}, {pipeline_mode = #tpu.pipeline_mode<synchronous>, transform_indices = @transform_12, window_bounds = array<i64: 3, 1, 256>}, {pipeline_mode = #tpu.pipeline_mode<synchronous>, transform_indices = @transform_13, window_bounds = array<i64: 256, 32>}, {pipeline_mode = #tpu.pipeline_mode<synchronous>, transform_indices = @transform_14, window_bounds = array<i64: 1, 32>}, {transform_indices = @transform_15, window_bounds = array<i64: 1, 64, 32>}]} {
    %c0 = arith.constant 0 : index
    %c0_0 = arith.constant 0 : index
    %c0_1 = arith.constant 0 : index
    %0 = vector.load %arg1[%c0, %c0_0, %c0_1] : memref<1x8x32xf32, #tpu.memory_space<vmem>>, vector<1x8x32xf32>
    %1 = vector.shape_cast %0 : vector<1x8x32xf32> to vector<8x32xf32>
    %c0_2 = arith.constant 0 : index
    %c0_3 = arith.constant 0 : index
    %2 = vector.load %arg2[%c0_2, %c0_3] : memref<16x8xbf16, #tpu.memory_space<vmem>>, vector<16x8xbf16>
    %3 = arith.truncf %1 : vector<8x32xf32> to vector<8x32xbf16>
    %cst = arith.constant dense<0.000000e+00> : vector<16x32xf32>
    %4 = tpu.matmul %2, %3, %cst {dimension_numbers = #tpu.dot_dimension_numbers<[1], [0], [0], [1], [0, 0, 1, 1], [], []>} : vector<16x8xbf16>, vector<8x32xbf16>, vector<16x32xf32> -> vector<16x32xf32>
    %5 = tpu.iota {dimensions = array<i32: 0>} : vector<16x1xi32>
    %c8_i32 = arith.constant 8 : i32
    %c0_i32 = arith.constant 0 : i32
    %6 = arith.cmpi eq, %c8_i32, %c0_i32 : i32
    %c1_i32 = arith.constant 1 : i32
    %7 = arith.select %6, %c1_i32, %c8_i32 : i32
    %8 = vector.broadcast %7 : i32 to vector<16x1xi32>
    %9 = arith.remsi %5, %8 : vector<16x1xi32>
    %c0_i32_4 = arith.constant 0 : i32
    %10 = vector.broadcast %c0_i32_4 : i32 to vector<16x1xi32>
    %11 = arith.cmpi ne, %9, %10 : vector<16x1xi32>
    %c0_i32_5 = arith.constant 0 : i32
    %12 = vector.broadcast %c0_i32_5 : i32 to vector<16x1xi32>
    %13 = arith.cmpi slt, %9, %12 : vector<16x1xi32>
    %c0_i32_6 = arith.constant 0 : i32
    %14 = arith.cmpi slt, %7, %c0_i32_6 : i32
    %15 = vector.broadcast %14 : i1 to vector<16x1xi1>
    %16 = vector.broadcast %15 : vector<16x1xi1> to vector<16x1xi1>
    %17 = arith.xori %13, %16 : vector<16x1xi1>
    %18 = arith.andi %17, %11 : vector<16x1xi1>
    %19 = vector.broadcast %7 : i32 to vector<16x1xi32>
    %20 = arith.addi %9, %19 : vector<16x1xi32>
    %21 = arith.select %18, %20, %9 : vector<16x1xi1>, vector<16x1xi32>
    %c0_i32_7 = arith.constant 0 : i32
    %22 = vector.broadcast %c0_i32_7 : i32 to vector<16x1xi32>
    %23 = arith.cmpi ne, %21, %22 : vector<16x1xi32>
    %c7_i32 = arith.constant 7 : i32
    %24 = vector.broadcast %c7_i32 : i32 to vector<16x1xi32>
    %25 = arith.cmpi ne, %21, %24 : vector<16x1xi32>
    %c1_i32_8 = arith.constant 1 : i32
    %26 = tpu.dynamic_rotate %4 by %c1_i32_8 dim 0 : vector<16x32xf32>, i32 -> vector<16x32xf32>
    %cst_9 = arith.constant 0.000000e+00 : f32
    %27 = vector.shape_cast %23 : vector<16x1xi1> to vector<16x1xi1>
    %28 = vector.broadcast %27 : vector<16x1xi1> to vector<16x32xi1>
    %29 = vector.broadcast %cst_9 : f32 to vector<16x32xf32>
    %30 = arith.select %28, %26, %29 : vector<16x32xi1>, vector<16x32xf32>
    %c15_i32 = arith.constant 15 : i32
    %31 = tpu.dynamic_rotate %4 by %c15_i32 dim 0 : vector<16x32xf32>, i32 -> vector<16x32xf32>
    %cst_10 = arith.constant 0.000000e+00 : f32
    %32 = vector.shape_cast %25 : vector<16x1xi1> to vector<16x1xi1>
    %33 = vector.broadcast %32 : vector<16x1xi1> to vector<16x32xi1>
    %34 = vector.broadcast %cst_10 : f32 to vector<16x32xf32>
    %35 = arith.select %33, %31, %34 : vector<16x32xi1>, vector<16x32xf32>
    %36 = tpu.concatenate %30, %4, %35 in 1 : vector<16x32xf32>, vector<16x32xf32>, vector<16x32xf32> -> vector<16x96xf32>
    %37 = arith.truncf %36 : vector<16x96xf32> to vector<16x96xbf16>
    %c0_11 = arith.constant 0 : index
    %c0_12 = arith.constant 0 : index
    %38 = vector.load %arg3[%c0_11, %c0_12] : memref<96x64xbf16, #tpu.memory_space<vmem>>, vector<96x64xbf16>
    %cst_13 = arith.constant dense<0.000000e+00> : vector<16x64xf32>
    %39 = tpu.matmul %37, %38, %cst_13 {dimension_numbers = #tpu.dot_dimension_numbers<[1], [0], [0], [1], [0, 0, 1, 1], [], []>} : vector<16x96xbf16>, vector<96x64xbf16>, vector<16x64xf32> -> vector<16x64xf32>
    %c0_14 = arith.constant 0 : index
    %c0_15 = arith.constant 0 : index
    %c0_16 = arith.constant 0 : index
    %40 = vector.load %arg5[%c0_14, %c0_15, %c0_16] : memref<3x1x64xf32, #tpu.memory_space<vmem>>, vector<1x1x64xf32>
    %41 = vector.shape_cast %40 : vector<1x1x64xf32> to vector<1x64xf32>
    %42 = vector.broadcast %41 : vector<1x64xf32> to vector<16x64xf32>
    %43 = arith.addf %39, %42 : vector<16x64xf32>
    %cst_17 = arith.constant 0.000000e+00 : f32
    %44 = vector.broadcast %cst_17 : f32 to vector<16x64xf32>
    %45 = arith.maximumf %43, %44 : vector<16x64xf32>
    %c1_i32_18 = arith.constant 1 : i32
    %46 = tpu.dynamic_rotate %45 by %c1_i32_18 dim 0 : vector<16x64xf32>, i32 -> vector<16x64xf32>
    %cst_19 = arith.constant 0.000000e+00 : f32
    %47 = vector.shape_cast %23 : vector<16x1xi1> to vector<16x1xi1>
    %48 = vector.broadcast %47 : vector<16x1xi1> to vector<16x64xi1>
    %49 = vector.broadcast %cst_19 : f32 to vector<16x64xf32>
    %50 = arith.select %48, %46, %49 : vector<16x64xi1>, vector<16x64xf32>
    %c15_i32_20 = arith.constant 15 : i32
    %51 = tpu.dynamic_rotate %45 by %c15_i32_20 dim 0 : vector<16x64xf32>, i32 -> vector<16x64xf32>
    %cst_21 = arith.constant 0.000000e+00 : f32
    %52 = vector.shape_cast %25 : vector<16x1xi1> to vector<16x1xi1>
    %53 = vector.broadcast %52 : vector<16x1xi1> to vector<16x64xi1>
    %54 = vector.broadcast %cst_21 : f32 to vector<16x64xf32>
    %55 = arith.select %53, %51, %54 : vector<16x64xi1>, vector<16x64xf32>
    %56 = tpu.concatenate %50, %45, %55 in 1 : vector<16x64xf32>, vector<16x64xf32>, vector<16x64xf32> -> vector<16x192xf32>
    %57 = arith.truncf %56 : vector<16x192xf32> to vector<16x192xbf16>
    %c0_22 = arith.constant 0 : index
    %c0_23 = arith.constant 0 : index
    %c0_24 = arith.constant 0 : index
    %58 = vector.load %arg4[%c0_22, %c0_23, %c0_24] : memref<2x192x64xbf16, #tpu.memory_space<vmem>>, vector<1x192x64xbf16>
    %59 = vector.shape_cast %58 : vector<1x192x64xbf16> to vector<192x64xbf16>
    %cst_25 = arith.constant dense<0.000000e+00> : vector<16x64xf32>
    %60 = tpu.matmul %57, %59, %cst_25 {dimension_numbers = #tpu.dot_dimension_numbers<[1], [0], [0], [1], [0, 0, 1, 1], [], []>} : vector<16x192xbf16>, vector<192x64xbf16>, vector<16x64xf32> -> vector<16x64xf32>
    %c1 = arith.constant 1 : index
    %c0_26 = arith.constant 0 : index
    %c0_27 = arith.constant 0 : index
    %61 = vector.load %arg5[%c1, %c0_26, %c0_27] : memref<3x1x64xf32, #tpu.memory_space<vmem>>, vector<1x1x64xf32>
    %62 = vector.shape_cast %61 : vector<1x1x64xf32> to vector<1x64xf32>
    %63 = vector.broadcast %62 : vector<1x64xf32> to vector<16x64xf32>
    %64 = arith.addf %60, %63 : vector<16x64xf32>
    %cst_28 = arith.constant 0.000000e+00 : f32
    %65 = vector.broadcast %cst_28 : f32 to vector<16x64xf32>
    %66 = arith.maximumf %64, %65 : vector<16x64xf32>
    %c1_i32_29 = arith.constant 1 : i32
    %67 = tpu.dynamic_rotate %66 by %c1_i32_29 dim 0 : vector<16x64xf32>, i32 -> vector<16x64xf32>
    %cst_30 = arith.constant 0.000000e+00 : f32
    %68 = vector.shape_cast %23 : vector<16x1xi1> to vector<16x1xi1>
    %69 = vector.broadcast %68 : vector<16x1xi1> to vector<16x64xi1>
    %70 = vector.broadcast %cst_30 : f32 to vector<16x64xf32>
    %71 = arith.select %69, %67, %70 : vector<16x64xi1>, vector<16x64xf32>
    %c15_i32_31 = arith.constant 15 : i32
    %72 = tpu.dynamic_rotate %66 by %c15_i32_31 dim 0 : vector<16x64xf32>, i32 -> vector<16x64xf32>
    %cst_32 = arith.constant 0.000000e+00 : f32
    %73 = vector.shape_cast %25 : vector<16x1xi1> to vector<16x1xi1>
    %74 = vector.broadcast %73 : vector<16x1xi1> to vector<16x64xi1>
    %75 = vector.broadcast %cst_32 : f32 to vector<16x64xf32>
    %76 = arith.select %74, %72, %75 : vector<16x64xi1>, vector<16x64xf32>
    %77 = tpu.concatenate %71, %66, %76 in 1 : vector<16x64xf32>, vector<16x64xf32>, vector<16x64xf32> -> vector<16x192xf32>
    %78 = arith.truncf %77 : vector<16x192xf32> to vector<16x192xbf16>
    %c1_33 = arith.constant 1 : index
    %c0_34 = arith.constant 0 : index
    %c0_35 = arith.constant 0 : index
    %79 = vector.load %arg4[%c1_33, %c0_34, %c0_35] : memref<2x192x64xbf16, #tpu.memory_space<vmem>>, vector<1x192x64xbf16>
    %80 = vector.shape_cast %79 : vector<1x192x64xbf16> to vector<192x64xbf16>
    %cst_36 = arith.constant dense<0.000000e+00> : vector<16x64xf32>
    %81 = tpu.matmul %78, %80, %cst_36 {dimension_numbers = #tpu.dot_dimension_numbers<[1], [0], [0], [1], [0, 0, 1, 1], [], []>} : vector<16x192xbf16>, vector<192x64xbf16>, vector<16x64xf32> -> vector<16x64xf32>
    %c2 = arith.constant 2 : index
    %c0_37 = arith.constant 0 : index
    %c0_38 = arith.constant 0 : index
    %82 = vector.load %arg5[%c2, %c0_37, %c0_38] : memref<3x1x64xf32, #tpu.memory_space<vmem>>, vector<1x1x64xf32>
    %83 = vector.shape_cast %82 : vector<1x1x64xf32> to vector<1x64xf32>
    %84 = vector.broadcast %83 : vector<1x64xf32> to vector<16x64xf32>
    %85 = arith.addf %81, %84 : vector<16x64xf32>
    %cst_39 = arith.constant 0.000000e+00 : f32
    %86 = vector.broadcast %cst_39 : f32 to vector<16x64xf32>
    %87 = arith.maximumf %85, %86 : vector<16x64xf32>
    %c0_40 = arith.constant 0 : index
    %c0_41 = arith.constant 0 : index
    %88 = vector.load %arg6[%c0_40, %c0_41] : memref<32x16xbf16, #tpu.memory_space<vmem>>, vector<32x16xbf16>
    %89 = arith.truncf %87 : vector<16x64xf32> to vector<16x64xbf16>
    %cst_42 = arith.constant dense<0.000000e+00> : vector<32x64xf32>
    %90 = tpu.matmul %88, %89, %cst_42 {dimension_numbers = #tpu.dot_dimension_numbers<[1], [0], [0], [1], [0, 0, 1, 1], [], []>} : vector<32x16xbf16>, vector<16x64xbf16>, vector<32x64xf32> -> vector<32x64xf32>
    %91 = tpu.iota {dimensions = array<i32: 0>} : vector<32x1xi32>
    %c16_i32 = arith.constant 16 : i32
    %c0_i32_43 = arith.constant 0 : i32
    %92 = arith.cmpi eq, %c16_i32, %c0_i32_43 : i32
    %c1_i32_44 = arith.constant 1 : i32
    %93 = arith.select %92, %c1_i32_44, %c16_i32 : i32
    %94 = vector.broadcast %93 : i32 to vector<32x1xi32>
    %95 = arith.remsi %91, %94 : vector<32x1xi32>
    %c0_i32_45 = arith.constant 0 : i32
    %96 = vector.broadcast %c0_i32_45 : i32 to vector<32x1xi32>
    %97 = arith.cmpi ne, %95, %96 : vector<32x1xi32>
    %c0_i32_46 = arith.constant 0 : i32
    %98 = vector.broadcast %c0_i32_46 : i32 to vector<32x1xi32>
    %99 = arith.cmpi slt, %95, %98 : vector<32x1xi32>
    %c0_i32_47 = arith.constant 0 : i32
    %100 = arith.cmpi slt, %93, %c0_i32_47 : i32
    %101 = vector.broadcast %100 : i1 to vector<32x1xi1>
    %102 = vector.broadcast %101 : vector<32x1xi1> to vector<32x1xi1>
    %103 = arith.xori %99, %102 : vector<32x1xi1>
    %104 = arith.andi %103, %97 : vector<32x1xi1>
    %105 = vector.broadcast %93 : i32 to vector<32x1xi32>
    %106 = arith.addi %95, %105 : vector<32x1xi32>
    %107 = arith.select %104, %106, %95 : vector<32x1xi1>, vector<32x1xi32>
    %c0_i32_48 = arith.constant 0 : i32
    %108 = vector.broadcast %c0_i32_48 : i32 to vector<32x1xi32>
    %109 = arith.cmpi ne, %107, %108 : vector<32x1xi32>
    %c15_i32_49 = arith.constant 15 : i32
    %110 = vector.broadcast %c15_i32_49 : i32 to vector<32x1xi32>
    %111 = arith.cmpi ne, %107, %110 : vector<32x1xi32>
    %c1_i32_50 = arith.constant 1 : i32
    %112 = tpu.dynamic_rotate %90 by %c1_i32_50 dim 0 : vector<32x64xf32>, i32 -> vector<32x64xf32>
    %cst_51 = arith.constant 0.000000e+00 : f32
    %113 = vector.shape_cast %109 : vector<32x1xi1> to vector<32x1xi1>
    %114 = vector.broadcast %113 : vector<32x1xi1> to vector<32x64xi1>
    %115 = vector.broadcast %cst_51 : f32 to vector<32x64xf32>
    %116 = arith.select %114, %112, %115 : vector<32x64xi1>, vector<32x64xf32>
    %c31_i32 = arith.constant 31 : i32
    %117 = tpu.dynamic_rotate %90 by %c31_i32 dim 0 : vector<32x64xf32>, i32 -> vector<32x64xf32>
    %cst_52 = arith.constant 0.000000e+00 : f32
    %118 = vector.shape_cast %111 : vector<32x1xi1> to vector<32x1xi1>
    %119 = vector.broadcast %118 : vector<32x1xi1> to vector<32x64xi1>
    %120 = vector.broadcast %cst_52 : f32 to vector<32x64xf32>
    %121 = arith.select %119, %117, %120 : vector<32x64xi1>, vector<32x64xf32>
    %122 = tpu.concatenate %116, %90, %121 in 1 : vector<32x64xf32>, vector<32x64xf32>, vector<32x64xf32> -> vector<32x192xf32>
    %123 = arith.truncf %122 : vector<32x192xf32> to vector<32x192xbf16>
    %c0_53 = arith.constant 0 : index
    %c0_54 = arith.constant 0 : index
    %124 = vector.load %arg7[%c0_53, %c0_54] : memref<192x128xbf16, #tpu.memory_space<vmem>>, vector<192x128xbf16>
    %cst_55 = arith.constant dense<0.000000e+00> : vector<32x128xf32>
    %125 = tpu.matmul %123, %124, %cst_55 {dimension_numbers = #tpu.dot_dimension_numbers<[1], [0], [0], [1], [0, 0, 1, 1], [], []>} : vector<32x192xbf16>, vector<192x128xbf16>, vector<32x128xf32> -> vector<32x128xf32>
    %c0_56 = arith.constant 0 : index
    %c0_57 = arith.constant 0 : index
    %c0_58 = arith.constant 0 : index
    %126 = vector.load %arg9[%c0_56, %c0_57, %c0_58] : memref<3x1x128xf32, #tpu.memory_space<vmem>>, vector<1x1x128xf32>
    %127 = vector.shape_cast %126 : vector<1x1x128xf32> to vector<1x128xf32>
    %128 = vector.broadcast %127 : vector<1x128xf32> to vector<32x128xf32>
    %129 = arith.addf %125, %128 : vector<32x128xf32>
    %cst_59 = arith.constant 0.000000e+00 : f32
    %130 = vector.broadcast %cst_59 : f32 to vector<32x128xf32>
    %131 = arith.maximumf %129, %130 : vector<32x128xf32>
    %c1_i32_60 = arith.constant 1 : i32
    %132 = tpu.dynamic_rotate %131 by %c1_i32_60 dim 0 : vector<32x128xf32>, i32 -> vector<32x128xf32>
    %cst_61 = arith.constant 0.000000e+00 : f32
    %133 = vector.shape_cast %109 : vector<32x1xi1> to vector<32x1xi1>
    %134 = vector.broadcast %133 : vector<32x1xi1> to vector<32x128xi1>
    %135 = vector.broadcast %cst_61 : f32 to vector<32x128xf32>
    %136 = arith.select %134, %132, %135 : vector<32x128xi1>, vector<32x128xf32>
    %c31_i32_62 = arith.constant 31 : i32
    %137 = tpu.dynamic_rotate %131 by %c31_i32_62 dim 0 : vector<32x128xf32>, i32 -> vector<32x128xf32>
    %cst_63 = arith.constant 0.000000e+00 : f32
    %138 = vector.shape_cast %111 : vector<32x1xi1> to vector<32x1xi1>
    %139 = vector.broadcast %138 : vector<32x1xi1> to vector<32x128xi1>
    %140 = vector.broadcast %cst_63 : f32 to vector<32x128xf32>
    %141 = arith.select %139, %137, %140 : vector<32x128xi1>, vector<32x128xf32>
    %142 = tpu.concatenate %136, %131, %141 in 1 : vector<32x128xf32>, vector<32x128xf32>, vector<32x128xf32> -> vector<32x384xf32>
    %143 = arith.truncf %142 : vector<32x384xf32> to vector<32x384xbf16>
    %c0_64 = arith.constant 0 : index
    %c0_65 = arith.constant 0 : index
    %c0_66 = arith.constant 0 : index
    %144 = vector.load %arg8[%c0_64, %c0_65, %c0_66] : memref<2x384x128xbf16, #tpu.memory_space<vmem>>, vector<1x384x128xbf16>
    %145 = vector.shape_cast %144 : vector<1x384x128xbf16> to vector<384x128xbf16>
    %cst_67 = arith.constant dense<0.000000e+00> : vector<32x128xf32>
    %146 = tpu.matmul %143, %145, %cst_67 {dimension_numbers = #tpu.dot_dimension_numbers<[1], [0], [0], [1], [0, 0, 1, 1], [], []>} : vector<32x384xbf16>, vector<384x128xbf16>, vector<32x128xf32> -> vector<32x128xf32>
    %c1_68 = arith.constant 1 : index
    %c0_69 = arith.constant 0 : index
    %c0_70 = arith.constant 0 : index
    %147 = vector.load %arg9[%c1_68, %c0_69, %c0_70] : memref<3x1x128xf32, #tpu.memory_space<vmem>>, vector<1x1x128xf32>
    %148 = vector.shape_cast %147 : vector<1x1x128xf32> to vector<1x128xf32>
    %149 = vector.broadcast %148 : vector<1x128xf32> to vector<32x128xf32>
    %150 = arith.addf %146, %149 : vector<32x128xf32>
    %cst_71 = arith.constant 0.000000e+00 : f32
    %151 = vector.broadcast %cst_71 : f32 to vector<32x128xf32>
    %152 = arith.maximumf %150, %151 : vector<32x128xf32>
    %c1_i32_72 = arith.constant 1 : i32
    %153 = tpu.dynamic_rotate %152 by %c1_i32_72 dim 0 : vector<32x128xf32>, i32 -> vector<32x128xf32>
    %cst_73 = arith.constant 0.000000e+00 : f32
    %154 = vector.shape_cast %109 : vector<32x1xi1> to vector<32x1xi1>
    %155 = vector.broadcast %154 : vector<32x1xi1> to vector<32x128xi1>
    %156 = vector.broadcast %cst_73 : f32 to vector<32x128xf32>
    %157 = arith.select %155, %153, %156 : vector<32x128xi1>, vector<32x128xf32>
    %c31_i32_74 = arith.constant 31 : i32
    %158 = tpu.dynamic_rotate %152 by %c31_i32_74 dim 0 : vector<32x128xf32>, i32 -> vector<32x128xf32>
    %cst_75 = arith.constant 0.000000e+00 : f32
    %159 = vector.shape_cast %111 : vector<32x1xi1> to vector<32x1xi1>
    %160 = vector.broadcast %159 : vector<32x1xi1> to vector<32x128xi1>
    %161 = vector.broadcast %cst_75 : f32 to vector<32x128xf32>
    %162 = arith.select %160, %158, %161 : vector<32x128xi1>, vector<32x128xf32>
    %163 = tpu.concatenate %157, %152, %162 in 1 : vector<32x128xf32>, vector<32x128xf32>, vector<32x128xf32> -> vector<32x384xf32>
    %164 = arith.truncf %163 : vector<32x384xf32> to vector<32x384xbf16>
    %c1_76 = arith.constant 1 : index
    %c0_77 = arith.constant 0 : index
    %c0_78 = arith.constant 0 : index
    %165 = vector.load %arg8[%c1_76, %c0_77, %c0_78] : memref<2x384x128xbf16, #tpu.memory_space<vmem>>, vector<1x384x128xbf16>
    %166 = vector.shape_cast %165 : vector<1x384x128xbf16> to vector<384x128xbf16>
    %cst_79 = arith.constant dense<0.000000e+00> : vector<32x128xf32>
    %167 = tpu.matmul %164, %166, %cst_79 {dimension_numbers = #tpu.dot_dimension_numbers<[1], [0], [0], [1], [0, 0, 1, 1], [], []>} : vector<32x384xbf16>, vector<384x128xbf16>, vector<32x128xf32> -> vector<32x128xf32>
    %c2_80 = arith.constant 2 : index
    %c0_81 = arith.constant 0 : index
    %c0_82 = arith.constant 0 : index
    %168 = vector.load %arg9[%c2_80, %c0_81, %c0_82] : memref<3x1x128xf32, #tpu.memory_space<vmem>>, vector<1x1x128xf32>
    %169 = vector.shape_cast %168 : vector<1x1x128xf32> to vector<1x128xf32>
    %170 = vector.broadcast %169 : vector<1x128xf32> to vector<32x128xf32>
    %171 = arith.addf %167, %170 : vector<32x128xf32>
    %cst_83 = arith.constant 0.000000e+00 : f32
    %172 = vector.broadcast %cst_83 : f32 to vector<32x128xf32>
    %173 = arith.maximumf %171, %172 : vector<32x128xf32>
    %c0_84 = arith.constant 0 : index
    %c0_85 = arith.constant 0 : index
    %174 = vector.load %arg10[%c0_84, %c0_85] : memref<64x32xbf16, #tpu.memory_space<vmem>>, vector<64x32xbf16>
    %175 = arith.truncf %173 : vector<32x128xf32> to vector<32x128xbf16>
    %cst_86 = arith.constant dense<0.000000e+00> : vector<64x128xf32>
    %176 = tpu.matmul %174, %175, %cst_86 {dimension_numbers = #tpu.dot_dimension_numbers<[1], [0], [0], [1], [0, 0, 1, 1], [], []>} : vector<64x32xbf16>, vector<32x128xbf16>, vector<64x128xf32> -> vector<64x128xf32>
    %177 = tpu.iota {dimensions = array<i32: 0>} : vector<64x1xi32>
    %c32_i32 = arith.constant 32 : i32
    %c0_i32_87 = arith.constant 0 : i32
    %178 = arith.cmpi eq, %c32_i32, %c0_i32_87 : i32
    %c1_i32_88 = arith.constant 1 : i32
    %179 = arith.select %178, %c1_i32_88, %c32_i32 : i32
    %180 = vector.broadcast %179 : i32 to vector<64x1xi32>
    %181 = arith.remsi %177, %180 : vector<64x1xi32>
    %c0_i32_89 = arith.constant 0 : i32
    %182 = vector.broadcast %c0_i32_89 : i32 to vector<64x1xi32>
    %183 = arith.cmpi ne, %181, %182 : vector<64x1xi32>
    %c0_i32_90 = arith.constant 0 : i32
    %184 = vector.broadcast %c0_i32_90 : i32 to vector<64x1xi32>
    %185 = arith.cmpi slt, %181, %184 : vector<64x1xi32>
    %c0_i32_91 = arith.constant 0 : i32
    %186 = arith.cmpi slt, %179, %c0_i32_91 : i32
    %187 = vector.broadcast %186 : i1 to vector<64x1xi1>
    %188 = vector.broadcast %187 : vector<64x1xi1> to vector<64x1xi1>
    %189 = arith.xori %185, %188 : vector<64x1xi1>
    %190 = arith.andi %189, %183 : vector<64x1xi1>
    %191 = vector.broadcast %179 : i32 to vector<64x1xi32>
    %192 = arith.addi %181, %191 : vector<64x1xi32>
    %193 = arith.select %190, %192, %181 : vector<64x1xi1>, vector<64x1xi32>
    %c0_i32_92 = arith.constant 0 : i32
    %194 = vector.broadcast %c0_i32_92 : i32 to vector<64x1xi32>
    %195 = arith.cmpi ne, %193, %194 : vector<64x1xi32>
    %c31_i32_93 = arith.constant 31 : i32
    %196 = vector.broadcast %c31_i32_93 : i32 to vector<64x1xi32>
    %197 = arith.cmpi ne, %193, %196 : vector<64x1xi32>
    %c1_i32_94 = arith.constant 1 : i32
    %198 = tpu.dynamic_rotate %176 by %c1_i32_94 dim 0 : vector<64x128xf32>, i32 -> vector<64x128xf32>
    %cst_95 = arith.constant 0.000000e+00 : f32
    %199 = vector.shape_cast %195 : vector<64x1xi1> to vector<64x1xi1>
    %200 = vector.broadcast %199 : vector<64x1xi1> to vector<64x128xi1>
    %201 = vector.broadcast %cst_95 : f32 to vector<64x128xf32>
    %202 = arith.select %200, %198, %201 : vector<64x128xi1>, vector<64x128xf32>
    %c63_i32 = arith.constant 63 : i32
    %203 = tpu.dynamic_rotate %176 by %c63_i32 dim 0 : vector<64x128xf32>, i32 -> vector<64x128xf32>
    %cst_96 = arith.constant 0.000000e+00 : f32
    %204 = vector.shape_cast %197 : vector<64x1xi1> to vector<64x1xi1>
    %205 = vector.broadcast %204 : vector<64x1xi1> to vector<64x128xi1>
    %206 = vector.broadcast %cst_96 : f32 to vector<64x128xf32>
    %207 = arith.select %205, %203, %206 : vector<64x128xi1>, vector<64x128xf32>
    %208 = tpu.concatenate %202, %176, %207 in 1 : vector<64x128xf32>, vector<64x128xf32>, vector<64x128xf32> -> vector<64x384xf32>
    %209 = arith.truncf %208 : vector<64x384xf32> to vector<64x384xbf16>
    %c0_97 = arith.constant 0 : index
    %c0_98 = arith.constant 0 : index
    %210 = vector.load %arg11[%c0_97, %c0_98] : memref<384x256xbf16, #tpu.memory_space<vmem>>, vector<384x256xbf16>
    %cst_99 = arith.constant dense<0.000000e+00> : vector<64x256xf32>
    %211 = tpu.matmul %209, %210, %cst_99 {dimension_numbers = #tpu.dot_dimension_numbers<[1], [0], [0], [1], [0, 0, 1, 1], [], []>} : vector<64x384xbf16>, vector<384x256xbf16>, vector<64x256xf32> -> vector<64x256xf32>
    %c0_100 = arith.constant 0 : index
    %c0_101 = arith.constant 0 : index
    %c0_102 = arith.constant 0 : index
    %212 = vector.load %arg13[%c0_100, %c0_101, %c0_102] : memref<3x1x256xf32, #tpu.memory_space<vmem>>, vector<1x1x256xf32>
    %213 = vector.shape_cast %212 : vector<1x1x256xf32> to vector<1x256xf32>
    %214 = vector.broadcast %213 : vector<1x256xf32> to vector<64x256xf32>
    %215 = arith.addf %211, %214 : vector<64x256xf32>
    %cst_103 = arith.constant 0.000000e+00 : f32
    %216 = vector.broadcast %cst_103 : f32 to vector<64x256xf32>
    %217 = arith.maximumf %215, %216 : vector<64x256xf32>
    %c1_i32_104 = arith.constant 1 : i32
    %218 = tpu.dynamic_rotate %217 by %c1_i32_104 dim 0 : vector<64x256xf32>, i32 -> vector<64x256xf32>
    %cst_105 = arith.constant 0.000000e+00 : f32
    %219 = vector.shape_cast %195 : vector<64x1xi1> to vector<64x1xi1>
    %220 = vector.broadcast %219 : vector<64x1xi1> to vector<64x256xi1>
    %221 = vector.broadcast %cst_105 : f32 to vector<64x256xf32>
    %222 = arith.select %220, %218, %221 : vector<64x256xi1>, vector<64x256xf32>
    %c63_i32_106 = arith.constant 63 : i32
    %223 = tpu.dynamic_rotate %217 by %c63_i32_106 dim 0 : vector<64x256xf32>, i32 -> vector<64x256xf32>
    %cst_107 = arith.constant 0.000000e+00 : f32
    %224 = vector.shape_cast %197 : vector<64x1xi1> to vector<64x1xi1>
    %225 = vector.broadcast %224 : vector<64x1xi1> to vector<64x256xi1>
    %226 = vector.broadcast %cst_107 : f32 to vector<64x256xf32>
    %227 = arith.select %225, %223, %226 : vector<64x256xi1>, vector<64x256xf32>
    %228 = tpu.concatenate %222, %217, %227 in 1 : vector<64x256xf32>, vector<64x256xf32>, vector<64x256xf32> -> vector<64x768xf32>
    %229 = arith.truncf %228 : vector<64x768xf32> to vector<64x768xbf16>
    %c0_108 = arith.constant 0 : index
    %c0_109 = arith.constant 0 : index
    %c0_110 = arith.constant 0 : index
    %230 = vector.load %arg12[%c0_108, %c0_109, %c0_110] : memref<2x768x256xbf16, #tpu.memory_space<vmem>>, vector<1x768x256xbf16>
    %231 = vector.shape_cast %230 : vector<1x768x256xbf16> to vector<768x256xbf16>
    %cst_111 = arith.constant dense<0.000000e+00> : vector<64x256xf32>
    %232 = tpu.matmul %229, %231, %cst_111 {dimension_numbers = #tpu.dot_dimension_numbers<[1], [0], [0], [1], [0, 0, 1, 1], [], []>} : vector<64x768xbf16>, vector<768x256xbf16>, vector<64x256xf32> -> vector<64x256xf32>
    %c1_112 = arith.constant 1 : index
    %c0_113 = arith.constant 0 : index
    %c0_114 = arith.constant 0 : index
    %233 = vector.load %arg13[%c1_112, %c0_113, %c0_114] : memref<3x1x256xf32, #tpu.memory_space<vmem>>, vector<1x1x256xf32>
    %234 = vector.shape_cast %233 : vector<1x1x256xf32> to vector<1x256xf32>
    %235 = vector.broadcast %234 : vector<1x256xf32> to vector<64x256xf32>
    %236 = arith.addf %232, %235 : vector<64x256xf32>
    %cst_115 = arith.constant 0.000000e+00 : f32
    %237 = vector.broadcast %cst_115 : f32 to vector<64x256xf32>
    %238 = arith.maximumf %236, %237 : vector<64x256xf32>
    %c1_i32_116 = arith.constant 1 : i32
    %239 = tpu.dynamic_rotate %238 by %c1_i32_116 dim 0 : vector<64x256xf32>, i32 -> vector<64x256xf32>
    %cst_117 = arith.constant 0.000000e+00 : f32
    %240 = vector.shape_cast %195 : vector<64x1xi1> to vector<64x1xi1>
    %241 = vector.broadcast %240 : vector<64x1xi1> to vector<64x256xi1>
    %242 = vector.broadcast %cst_117 : f32 to vector<64x256xf32>
    %243 = arith.select %241, %239, %242 : vector<64x256xi1>, vector<64x256xf32>
    %c63_i32_118 = arith.constant 63 : i32
    %244 = tpu.dynamic_rotate %238 by %c63_i32_118 dim 0 : vector<64x256xf32>, i32 -> vector<64x256xf32>
    %cst_119 = arith.constant 0.000000e+00 : f32
    %245 = vector.shape_cast %197 : vector<64x1xi1> to vector<64x1xi1>
    %246 = vector.broadcast %245 : vector<64x1xi1> to vector<64x256xi1>
    %247 = vector.broadcast %cst_119 : f32 to vector<64x256xf32>
    %248 = arith.select %246, %244, %247 : vector<64x256xi1>, vector<64x256xf32>
    %249 = tpu.concatenate %243, %238, %248 in 1 : vector<64x256xf32>, vector<64x256xf32>, vector<64x256xf32> -> vector<64x768xf32>
    %250 = arith.truncf %249 : vector<64x768xf32> to vector<64x768xbf16>
    %c1_120 = arith.constant 1 : index
    %c0_121 = arith.constant 0 : index
    %c0_122 = arith.constant 0 : index
    %251 = vector.load %arg12[%c1_120, %c0_121, %c0_122] : memref<2x768x256xbf16, #tpu.memory_space<vmem>>, vector<1x768x256xbf16>
    %252 = vector.shape_cast %251 : vector<1x768x256xbf16> to vector<768x256xbf16>
    %cst_123 = arith.constant dense<0.000000e+00> : vector<64x256xf32>
    %253 = tpu.matmul %250, %252, %cst_123 {dimension_numbers = #tpu.dot_dimension_numbers<[1], [0], [0], [1], [0, 0, 1, 1], [], []>} : vector<64x768xbf16>, vector<768x256xbf16>, vector<64x256xf32> -> vector<64x256xf32>
    %c2_124 = arith.constant 2 : index
    %c0_125 = arith.constant 0 : index
    %c0_126 = arith.constant 0 : index
    %254 = vector.load %arg13[%c2_124, %c0_125, %c0_126] : memref<3x1x256xf32, #tpu.memory_space<vmem>>, vector<1x1x256xf32>
    %255 = vector.shape_cast %254 : vector<1x1x256xf32> to vector<1x256xf32>
    %256 = vector.broadcast %255 : vector<1x256xf32> to vector<64x256xf32>
    %257 = arith.addf %253, %256 : vector<64x256xf32>
    %cst_127 = arith.constant 0.000000e+00 : f32
    %258 = vector.broadcast %cst_127 : f32 to vector<64x256xf32>
    %259 = arith.maximumf %257, %258 : vector<64x256xf32>
    %260 = arith.truncf %259 : vector<64x256xf32> to vector<64x256xbf16>
    %c0_128 = arith.constant 0 : index
    %c0_129 = arith.constant 0 : index
    %261 = vector.load %arg14[%c0_128, %c0_129] : memref<256x32xbf16, #tpu.memory_space<vmem>>, vector<256x32xbf16>
    %cst_130 = arith.constant dense<0.000000e+00> : vector<64x32xf32>
    %262 = tpu.matmul %260, %261, %cst_130 {dimension_numbers = #tpu.dot_dimension_numbers<[1], [0], [0], [1], [0, 0, 1, 1], [], []>} : vector<64x256xbf16>, vector<256x32xbf16>, vector<64x32xf32> -> vector<64x32xf32>
    %c0_131 = arith.constant 0 : index
    %c0_132 = arith.constant 0 : index
    %263 = vector.load %arg15[%c0_131, %c0_132] : memref<1x32xf32, #tpu.memory_space<vmem>>, vector<1x32xf32>
    %264 = vector.broadcast %263 : vector<1x32xf32> to vector<64x32xf32>
    %265 = arith.addf %262, %264 : vector<64x32xf32>
    %c0_133 = arith.constant 0 : index
    %c0_134 = arith.constant 0 : index
    %c0_135 = arith.constant 0 : index
    %266 = vector.load %arg16[%c0_133, %c0_134, %c0_135] : memref<1x64x32xf32, #tpu.memory_space<vmem>>, vector<1x64x32xf32>
    %267 = vector.shape_cast %266 : vector<1x64x32xf32> to vector<64x32xf32>
    %268 = vector.shape_cast %265 : vector<64x32xf32> to vector<1x64x32xf32>
    tpu.vector_store %arg16[%c0_133, %c0_134, %c0_135], %268 {strides = array<i32>} : memref<1x64x32xf32, #tpu.memory_space<vmem>>, vector<1x64x32xf32>,
    return
  }
  func.func @transform_0(%arg0: i32) -> (i32, i32, i32) {
    %c0_i32 = arith.constant 0 : i32
    %c0_i32_0 = arith.constant 0 : i32
    %c0_i32_1 = arith.constant 0 : i32
    return %arg0, %c0_i32, %c0_i32_0 : i32, i32, i32
  }
  func.func @transform_1(%arg0: i32) -> (i32, i32) {
    %c0_i32 = arith.constant 0 : i32
    %c0_i32_0 = arith.constant 0 : i32
    %c0_i32_1 = arith.constant 0 : i32
    return %c0_i32, %c0_i32_0 : i32, i32
  }
  func.func @transform_2(%arg0: i32) -> (i32, i32) {
    %c0_i32 = arith.constant 0 : i32
    %c0_i32_0 = arith.constant 0 : i32
    %c0_i32_1 = arith.constant 0 : i32
    return %c0_i32, %c0_i32_0 : i32, i32
  }
  func.func @transform_3(%arg0: i32) -> (i32, i32, i32) {
    %c0_i32 = arith.constant 0 : i32
    %c0_i32_0 = arith.constant 0 : i32
    %c0_i32_1 = arith.constant 0 : i32
    %c0_i32_2 = arith.constant 0 : i32
    return %c0_i32, %c0_i32_0, %c0_i32_1 : i32, i32, i32
  }
  func.func @transform_4(%arg0: i32) -> (i32, i32, i32) {
    %c0_i32 = arith.constant 0 : i32
    %c0_i32_0 = arith.constant 0 : i32
    %c0_i32_1 = arith.constant 0 : i32
    %c0_i32_2 = arith.constant 0 : i32
    return %c0_i32, %c0_i32_0, %c0_i32_1 : i32, i32, i32
  }
  func.func @transform_5(%arg0: i32) -> (i32, i32) {
    %c0_i32 = arith.constant 0 : i32
    %c0_i32_0 = arith.constant 0 : i32
    %c0_i32_1 = arith.constant 0 : i32
    return %c0_i32, %c0_i32_0 : i32, i32
  }
  func.func @transform_6(%arg0: i32) -> (i32, i32) {
    %c0_i32 = arith.constant 0 : i32
    %c0_i32_0 = arith.constant 0 : i32
    %c0_i32_1 = arith.constant 0 : i32
    return %c0_i32, %c0_i32_0 : i32, i32
  }
  func.func @transform_7(%arg0: i32) -> (i32, i32, i32) {
    %c0_i32 = arith.constant 0 : i32
    %c0_i32_0 = arith.constant 0 : i32
    %c0_i32_1 = arith.constant 0 : i32
    %c0_i32_2 = arith.constant 0 : i32
    return %c0_i32, %c0_i32_0, %c0_i32_1 : i32, i32, i32
  }
  func.func @transform_8(%arg0: i32) -> (i32, i32, i32) {
    %c0_i32 = arith.constant 0 : i32
    %c0_i32_0 = arith.constant 0 : i32
    %c0_i32_1 = arith.constant 0 : i32
    %c0_i32_2 = arith.constant 0 : i32
    return %c0_i32, %c0_i32_0, %c0_i32_1 : i32, i32, i32
  }
  func.func @transform_9(%arg0: i32) -> (i32, i32) {
    %c0_i32 = arith.constant 0 : i32
    %c0_i32_0 = arith.constant 0 : i32
    %c0_i32_1 = arith.constant 0 : i32
    return %c0_i32, %c0_i32_0 : i32, i32
  }
  func.func @transform_10(%arg0: i32) -> (i32, i32) {
    %c0_i32 = arith.constant 0 : i32
    %c0_i32_0 = arith.constant 0 : i32
    %c0_i32_1 = arith.constant 0 : i32
    return %c0_i32, %c0_i32_0 : i32, i32
  }
  func.func @transform_11(%arg0: i32) -> (i32, i32, i32) {
    %c0_i32 = arith.constant 0 : i32
    %c0_i32_0 = arith.constant 0 : i32
    %c0_i32_1 = arith.constant 0 : i32
    %c0_i32_2 = arith.constant 0 : i32
    return %c0_i32, %c0_i32_0, %c0_i32_1 : i32, i32, i32
  }
  func.func @transform_12(%arg0: i32) -> (i32, i32, i32) {
    %c0_i32 = arith.constant 0 : i32
    %c0_i32_0 = arith.constant 0 : i32
    %c0_i32_1 = arith.constant 0 : i32
    %c0_i32_2 = arith.constant 0 : i32
    return %c0_i32, %c0_i32_0, %c0_i32_1 : i32, i32, i32
  }
  func.func @transform_13(%arg0: i32) -> (i32, i32) {
    %c0_i32 = arith.constant 0 : i32
    %c0_i32_0 = arith.constant 0 : i32
    %c0_i32_1 = arith.constant 0 : i32
    return %c0_i32, %c0_i32_0 : i32, i32
  }
  func.func @transform_14(%arg0: i32) -> (i32, i32) {
    %c0_i32 = arith.constant 0 : i32
    %c0_i32_0 = arith.constant 0 : i32
    %c0_i32_1 = arith.constant 0 : i32
    return %c0_i32, %c0_i32_0 : i32, i32
  }
  func.func @transform_15(%arg0: i32) -> (i32, i32, i32) {
    %c0_i32 = arith.constant 0 : i32
    %c0_i32_0 = arith.constant 0 : i32
    %c0_i32_1 = arith.constant 0 : i32
    return %arg0, %c0_i32, %c0_i32_0 : i32, i32, i32
  }
}

</mosaic_0001>

<llo_original>
// kernel: reconstructor_forward.1
$region0: #{reconstructor_forward.1}
  #allocation0 [shape = 'u32[]', space=smem, size = 0x4, offset = 0x4, fixed_abs, tag = 'smem constant byte address 0x4 - core index']
  #allocation1 [shape = 'u32[144,128]{1,0:T(1,128)}', space=vmem, size = 0x12000, scoped, tag = 'internal scratch']
  %s0 = inlined_call_operand.vmem [shape: f32[2,8,32], index: 0, kind: input, shape index: {}]
  %s1 = inlined_call_operand.vmem [shape: bf16[16,8], index: 1, kind: input, shape index: {}]
  %s2 = inlined_call_operand.vmem [shape: bf16[96,64], index: 2, kind: input, shape index: {}]
  %s3 = inlined_call_operand.vmem [shape: bf16[2,192,64], index: 3, kind: input, shape index: {}]
  %s4 = inlined_call_operand.hbm [shape: f32[3,1,64], index: 4, kind: input, shape index: {}]
  %s5 = inlined_call_operand.vmem [shape: bf16[32,16], index: 5, kind: input, shape index: {}]
  %s6 = inlined_call_operand.hbm [shape: bf16[192,128], index: 6, kind: input, shape index: {}]
  %s7 = inlined_call_operand.vmem [shape: bf16[2,384,128], index: 7, kind: input, shape index: {}]
  %s8 = inlined_call_operand.hbm [shape: f32[3,1,128], index: 8, kind: input, shape index: {}]
  %s9 = inlined_call_operand.vmem [shape: bf16[64,32], index: 9, kind: input, shape index: {}]
  %s10 = inlined_call_operand.vmem [shape: bf16[384,256], index: 10, kind: input, shape index: {}]
  %s11 = inlined_call_operand.hbm [shape: bf16[2,768,256], index: 11, kind: input, shape index: {}]
  %s12 = inlined_call_operand.hbm [shape: f32[3,1,256], index: 12, kind: input, shape index: {}]
  %s13 = inlined_call_operand.vmem [shape: bf16[256,32], index: 13, kind: input, shape index: {}]
  %s14 = inlined_call_operand.vmem [shape: f32[1,32], index: 14, kind: input, shape index: {}]
  %s15 = inlined_call_operand.hbm [shape: f32[2,64,32], index: 15, kind: output, shape index: {}]
  %s16 = sld [smem:[#allocation0]]
  $region113: #{reconstructor_forward.1} parent=0
    _
  %s18 = ssub.s32 1, %s16
  %s19 = scalar_select 0, %s18, %s16
  $region1: #{reconstructor_forward.1} parent=0
    #allocation2 [shape = 'u8[1536]{0}', space=vmem, size = 0x800, scoped, tag = 'input window, operand 4, single buffered']
    #allocation3 [shape = 's32[2]{0}', space=sflag, size = 0x8, scoped, tag = 'scoped memory for reconstructor_forward.1']
    #allocation4 [shape = 's32[2]{0}', space=sflag, size = 0x8, scoped, tag = 'scoped memory for reconstructor_forward.1']
    #allocation5 [shape = 'u8[49152]{0}', space=vmem, size = 0xc000, scoped, tag = 'input window, operand 6, single buffered']
    #allocation6 [shape = 's32[1]{0}', space=sflag, size = 0x4, scoped, tag = 'scoped memory for reconstructor_forward.1']
    #allocation7 [shape = 'u8[1536]{0}', space=vmem, size = 0x800, scoped, tag = 'input window, operand 8, single buffered']
    #allocation8 [shape = 'u8[786432]{0}', space=vmem, size = 0xc0000, scoped, tag = 'input window, operand 11, single buffered']
    #allocation9 [shape = 's32[1]{0}', space=sflag, size = 0x4, scoped, tag = 'scoped memory for reconstructor_forward.1']
    #allocation10 [shape = 'u8[3072]{0}', space=vmem, size = 0xc00, scoped, tag = 'input window, operand 12, single buffered']
    #allocation11 [shape = 'u8[65536]{0}', space=vmem, size = 0x10000, scoped, tag = 'output window, operand 0']
    %20 = vsyncpa [#allocation3], 0
    %21 = vsyncpa [#allocation6], 0
    %22 = vsyncpa [#allocation9], 0
    %23 = vsyncpa [#allocation4], 0
    %s24 = scalar_lea.sflag [#allocation4], 1
    %25 = vsyncpa %s24, 0
    loop: start=0, step=1, limit=4
    $region2: #{reconstructor_forward.1} parent=1 // loop_pre_header
      _
    $region3: #{reconstructor_forward.1} parent=1 // loop_header
      %s27 = sphi 0, %s31
      %p28 = scmp.ge.s32.totalorder %s27, 4
      %s37 = sphi 0, %s39
      %s40 = sphi 0, %s37
      %s41 = sphi 0, %s40
      %s57 = sphi 0, %s41
      %s61 = sphi 0, %s61
      %s63 = sphi 0, %s61
      %s64 = sphi 0, %s63
      %s78 = sphi 0, %s64
      %s82 = sphi 0, %s82
      %s84 = sphi 0, %s82
      %s85 = sphi 0, %s84
      %s99 = sphi 0, %s85
      %s103 = sphi 0, %s103
      %s105 = sphi 0, %s103
      %s106 = sphi 0, %s105
      %s120 = sphi 0, %s106
      %s124 = sphi 0, %s124
      %s126 = sphi 0, %s124
      %s127 = sphi 0, %s126
      %s141 = sphi 0, %s127
      %s145 = sphi 0, %s145
      %s147 = sphi 0, %s145
      %s148 = sphi 0, %s147
      %s162 = sphi 0, %s148
      %s166 = sphi 0, %s166
      %s168 = sphi 0, %s166
      %s169 = sphi 0, %s168
      %s183 = sphi 0, %s169
      %s187 = sphi 0, %s187
      %s189 = sphi 0, %s187
      %s190 = sphi 0, %s189
      %s204 = sphi 0, %s190
      %s208 = sphi 0, %s208
      %s210 = sphi 0, %s208
      %s211 = sphi 0, %s210
      %s225 = sphi 0, %s211
      %s229 = sphi 0, %s229
      %s231 = sphi 0, %s229
      %s232 = sphi 0, %s231
      %s246 = sphi 0, %s232
      %s250 = sphi 0, %s250
      %s252 = sphi 0, %s250
      %s253 = sphi 0, %s252
      %s267 = sphi 0, %s253
      %s271 = sphi 0, %s271
      %s273 = sphi 0, %s271
      %s274 = sphi 0, %s273
      %s288 = sphi 0, %s274
      %s292 = sphi 0, %s292
      %s294 = sphi 0, %s292
      %s295 = sphi 0, %s294
      %s309 = sphi 0, %s295
      %s313 = sphi 0, %s313
      %s315 = sphi 0, %s313
      %s316 = sphi 0, %s315
      %s330 = sphi 0, %s316
      %s334 = sphi 0, %s334
      %s336 = sphi 0, %s334
      %s337 = sphi 0, %s336
      %s351 = sphi 0, %s337
      %s357 = sphi 0, %s359
      %s360 = sphi 0, %s357
      %s361 = sphi 0, %s360
      %s377 = sphi 0, %s361
    $region4: #{reconstructor_forward.1} parent=1 // loop_header_branch
      %30 = sbr.rel (%p28) target = $region8
    $region5: #{reconstructor_forward.1} parent=1 // loop_body
      %s32 = ssub.s32 %s27, 1
      %s33 = ssub.s32 %s27, 2
      %s34 = sadd.s32 %s27, 1
      %s35 = ssub.s32 %s27, %s34
      %p36 = scmp.eq.s32.totalorder %s35, 0
      %s38 = sadd.s32 %s37, 1
      %s39 = scalar_select %p36, %s37, %s38
      %p42 = pneg %p36
      %p43 = scmp.eq.s32.totalorder %s27, 1
      %p44 = por %p42, %p43
      %p45 = scmp.ne.s32.totalorder %s37, %s40
      %p46 = scmp.eq.s32.totalorder %s27, 0
      %p47 = por %p45, %p46
      %p48 = scmp.ne.s32.totalorder %s37, %s40
      %p49 = scmp.eq.s32.totalorder %s32, 1
      %p50 = por %p48, %p49
      %p51 = scmp.ne.s32.totalorder %s40, %s41
      %p52 = scmp.eq.s32.totalorder %s32, 0
      %p53 = por %p51, %p52
      %p54 = scmp.ne.s32.totalorder %s40, %s41
      %p55 = scmp.eq.s32.totalorder %s33, 1
      %p56 = por %p54, %p55
      %p58 = scmp.ne.s32.totalorder %s41, %s57
      %p59 = scmp.eq.s32.totalorder %s33, 0
      %p60 = por %p58, %p59
      %s62 = sadd.s32 %s61, 1
      %p65 = scmp.eq.s32.totalorder %s27, 1
      %p66 = scmp.ne.s32.totalorder %s61, %s63
      %p67 = scmp.eq.s32.totalorder %s27, 0
      %p68 = por %p66, %p67
      %p69 = scmp.ne.s32.totalorder %s61, %s63
      %p70 = scmp.eq.s32.totalorder %s32, 1
      %p71 = por %p69, %p70
      %p72 = scmp.ne.s32.totalorder %s63, %s64
      %p73 = scmp.eq.s32.totalorder %s32, 0
      %p74 = por %p72, %p73
      %p75 = scmp.ne.s32.totalorder %s63, %s64
      %p76 = scmp.eq.s32.totalorder %s33, 1
      %p77 = por %p75, %p76
      %p79 = scmp.ne.s32.totalorder %s64, %s78
      %p80 = scmp.eq.s32.totalorder %s33, 0
      %p81 = por %p79, %p80
      %s83 = sadd.s32 %s82, 1
      %p86 = scmp.eq.s32.totalorder %s27, 1
      %p87 = scmp.ne.s32.totalorder %s82, %s84
      %p88 = scmp.eq.s32.totalorder %s27, 0
      %p89 = por %p87, %p88
      %p90 = scmp.ne.s32.totalorder %s82, %s84
      %p91 = scmp.eq.s32.totalorder %s32, 1
      %p92 = por %p90, %p91
      %p93 = scmp.ne.s32.totalorder %s84, %s85
      %p94 = scmp.eq.s32.totalorder %s32, 0
      %p95 = por %p93, %p94
      %p96 = scmp.ne.s32.totalorder %s84, %s85
      %p97 = scmp.eq.s32.totalorder %s33, 1
      %p98 = por %p96, %p97
      %p100 = scmp.ne.s32.totalorder %s85, %s99
      %p101 = scmp.eq.s32.totalorder %s33, 0
      %p102 = por %p100, %p101
      %s104 = sadd.s32 %s103, 1
      %p107 = scmp.eq.s32.totalorder %s27, 1
      %p108 = scmp.ne.s32.totalorder %s103, %s105
      %p109 = scmp.eq.s32.totalorder %s27, 0
      %p110 = por %p108, %p109
      %p111 = scmp.ne.s32.totalorder %s103, %s105
      %p112 = scmp.eq.s32.totalorder %s32, 1
      %p113 = por %p111, %p112
      %p114 = scmp.ne.s32.totalorder %s105, %s106
      %p115 = scmp.eq.s32.totalorder %s32, 0
      %p116 = por %p114, %p115
      %p117 = scmp.ne.s32.totalorder %s105, %s106
      %p118 = scmp.eq.s32.totalorder %s33, 1
      %p119 = por %p117, %p118
      %p121 = scmp.ne.s32.totalorder %s106, %s120
      %p122 = scmp.eq.s32.totalorder %s33, 0
      %p123 = por %p121, %p122
      %s125 = sadd.s32 %s124, 1
      %p128 = scmp.eq.s32.totalorder %s27, 1
      %p129 = scmp.ne.s32.totalorder %s124, %s126
      %p130 = scmp.eq.s32.totalorder %s27, 0
      %p131 = por %p129, %p130
      %p132 = scmp.ne.s32.totalorder %s124, %s126
      %p133 = scmp.eq.s32.totalorder %s32, 1
      %p134 = por %p132, %p133
      %p135 = scmp.ne.s32.totalorder %s126, %s127
      %p136 = scmp.eq.s32.totalorder %s32, 0
      %p137 = por %p135, %p136
      %p138 = scmp.ne.s32.totalorder %s126, %s127
      %p139 = scmp.eq.s32.totalorder %s33, 1
      %p140 = por %p138, %p139
      %p142 = scmp.ne.s32.totalorder %s127, %s141
      %p143 = scmp.eq.s32.totalorder %s33, 0
      %p144 = por %p142, %p143
      %s146 = sadd.s32 %s145, 1
      %p149 = scmp.eq.s32.totalorder %s27, 1
      %p150 = scmp.ne.s32.totalorder %s145, %s147
      %p151 = scmp.eq.s32.totalorder %s27, 0
      %p152 = por %p150, %p151
      %p153 = scmp.ne.s32.totalorder %s145, %s147
      %p154 = scmp.eq.s32.totalorder %s32, 1
      %p155 = por %p153, %p154
      %p156 = scmp.ne.s32.totalorder %s147, %s148
      %p157 = scmp.eq.s32.totalorder %s32, 0
      %p158 = por %p156, %p157
      %p159 = scmp.ne.s32.totalorder %s147, %s148
      %p160 = scmp.eq.s32.totalorder %s33, 1
      %p161 = por %p159, %p160
      %p163 = scmp.ne.s32.totalorder %s148, %s162
      %p164 = scmp.eq.s32.totalorder %s33, 0
      %p165 = por %p163, %p164
      %s167 = sadd.s32 %s166, 1
      %p170 = scmp.eq.s32.totalorder %s27, 1
      %p171 = scmp.ne.s32.totalorder %s166, %s168
      %p172 = scmp.eq.s32.totalorder %s27, 0
      %p173 = por %p171, %p172
      %p174 = scmp.ne.s32.totalorder %s166, %s168
      %p175 = scmp.eq.s32.totalorder %s32, 1
      %p176 = por %p174, %p175
      %p177 = scmp.ne.s32.totalorder %s168, %s169
      %p178 = scmp.eq.s32.totalorder %s32, 0
      %p179 = por %p177, %p178
      %p180 = scmp.ne.s32.totalorder %s168, %s169
      %p181 = scmp.eq.s32.totalorder %s33, 1
      %p182 = por %p180, %p181
      %p184 = scmp.ne.s32.totalorder %s169, %s183
      %p185 = scmp.eq.s32.totalorder %s33, 0
      %p186 = por %p184, %p185
      %s188 = sadd.s32 %s187, 1
      %p191 = scmp.eq.s32.totalorder %s27, 1
      %p192 = scmp.ne.s32.totalorder %s187, %s189
      %p193 = scmp.eq.s32.totalorder %s27, 0
      %p194 = por %p192, %p193
      %p195 = scmp.ne.s32.totalorder %s187, %s189
      %p196 = scmp.eq.s32.totalorder %s32, 1
      %p197 = por %p195, %p196
      %p198 = scmp.ne.s32.totalorder %s189, %s190
      %p199 = scmp.eq.s32.totalorder %s32, 0
      %p200 = por %p198, %p199
      %p201 = scmp.ne.s32.totalorder %s189, %s190
      %p202 = scmp.eq.s32.totalorder %s33, 1
      %p203 = por %p201, %p202
      %p205 = scmp.ne.s32.totalorder %s190, %s204
      %p206 = scmp.eq.s32.totalorder %s33, 0
      %p207 = por %p205, %p206
      %s209 = sadd.s32 %s208, 1
      %p212 = scmp.eq.s32.totalorder %s27, 1
      %p213 = scmp.ne.s32.totalorder %s208, %s210
      %p214 = scmp.eq.s32.totalorder %s27, 0
      %p215 = por %p213, %p214
      %p216 = scmp.ne.s32.totalorder %s208, %s210
      %p217 = scmp.eq.s32.totalorder %s32, 1
      %p218 = por %p216, %p217
      %p219 = scmp.ne.s32.totalorder %s210, %s211
      %p220 = scmp.eq.s32.totalorder %s32, 0
      %p221 = por %p219, %p220
      %p222 = scmp.ne.s32.totalorder %s210, %s211
      %p223 = scmp.eq.s32.totalorder %s33, 1
      %p224 = por %p222, %p223
      %p226 = scmp.ne.s32.totalorder %s211, %s225
      %p227 = scmp.eq.s32.totalorder %s33, 0
      %p228 = por %p226, %p227
      %s230 = sadd.s32 %s229, 1
      %p233 = scmp.eq.s32.totalorder %s27, 1
      %p234 = scmp.ne.s32.totalorder %s229, %s231
      %p235 = scmp.eq.s32.totalorder %s27, 0
      %p236 = por %p234, %p235
      %p237 = scmp.ne.s32.totalorder %s229, %s231
      %p238 = scmp.eq.s32.totalorder %s32, 1
      %p239 = por %p237, %p238
      %p240 = scmp.ne.s32.totalorder %s231, %s232
      %p241 = scmp.eq.s32.totalorder %s32, 0
      %p242 = por %p240, %p241
      %p243 = scmp.ne.s32.totalorder %s231, %s232
      %p244 = scmp.eq.s32.totalorder %s33, 1
      %p245 = por %p243, %p244
      %p247 = scmp.ne.s32.totalorder %s232, %s246
      %p248 = scmp.eq.s32.totalorder %s33, 0
      %p249 = por %p247, %p248
      %s251 = sadd.s32 %s250, 1
      %p254 = scmp.eq.s32.totalorder %s27, 1
      %p255 = scmp.ne.s32.totalorder %s250, %s252
      %p256 = scmp.eq.s32.totalorder %s27, 0
      %p257 = por %p255, %p256
      %p258 = scmp.ne.s32.totalorder %s250, %s252
      %p259 = scmp.eq.s32.totalorder %s32, 1
      %p260 = por %p258, %p259
      %p261 = scmp.ne.s32.totalorder %s252, %s253
      %p262 = scmp.eq.s32.totalorder %s32, 0
      %p263 = por %p261, %p262
      %p264 = scmp.ne.s32.totalorder %s252, %s253
      %p265 = scmp.eq.s32.totalorder %s33, 1
      %p266 = por %p264, %p265
      %p268 = scmp.ne.s32.totalorder %s253, %s267
      %p269 = scmp.eq.s32.totalorder %s33, 0
      %p270 = por %p268, %p269
      %s272 = sadd.s32 %s271, 1
      %p275 = scmp.eq.s32.totalorder %s27, 1
      %p276 = scmp.ne.s32.totalorder %s271, %s273
      %p277 = scmp.eq.s32.totalorder %s27, 0
      %p278 = por %p276, %p277
      %p279 = scmp.ne.s32.totalorder %s271, %s273
      %p280 = scmp.eq.s32.totalorder %s32, 1
      %p281 = por %p279, %p280
      %p282 = scmp.ne.s32.totalorder %s273, %s274
      %p283 = scmp.eq.s32.totalorder %s32, 0
      %p284 = por %p282, %p283
      %p285 = scmp.ne.s32.totalorder %s273, %s274
      %p286 = scmp.eq.s32.totalorder %s33, 1
      %p287 = por %p285, %p286
      %p289 = scmp.ne.s32.totalorder %s274, %s288
      %p290 = scmp.eq.s32.totalorder %s33, 0
      %p291 = por %p289, %p290
      %s293 = sadd.s32 %s292, 1
      %p296 = scmp.eq.s32.totalorder %s27, 1
      %p297 = scmp.ne.s32.totalorder %s292, %s294
      %p298 = scmp.eq.s32.totalorder %s27, 0
      %p299 = por %p297, %p298
      %p300 = scmp.ne.s32.totalorder %s292, %s294
      %p301 = scmp.eq.s32.totalorder %s32, 1
      %p302 = por %p300, %p301
      %p303 = scmp.ne.s32.totalorder %s294, %s295
      %p304 = scmp.eq.s32.totalorder %s32, 0
      %p305 = por %p303, %p304
      %p306 = scmp.ne.s32.totalorder %s294, %s295
      %p307 = scmp.eq.s32.totalorder %s33, 1
      %p308 = por %p306, %p307
      %p310 = scmp.ne.s32.totalorder %s295, %s309
      %p311 = scmp.eq.s32.totalorder %s33, 0
      %p312 = por %p310, %p311
      %s314 = sadd.s32 %s313, 1
      %p317 = scmp.eq.s32.totalorder %s27, 1
      %p318 = scmp.ne.s32.totalorder %s313, %s315
      %p319 = scmp.eq.s32.totalorder %s27, 0
      %p320 = por %p318, %p319
      %p321 = scmp.ne.s32.totalorder %s313, %s315
      %p322 = scmp.eq.s32.totalorder %s32, 1
      %p323 = por %p321, %p322
      %p324 = scmp.ne.s32.totalorder %s315, %s316
      %p325 = scmp.eq.s32.totalorder %s32, 0
      %p326 = por %p324, %p325
      %p327 = scmp.ne.s32.totalorder %s315, %s316
      %p328 = scmp.eq.s32.totalorder %s33, 1
      %p329 = por %p327, %p328
      %p331 = scmp.ne.s32.totalorder %s316, %s330
      %p332 = scmp.eq.s32.totalorder %s33, 0
      %p333 = por %p331, %p332
      %s335 = sadd.s32 %s334, 1
      %p338 = scmp.eq.s32.totalorder %s27, 1
      %p339 = scmp.ne.s32.totalorder %s334, %s336
      %p340 = scmp.eq.s32.totalorder %s27, 0
      %p341 = por %p339, %p340
      %p342 = scmp.ne.s32.totalorder %s334, %s336
      %p343 = scmp.eq.s32.totalorder %s32, 1
      %p344 = por %p342, %p343
      %p345 = scmp.ne.s32.totalorder %s336, %s337
      %p346 = scmp.eq.s32.totalorder %s32, 0
      %p347 = por %p345, %p346
      %p348 = scmp.ne.s32.totalorder %s336, %s337
      %p349 = scmp.eq.s32.totalorder %s33, 1
      %p350 = por %p348, %p349
      %p352 = scmp.ne.s32.totalorder %s337, %s351
      %p353 = scmp.eq.s32.totalorder %s33, 0
      %p354 = por %p352, %p353
      %s355 = ssub.s32 %s27, %s34
      %p356 = scmp.eq.s32.totalorder %s355, 0
      %s358 = sadd.s32 %s357, 1
      %s359 = scalar_select %p356, %s357, %s358
      %p362 = pneg %p356
      %p363 = scmp.eq.s32.totalorder %s27, 1
      %p364 = por %p362, %p363
      %p365 = scmp.ne.s32.totalorder %s357, %s360
      %p366 = scmp.eq.s32.totalorder %s27, 0
      %p367 = por %p365, %p366
      %p368 = scmp.ne.s32.totalorder %s357, %s360
      %p369 = scmp.eq.s32.totalorder %s32, 1
      %p370 = por %p368, %p369
      %p371 = scmp.ne.s32.totalorder %s360, %s361
      %p372 = scmp.eq.s32.totalorder %s32, 0
      %p373 = por %p371, %p372
      %p374 = scmp.ne.s32.totalorder %s360, %s361
      %p375 = scmp.eq.s32.totalorder %s33, 1
      %p376 = por %p374, %p375
      %p378 = scmp.ne.s32.totalorder %s361, %s377
      %p379 = scmp.eq.s32.totalorder %s33, 0
      %p380 = por %p378, %p379
      %p381 = scmp.le.s32.totalorder 1, %s27
      %p382 = scmp.lt.s32.totalorder %s27, 3
      %p383 = pnand %p381, %p382
      %p384 = pneg %p383
      // Predicated region
      $region9: #{reconstructor_forward.1} parent=5 // pred_check
        _
      $region10: #{reconstructor_forward.1} parent=5 // pred_check_branch
        %386 = sbr.rel (%p383) target = $region12
      $region11: #{reconstructor_forward.1} parent=5 // pred_region
        %s387 = ssub.s32 %s27, 1
        // Predicated region
        $region13: #{reconstructor_forward.1} parent=11 // pred_check
          %p388 = pneg %p74
        $region14: #{reconstructor_forward.1} parent=11 // pred_check_branch
          %390 = sbr.rel (%p388) target = $region16
        $region15: #{reconstructor_forward.1} parent=11 // pred_region
          _
        $region16: #{reconstructor_forward.1} parent=11 // pred_fallthru
          _
        // Predicated region
        $region17: #{reconstructor_forward.1} parent=11 // pred_check
          %p391 = pneg %p95
        $region18: #{reconstructor_forward.1} parent=11 // pred_check_branch
          %393 = sbr.rel (%p391) target = $region20
        $region19: #{reconstructor_forward.1} parent=11 // pred_region
          _
        $region20: #{reconstructor_forward.1} parent=11 // pred_fallthru
          _
        // Predicated region
        $region21: #{reconstructor_forward.1} parent=11 // pred_check
          %p394 = pneg %p116
        $region22: #{reconstructor_forward.1} parent=11 // pred_check_branch
          %396 = sbr.rel (%p394) target = $region24
        $region23: #{reconstructor_forward.1} parent=11 // pred_region
          _
        $region24: #{reconstructor_forward.1} parent=11 // pred_fallthru
          _
        // Predicated region
        $region25: #{reconstructor_forward.1} parent=11 // pred_check
          %p397 = pneg %p137
        $region26: #{reconstructor_forward.1} parent=11 // pred_check_branch
          %399 = sbr.rel (%p397) target = $region28
        $region27: #{reconstructor_forward.1} parent=11 // pred_region
          %s401 = ssub.s32 48, 48
          %402 = vsyncadd [#allocation3], %s401
          %s403 = sshll.u32 [#allocation2], 4
          %s404 = int_to_ptr.vmem [resolvable:$true] %s403
          %409 = dma.hbm_to_vmem [thread:$0]  %s4, 48, %s404, [#allocation3], 16, 16, 1
        $region28: #{reconstructor_forward.1} parent=11 // pred_fallthru
          _
        // Predicated region
        $region29: #{reconstructor_forward.1} parent=11 // pred_check
          %p410 = pneg %p158
        $region30: #{reconstructor_forward.1} parent=11 // pred_check_branch
          %412 = sbr.rel (%p410) target = $region32
        $region31: #{reconstructor_forward.1} parent=11 // pred_region
          _
        $region32: #{reconstructor_forward.1} parent=11 // pred_fallthru
          _
        // Predicated region
        $region33: #{reconstructor_forward.1} parent=11 // pred_check
          %p413 = pneg %p179
        $region34: #{reconstructor_forward.1} parent=11 // pred_check_branch
          %415 = sbr.rel (%p413) target = $region36
        $region35: #{reconstructor_forward.1} parent=11 // pred_region
          %s417 = ssub.s32 1536, 1536
          %418 = vsyncadd [#allocation6], %s417
          %s419 = sshll.u32 [#allocation5], 4
          %s420 = int_to_ptr.vmem [resolvable:$true] %s419
          %425 = dma.hbm_to_vmem [thread:$0]  %s6, 1536, %s420, [#allocation6], 64, 64, 4
        $region36: #{reconstructor_forward.1} parent=11 // pred_fallthru
          _
        // Predicated region
        $region37: #{reconstructor_forward.1} parent=11 // pred_check
          %p426 = pneg %p200
        $region38: #{reconstructor_forward.1} parent=11 // pred_check_branch
          %428 = sbr.rel (%p426) target = $region40
        $region39: #{reconstructor_forward.1} parent=11 // pred_region
          _
        $region40: #{reconstructor_forward.1} parent=11 // pred_fallthru
          _
        // Predicated region
        $region41: #{reconstructor_forward.1} parent=11 // pred_check
          %p429 = pneg %p221
        $region42: #{reconstructor_forward.1} parent=11 // pred_check_branch
          %431 = sbr.rel (%p429) target = $region44
        $region43: #{reconstructor_forward.1} parent=11 // pred_region
          %s433 = ssub.s32 48, 48
          %434 = vsyncadd [#allocation6], %s433
          %s435 = sshll.u32 [#allocation7], 4
          %s436 = int_to_ptr.vmem [resolvable:$true] %s435
          %441 = dma.hbm_to_vmem [thread:$0]  %s8, 48, %s436, [#allocation6], 16, 16, 1
        $region44: #{reconstructor_forward.1} parent=11 // pred_fallthru
          _
        // Predicated region
        $region45: #{reconstructor_forward.1} parent=11 // pred_check
          %p442 = pneg %p242
        $region46: #{reconstructor_forward.1} parent=11 // pred_check_branch
          %444 = sbr.rel (%p442) target = $region48
        $region47: #{reconstructor_forward.1} parent=11 // pred_region
          _
        $region48: #{reconstructor_forward.1} parent=11 // pred_fallthru
          _
        // Predicated region
        $region49: #{reconstructor_forward.1} parent=11 // pred_check
          %p445 = pneg %p263
        $region50: #{reconstructor_forward.1} parent=11 // pred_check_branch
          %447 = sbr.rel (%p445) target = $region52
        $region51: #{reconstructor_forward.1} parent=11 // pred_region
          _
        $region52: #{reconstructor_forward.1} parent=11 // pred_fallthru
          _
        // Predicated region
        $region53: #{reconstructor_forward.1} parent=11 // pred_check
          %p448 = pneg %p284
        $region54: #{reconstructor_forward.1} parent=11 // pred_check_branch
          %450 = sbr.rel (%p448) target = $region56
        $region55: #{reconstructor_forward.1} parent=11 // pred_region
          %s452 = ssub.s32 24576, 24576
          %453 = vsyncadd [#allocation9], %s452
          %s454 = sshll.u32 [#allocation8], 4
          %s455 = int_to_ptr.vmem [resolvable:$true] %s454
          %460 = dma.hbm_to_vmem [thread:$0]  %s11, 24576, %s455, [#allocation9], 128, 128, 8
        $region56: #{reconstructor_forward.1} parent=11 // pred_fallthru
          _
        // Predicated region
        $region57: #{reconstructor_forward.1} parent=11 // pred_check
          %p461 = pneg %p305
        $region58: #{reconstructor_forward.1} parent=11 // pred_check_branch
          %463 = sbr.rel (%p461) target = $region60
        $region59: #{reconstructor_forward.1} parent=11 // pred_region
          %s465 = ssub.s32 96, 96
          %466 = vsyncadd [#allocation9], %s465
          %s467 = sshll.u32 [#allocation10], 4
          %s468 = int_to_ptr.vmem [resolvable:$true] %s467
          %473 = dma.hbm_to_vmem [thread:$0]  %s12, 96, %s468, [#allocation9], 32, 32, 2
        $region60: #{reconstructor_forward.1} parent=11 // pred_fallthru
          _
        // Predicated region
        $region61: #{reconstructor_forward.1} parent=11 // pred_check
          %p474 = pneg %p326
        $region62: #{reconstructor_forward.1} parent=11 // pred_check_branch
          %476 = sbr.rel (%p474) target = $region64
        $region63: #{reconstructor_forward.1} parent=11 // pred_region
          _
        $region64: #{reconstructor_forward.1} parent=11 // pred_fallthru
          _
        // Predicated region
        $region65: #{reconstructor_forward.1} parent=11 // pred_check
          %p477 = pneg %p347
        $region66: #{reconstructor_forward.1} parent=11 // pred_check_branch
          %479 = sbr.rel (%p477) target = $region68
        $region67: #{reconstructor_forward.1} parent=11 // pred_region
          _
        $region68: #{reconstructor_forward.1} parent=11 // pred_fallthru
          _
      $region12: #{reconstructor_forward.1} parent=5 // pred_fallthru
        _
      %p480 = scmp.lt.s32.totalorder %s27, 2
      // Predicated region
      $region69: #{reconstructor_forward.1} parent=5 // pred_check
        %p481 = pneg %p480
      $region70: #{reconstructor_forward.1} parent=5 // pred_check_branch
        %483 = sbr.rel (%p481) target = $region72
      $region71: #{reconstructor_forward.1} parent=5 // pred_region
        // Predicated region
        $region73: #{reconstructor_forward.1} parent=71 // pred_check
          %p484 = pneg %p47
        $region74: #{reconstructor_forward.1} parent=71 // pred_check_branch
          %486 = sbr.rel (%p484) target = $region76
        $region75: #{reconstructor_forward.1} parent=71 // pred_region
          %p487 = scmp.lt.s32.totalorder %s27, 1
          %s488 = scalar_select %p487, %s27, 1
          %s489 = smul.addr %s488, 8
          %s490 = scalar_lea.vmem %s0, %s489
        $region76: #{reconstructor_forward.1} parent=71 // pred_fallthru
          _
      $region72: #{reconstructor_forward.1} parent=5 // pred_fallthru
        _
      %p491 = scmp.le.s32.totalorder 1, %s27
      %p492 = scmp.lt.s32.totalorder %s27, 3
      %p493 = pnand %p491, %p492
      %p494 = pneg %p493
      // Predicated region
      $region77: #{reconstructor_forward.1} parent=5 // pred_check
        _
      $region78: #{reconstructor_forward.1} parent=5 // pred_check_branch
        %496 = sbr.rel (%p493) target = $region80
      $region79: #{reconstructor_forward.1} parent=5 // pred_region
        %s497 = ssub.s32 %s27, 1
        // Predicated region
        $region81: #{reconstructor_forward.1} parent=79 // pred_check
          %p498 = pneg %p137
        $region82: #{reconstructor_forward.1} parent=79 // pred_check_branch
          %500 = sbr.rel (%p498) target = $region84
        $region83: #{reconstructor_forward.1} parent=79 // pred_region
          %501 = dma.done [#allocation3], 48
        $region84: #{reconstructor_forward.1} parent=79 // pred_fallthru
          _
        // Predicated region
        $region85: #{reconstructor_forward.1} parent=79 // pred_check
          %p502 = pneg %p179
        $region86: #{reconstructor_forward.1} parent=79 // pred_check_branch
          %504 = sbr.rel (%p502) target = $region88
        $region87: #{reconstructor_forward.1} parent=79 // pred_region
          %505 = dma.done [#allocation6], 1536
        $region88: #{reconstructor_forward.1} parent=79 // pred_fallthru
          _
        // Predicated region
        $region89: #{reconstructor_forward.1} parent=79 // pred_check
          %p506 = pneg %p221
        $region90: #{reconstructor_forward.1} parent=79 // pred_check_branch
          %508 = sbr.rel (%p506) target = $region92
        $region91: #{reconstructor_forward.1} parent=79 // pred_region
          %509 = dma.done [#allocation6], 48
        $region92: #{reconstructor_forward.1} parent=79 // pred_fallthru
          _
        // Predicated region
        $region93: #{reconstructor_forward.1} parent=79 // pred_check
          %p510 = pneg %p284
        $region94: #{reconstructor_forward.1} parent=79 // pred_check_branch
          %512 = sbr.rel (%p510) target = $region96
        $region95: #{reconstructor_forward.1} parent=79 // pred_region
          %513 = dma.done [#allocation9], 24576
        $region96: #{reconstructor_forward.1} parent=79 // pred_fallthru
          _
        // Predicated region
        $region97: #{reconstructor_forward.1} parent=79 // pred_check
          %p514 = pneg %p305
        $region98: #{reconstructor_forward.1} parent=79 // pred_check_branch
          %516 = sbr.rel (%p514) target = $region100
        $region99: #{reconstructor_forward.1} parent=79 // pred_region
          %517 = dma.done [#allocation9], 96
        $region100: #{reconstructor_forward.1} parent=79 // pred_fallthru
          _
        %p518 = scmp.lt.s32.totalorder %s32, 1
        %s519 = scalar_select %p518, %s32, 1
        %s520 = smul.addr %s519, 8
        %s521 = scalar_lea.vmem %s0, %s520
        %p522 = pneg %p53
        %p523 = pneg %p50
        %p524 = pneg %p74
        %p525 = pneg %p71
        %p526 = pneg %p95
        %p527 = pneg %p92
        %p528 = pneg %p116
        %p529 = pneg %p113
        %p530 = pneg %p137
        %p531 = pneg %p134
        %p532 = pneg %p158
        %p533 = pneg %p155
        %p534 = pneg %p179
        %p535 = pneg %p176
        %p536 = pneg %p200
        %p537 = pneg %p197
        %p538 = pneg %p221
        %p539 = pneg %p218
        %p540 = pneg %p242
        %p541 = pneg %p239
        %p542 = pneg %p263
        %p543 = pneg %p260
        %p544 = pneg %p284
        %p545 = pneg %p281
        %p546 = pneg %p305
        %p547 = pneg %p302
        %p548 = pneg %p326
        %p549 = pneg %p323
        %p550 = pneg %p347
        %p551 = pneg %p344
        %p552 = pneg %p373
        %p553 = pneg %p370
        %s554 = sand.u32 %s360, 1
        %s555 = scalar_lea.sflag [#allocation4], %s554
        %s556 = sand.u32 %s360, 1
        %s557 = smul.addr %s556, 64
        %s558 = scalar_lea.vmem [#allocation11], %s557
        %p559 = scmp.lt.s32.totalorder %s32, 1
        %s560 = scalar_select %p559, %s32, 1
        %s561 = smul.addr %s560, 8
        %s562 = scalar_lea.vmem %s0, %s561
        %v564 = vld [vmem:[%s562] sm:$0xff]
        %v565 = vld [vmem:[%s1] sm:$0xf]
        %v566 = vld [vmem:[%s1 + $0x4] sm:$0xf]
        %v567 = vpack.c.bf16 %v564, %v564
        %v570 = vunpack.c.l.b16 %v565
        %v571 = vunpack.c.l.b16 %v566
        %v572 = vpack.c.b16 %v571, %v570
        %vm573 = vcmask 64512
        %v575 = vsel %vm573, %v572, 0
        %vm577 = vcmask 1043456
        %v579 = vsel %vm577, %v567, 0
        %581 = vmatprep.subr.bf16.mxu0 0
        %582 = vmatpush1.bf16.msra.mxu0 %v579
        %583 = vmatprep.subr.bf16.mxu0 0
        %584 = vmatpush1.bf16.msra.mxu0 0
        %585 = vmatprep.subr.bf16.mxu0 0
        %586 = vmatpush1.bf16.msra.mxu0 0
        %587 = vmatprep.subr.bf16.mxu0 0
        %588 = vmatpush1.bf16.msra.mxu0 0
        %589 = vmatprep.subr.bf16.mxu0 0
        %590 = vmatpush1.bf16.msra.mxu0 0
        %591 = vmatprep.subr.bf16.mxu0 0
        %592 = vmatpush1.bf16.msra.mxu0 0
        %593 = vmatprep.subr.bf16.mxu0 0
        %594 = vmatpush1.bf16.msra.mxu0 0
        %595 = vmatprep.subr.bf16.mxu0 0
        %596 = vmatpush1.bf16.msra.mxu0 0
        %597 = vmatprep.subr.bf16.mxu0 0
        %598 = vmatpush1.bf16.msra.mxu0 0
        %599 = vmatprep.subr.bf16.mxu0 0
        %600 = vmatpush1.bf16.msra.mxu0 0
        %601 = vmatprep.subr.bf16.mxu0 0
        %602 = vmatpush1.bf16.msra.mxu0 0
        %603 = vmatprep.subr.bf16.mxu0 0
        %604 = vmatpush1.bf16.msra.mxu0 0
        %605 = vmatprep.subr.bf16.mxu0 0
        %606 = vmatpush1.bf16.msra.mxu0 0
        %607 = vmatprep.subr.bf16.mxu0 0
        %608 = vmatpush1.bf16.msra.mxu0 0
        %609 = vmatprep.subr.bf16.mxu0 0
        %610 = vmatpush1.bf16.msra.mxu0 0
        %611 = vmatprep.subr.bf16.mxu0 0
        %612 = vmatpush1.bf16.msra.mxu0 0
        %613 = vmatprep.mubr.bf16.mxu0 0
        %614 = vmatmul.mubr.bf16.gmra.mrb[0].mxu0 %v575
        %v615 = vpop.f32.mrb[0].mxu0
        %v616 = vadd.f32 0.0, %v615
        %v617 = vpop.f32.mrb[0].mxu0
        %v618 = vpop.f32.mrb[0].mxu0
        %v619 = vadd.f32 0.0, %v618
        %v620 = vpop.f32.mrb[0].mxu0
        %621 = vdwg.mxu0
        %v622 = vlaneseq
        %v623 = vshrl.u32 %v622, 7
        %v624 = vadd.s32 %v623, 8
        %vm625 = vcmp.lt.s32.totalorder %v623, 0
        %v626 = vsub.s32 0, %v623
        %v627 = vsel %vm625, %v626, %v623
        %v628 = vshrl.u32 %v627, 3
        %v629 = vand.u32 %v627, 7
        %v630 = vsub.s32 0, %v629
        %v631 = vsel %vm625, %v630, %v629
        %vm632 = vcmp.lt.s32.totalorder %v624, 0
        %v633 = vsub.s32 0, %v624
        %v634 = vsel %vm632, %v633, %v624
        %v635 = vshrl.u32 %v634, 3
        %v636 = vand.u32 %v634, 7
        %v637 = vsub.s32 0, %v636
        %v638 = vsel %vm632, %v637, %v636
        %vm639 = vcmp.ne.s32.totalorder %v631, 0
        %vm640 = vcmp.ne.s32.totalorder %v638, 0
        %vm641 = vcmp.lt.s32.totalorder %v631, 0
        %vm642 = vcmp.lt.s32.totalorder %v638, 0
        %vm643 = vmand %vm641, %vm639
        %vm644 = vmand %vm642, %vm640
        %v645 = vadd.s32 %v631, 8
        %v646 = vadd.s32 %v638, 8
        %v647 = vsel %vm643, %v645, %v631
        %v648 = vsel %vm644, %v646, %v638
        %vm649 = vcmp.ne.s32.totalorder %v647, 0
        %vm650 = vcmp.ne.s32.totalorder %v648, 0
        %vm651 = vcmp.ne.s32.totalorder %v647, 7
        %vm652 = vcmp.ne.s32.totalorder %v648, 7
        %v653 = vrot.slane %v616, 7
        %v654 = vrot.slane %v619, 7
        %vm655 = vcmp.lt.s32.totalorder %v623, 1
        %v656 = vsel %vm655, %v653, %v654
        %v657 = vsel %vm655, %v654, %v653
        %v658 = vsel %vm649, 1, 0
        %v659 = vsel %vm650, 1, 0
        %vm660 = vcmp.eq.s32.totalorder %v658, 1
        %vm661 = vcmp.eq.s32.totalorder %v659, 1
        %v662 = vsel %vm660, %v657, 0.0
        %v663 = vsel %vm661, %v656, 0.0
        %v664 = vrot.slane %v616, 1
        %v665 = vrot.slane %v619, 1
        %vm666 = vcmp.lt.s32.totalorder %v623, 7
        %v667 = vsel %vm666, %v664, %v665
        %v668 = vsel %vm666, %v665, %v664
        %v669 = vsel %vm651, 1, 0
        %v670 = vsel %vm652, 1, 0
        %vm671 = vcmp.eq.s32.totalorder %v669, 1
        %vm672 = vcmp.eq.s32.totalorder %v670, 1
        %v673 = vsel %vm671, %v667, 0.0
        %v674 = vsel %vm672, %v668, 0.0
        %677 = vrot.lane.b32.xlu0 %v616, 32
        %v678 = vpop.permute.xlu0 %677
        %679 = vrot.lane.b32.xlu0 %v619, 32
        %v680 = vpop.permute.xlu0 %679
        %685 = vrot.lane.b32.xlu0 %v673, 64
        %v686 = vpop.permute.xlu0 %685
        %687 = vrot.lane.b32.xlu0 %v674, 64
        %v688 = vpop.permute.xlu0 %687
        %vm691 = vcmask 261120
        %v692 = vsel %vm691, %v662, %v678
        %v693 = vsel %vm691, %v663, %v680
        %vm694 = vcmask 523264
        %v695 = vsel %vm694, %v692, %v686
        %v696 = vsel %vm694, %v693, %v688
        %v697 = vpack.c.bf16 %v696, %v695
        %v698 = vld [vmem:[%s2] sm:$0xf]
        %v699 = vld [vmem:[%s2 + $0x4] sm:$0xf]
        %v700 = vld [vmem:[%s2 + $0x8] sm:$0xf]
        %v701 = vld [vmem:[%s2 + $0xc] sm:$0xf]
        %v702 = vld [vmem:[%s2 + $0x10] sm:$0xf]
        %v703 = vld [vmem:[%s2 + $0x14] sm:$0xf]
        %v704 = vld [vmem:[%s2 + $0x18] sm:$0xf]
        %v705 = vld [vmem:[%s2 + $0x1c] sm:$0xf]
        %v706 = vld [vmem:[%s2 + $0x20] sm:$0xf]
        %v707 = vld [vmem:[%s2 + $0x24] sm:$0xf]
        %v708 = vld [vmem:[%s2 + $0x28] sm:$0xf]
        %v709 = vld [vmem:[%s2 + $0x2c] sm:$0xf]
        %v710 = vld [vmem:[#allocation2] sm:$0x1]
        %v712 = vlaneseq
        %v713 = vshrl.u32 %v712, 7
        %v714 = vsub.s32 0, %v713
        %v715 = vrot.slane %v710, %v714
        %v729 = vunpack.c.l.b16 %v698
        %v730 = vunpack.c.l.b16 %v699
        %v731 = vunpack.c.l.b16 %v700
        %v732 = vunpack.c.l.b16 %v701
        %v733 = vunpack.c.l.b16 %v702
        %v734 = vunpack.c.l.b16 %v703
        %v735 = vunpack.c.l.b16 %v704
        %v736 = vunpack.c.l.b16 %v705
        %v737 = vunpack.c.l.b16 %v706
        %v738 = vunpack.c.l.b16 %v707
        %v739 = vunpack.c.l.b16 %v708
        %v740 = vunpack.c.l.b16 %v709
        %v741 = vpack.c.b16 %v730, %v729
        %v742 = vpack.c.b16 %v732, %v731
        %v743 = vpack.c.b16 %v734, %v733
        %v744 = vpack.c.b16 %v736, %v735
        %v745 = vpack.c.b16 %v738, %v737
        %v746 = vpack.c.b16 %v740, %v739
        %vm753 = vcmask 785408
        %v755 = vsel %vm753, %v697, 0
        %757 = vmatprep.subr.bf16.mxu0 0
        %758 = vmatpush1.bf16.msra.mxu0 %v741
        %759 = vmatprep.subr.bf16.mxu0 0
        %760 = vmatpush1.bf16.msra.mxu0 %v742
        %761 = vmatprep.subr.bf16.mxu0 0
        %762 = vmatpush1.bf16.msra.mxu0 %v743
        %763 = vmatprep.subr.bf16.mxu0 0
        %764 = vmatpush1.bf16.msra.mxu0 %v744
        %765 = vmatprep.subr.bf16.mxu0 0
        %766 = vmatpush1.bf16.msra.mxu0 %v745
        %767 = vmatprep.subr.bf16.mxu0 0
        %768 = vmatpush1.bf16.msra.mxu0 %v746
        %769 = vmatprep.subr.bf16.mxu0 0
        %770 = vmatpush1.bf16.msra.mxu0 0
        %771 = vmatprep.subr.bf16.mxu0 0
        %772 = vmatpush1.bf16.msra.mxu0 0
        %773 = vmatprep.subr.bf16.mxu0 0
        %774 = vmatpush1.bf16.msra.mxu0 0
        %775 = vmatprep.subr.bf16.mxu0 0
        %776 = vmatpush1.bf16.msra.mxu0 0
        %777 = vmatprep.subr.bf16.mxu0 0
        %778 = vmatpush1.bf16.msra.mxu0 0
        %779 = vmatprep.subr.bf16.mxu0 0
        %780 = vmatpush1.bf16.msra.mxu0 0
        %781 = vmatprep.subr.bf16.mxu0 0
        %782 = vmatpush1.bf16.msra.mxu0 0
        %783 = vmatprep.subr.bf16.mxu0 0
        %784 = vmatpush1.bf16.msra.mxu0 0
        %785 = vmatprep.subr.bf16.mxu0 0
        %786 = vmatpush1.bf16.msra.mxu0 0
        %787 = vmatprep.subr.bf16.mxu0 0
        %788 = vmatpush1.bf16.msra.mxu0 0
        %789 = vmatprep.mubr.bf16.mxu0 0
        %790 = vmatmul.mubr.bf16.gmra.mrb[0].mxu0 %v755
        %v791 = vpop.f32.mrb[0].mxu0
        %v792 = vadd.f32 %v715, %v791
        %v793 = vpop.f32.mrb[0].mxu0
        %v794 = vpop.f32.mrb[0].mxu0
        %v795 = vadd.f32 %v715, %v794
        %v796 = vpop.f32.mrb[0].mxu0
        %797 = vdwg.mxu0
        %v798 = vmax.f32 %v792, 0.0
        %v799 = vmax.f32 %v795, 0.0
        %v800 = vrot.slane %v798, 7
        %v801 = vrot.slane %v799, 7
        %v802 = vsel %vm655, %v800, %v801
        %v803 = vsel %vm655, %v801, %v800
        %v804 = vsel %vm660, %v803, 0.0
        %v805 = vsel %vm661, %v802, 0.0
        %v806 = vrot.slane %v798, 1
        %v807 = vrot.slane %v799, 1
        %v808 = vsel %vm666, %v806, %v807
        %v809 = vsel %vm666, %v807, %v806
        %v810 = vsel %vm671, %v808, 0.0
        %v811 = vsel %vm672, %v809, 0.0
        %814 = vrot.lane.b32.xlu0 %v798, 64
        %v815 = vpop.permute.xlu0 %814
        %816 = vrot.lane.b32.xlu0 %v799, 64
        %v817 = vpop.permute.xlu0 %816
        %v820 = vsel %vm694, %v804, %v815
        %v821 = vsel %vm694, %v805, %v817
        %v822 = vpack.c.bf16 %v821, %v820
        %v823 = vpack.c.bf16 %v811, %v810
        %v824 = vld [vmem:[%s3] sm:$0xf]
        %v825 = vld [vmem:[%s3 + $0x4] sm:$0xf]
        %v826 = vld [vmem:[%s3 + $0x8] sm:$0xf]
        %v827 = vld [vmem:[%s3 + $0xc] sm:$0xf]
        %v828 = vld [vmem:[%s3 + $0x10] sm:$0xf]
        %v829 = vld [vmem:[%s3 + $0x14] sm:$0xf]
        %v830 = vld [vmem:[%s3 + $0x18] sm:$0xf]
        %v831 = vld [vmem:[%s3 + $0x1c] sm:$0xf]
        %v832 = vld [vmem:[%s3 + $0x20] sm:$0xf]
        %v833 = vld [vmem:[%s3 + $0x24] sm:$0xf]
        %v834 = vld [vmem:[%s3 + $0x28] sm:$0xf]
        %v835 = vld [vmem:[%s3 + $0x2c] sm:$0xf]
        %v836 = vld [vmem:[%s3 + $0x30] sm:$0xf]
        %v837 = vld [vmem:[%s3 + $0x34] sm:$0xf]
        %v838 = vld [vmem:[%s3 + $0x38] sm:$0xf]
        %v839 = vld [vmem:[%s3 + $0x3c] sm:$0xf]
        %v840 = vld [vmem:[%s3 + $0x40] sm:$0xf]
        %v841 = vld [vmem:[%s3 + $0x44] sm:$0xf]
        %v842 = vld [vmem:[%s3 + $0x48] sm:$0xf]
        %v843 = vld [vmem:[%s3 + $0x4c] sm:$0xf]
        %v844 = vld [vmem:[%s3 + $0x50] sm:$0xf]
        %v845 = vld [vmem:[%s3 + $0x54] sm:$0xf]
        %v846 = vld [vmem:[%s3 + $0x58] sm:$0xf]
        %v847 = vld [vmem:[%s3 + $0x5c] sm:$0xf]
        %s848 = scalar_lea.vmem [#allocation2], 1
        %v849 = vld [vmem:[%s848] sm:$0x1]
        %v851 = vlaneseq
        %v852 = vshrl.u32 %v851, 7
        %v853 = vsub.s32 0, %v852
        %v854 = vrot.slane %v849, %v853
        %v880 = vunpack.c.l.b16 %v824
        %v881 = vunpack.c.l.b16 %v825
        %v882 = vunpack.c.l.b16 %v826
        %v883 = vunpack.c.l.b16 %v827
        %v884 = vunpack.c.l.b16 %v828
        %v885 = vunpack.c.l.b16 %v829
        %v886 = vunpack.c.l.b16 %v830
        %v887 = vunpack.c.l.b16 %v831
        %v888 = vunpack.c.l.b16 %v832
        %v889 = vunpack.c.l.b16 %v833
        %v890 = vunpack.c.l.b16 %v834
        %v891 = vunpack.c.l.b16 %v835
        %v892 = vunpack.c.l.b16 %v836
        %v893 = vunpack.c.l.b16 %v837
        %v894 = vunpack.c.l.b16 %v838
        %v895 = vunpack.c.l.b16 %v839
        %v896 = vunpack.c.l.b16 %v840
        %v897 = vunpack.c.l.b16 %v841
        %v898 = vunpack.c.l.b16 %v842
        %v899 = vunpack.c.l.b16 %v843
        %v900 = vunpack.c.l.b16 %v844
        %v901 = vunpack.c.l.b16 %v845
        %v902 = vunpack.c.l.b16 %v846
        %v903 = vunpack.c.l.b16 %v847
        %v904 = vpack.c.b16 %v881, %v880
        %v905 = vpack.c.b16 %v883, %v882
        %v906 = vpack.c.b16 %v885, %v884
        %v907 = vpack.c.b16 %v887, %v886
        %v908 = vpack.c.b16 %v889, %v888
        %v909 = vpack.c.b16 %v891, %v890
        %v910 = vpack.c.b16 %v893, %v892
        %v911 = vpack.c.b16 %v895, %v894
        %v912 = vpack.c.b16 %v897, %v896
        %v913 = vpack.c.b16 %v899, %v898
        %v914 = vpack.c.b16 %v901, %v900
        %v915 = vpack.c.b16 %v903, %v902
        %v929 = vsel %vm694, %v823, 0
        %931 = vmatprep.subr.bf16.mxu0 0
        %932 = vmatpush1.bf16.msra.mxu0 %v904
        %933 = vmatprep.subr.bf16.mxu0 0
        %934 = vmatpush1.bf16.msra.mxu0 %v905
        %935 = vmatprep.subr.bf16.mxu0 0
        %936 = vmatpush1.bf16.msra.mxu0 %v906
        %937 = vmatprep.subr.bf16.mxu0 0
        %938 = vmatpush1.bf16.msra.mxu0 %v907
        %939 = vmatprep.subr.bf16.mxu0 0
        %940 = vmatpush1.bf16.msra.mxu0 %v908
        %941 = vmatprep.subr.bf16.mxu0 0
        %942 = vmatpush1.bf16.msra.mxu0 %v909
        %943 = vmatprep.subr.bf16.mxu0 0
        %944 = vmatpush1.bf16.msra.mxu0 %v910
        %945 = vmatprep.subr.bf16.mxu0 0
        %946 = vmatpush1.bf16.msra.mxu0 %v911
        %947 = vmatprep.subr.bf16.mxu0 0
        %948 = vmatpush1.bf16.msra.mxu0 %v912
        %949 = vmatprep.subr.bf16.mxu0 0
        %950 = vmatpush1.bf16.msra.mxu0 %v913
        %951 = vmatprep.subr.bf16.mxu0 0
        %952 = vmatpush1.bf16.msra.mxu0 %v914
        %953 = vmatprep.subr.bf16.mxu0 0
        %954 = vmatpush1.bf16.msra.mxu0 %v915
        %955 = vmatprep.subr.bf16.mxu0 0
        %956 = vmatpush1.bf16.msra.mxu0 0
        %957 = vmatprep.subr.bf16.mxu0 0
        %958 = vmatpush1.bf16.msra.mxu0 0
        %959 = vmatprep.subr.bf16.mxu0 0
        %960 = vmatpush1.bf16.msra.mxu0 0
        %961 = vmatprep.subr.bf16.mxu0 0
        %962 = vmatpush1.bf16.msra.mxu0 0
        %963 = vmatprep.mubr.bf16.mxu0 %v929
        %964 = vmatmul.mubr.bf16.gmra.mrb[0].mxu0 %v822
        %v965 = vpop.f32.mrb[0].mxu0
        %v966 = vadd.f32 %v854, %v965
        %v967 = vpop.f32.mrb[0].mxu0
        %v968 = vpop.f32.mrb[0].mxu0
        %v969 = vadd.f32 %v854, %v968
        %v970 = vpop.f32.mrb[0].mxu0
        %971 = vdwg.mxu0
        %v972 = vmax.f32 %v966, 0.0
        %v973 = vmax.f32 %v969, 0.0
        %v974 = vrot.slane %v972, 7
        %v975 = vrot.slane %v973, 7
        %v976 = vsel %vm655, %v974, %v975
        %v977 = vsel %vm655, %v975, %v974
        %v978 = vsel %vm660, %v977, 0.0
        %v979 = vsel %vm661, %v976, 0.0
        %v980 = vrot.slane %v972, 1
        %v981 = vrot.slane %v973, 1
        %v982 = vsel %vm666, %v980, %v981
        %v983 = vsel %vm666, %v981, %v980
        %v984 = vsel %vm671, %v982, 0.0
        %v985 = vsel %vm672, %v983, 0.0
        %988 = vrot.lane.b32.xlu0 %v972, 64
        %v989 = vpop.permute.xlu0 %988
        %990 = vrot.lane.b32.xlu0 %v973, 64
        %v991 = vpop.permute.xlu0 %990
        %v994 = vsel %vm694, %v978, %v989
        %v995 = vsel %vm694, %v979, %v991
        %v996 = vpack.c.bf16 %v995, %v994
        %v997 = vpack.c.bf16 %v985, %v984
        %s998 = scalar_lea.vmem %s3, 96
        %v999 = vld [vmem:[%s998] sm:$0xf]
        %v1000 = vld [vmem:[%s998 + $0x4] sm:$0xf]
        %v1001 = vld [vmem:[%s998 + $0x8] sm:$0xf]
        %v1002 = vld [vmem:[%s998 + $0xc] sm:$0xf]
        %v1003 = vld [vmem:[%s998 + $0x10] sm:$0xf]
        %v1004 = vld [vmem:[%s998 + $0x14] sm:$0xf]
        %v1005 = vld [vmem:[%s998 + $0x18] sm:$0xf]
        %v1006 = vld [vmem:[%s998 + $0x1c] sm:$0xf]
        %v1007 = vld [vmem:[%s998 + $0x20] sm:$0xf]
        %v1008 = vld [vmem:[%s998 + $0x24] sm:$0xf]
        %v1009 = vld [vmem:[%s998 + $0x28] sm:$0xf]
        %v1010 = vld [vmem:[%s998 + $0x2c] sm:$0xf]
        %v1011 = vld [vmem:[%s998 + $0x30] sm:$0xf]
        %v1012 = vld [vmem:[%s998 + $0x34] sm:$0xf]
        %v1013 = vld [vmem:[%s998 + $0x38] sm:$0xf]
        %v1014 = vld [vmem:[%s998 + $0x3c] sm:$0xf]
        %v1015 = vld [vmem:[%s998 + $0x40] sm:$0xf]
        %v1016 = vld [vmem:[%s998 + $0x44] sm:$0xf]
        %v1017 = vld [vmem:[%s998 + $0x48] sm:$0xf]
        %v1018 = vld [vmem:[%s998 + $0x4c] sm:$0xf]
        %v1019 = vld [vmem:[%s998 + $0x50] sm:$0xf]
        %v1020 = vld [vmem:[%s998 + $0x54] sm:$0xf]
        %v1021 = vld [vmem:[%s998 + $0x58] sm:$0xf]
        %v1022 = vld [vmem:[%s998 + $0x5c] sm:$0xf]
        %s1023 = scalar_lea.vmem [#allocation2], 2
        %v1024 = vld [vmem:[%s1023] sm:$0x1]
        %v1026 = vlaneseq
        %v1027 = vshrl.u32 %v1026, 7
        %v1028 = vsub.s32 0, %v1027
        %v1029 = vrot.slane %v1024, %v1028
        %v1055 = vunpack.c.l.b16 %v999
        %v1056 = vunpack.c.l.b16 %v1000
        %v1057 = vunpack.c.l.b16 %v1001
        %v1058 = vunpack.c.l.b16 %v1002
        %v1059 = vunpack.c.l.b16 %v1003
        %v1060 = vunpack.c.l.b16 %v1004
        %v1061 = vunpack.c.l.b16 %v1005
        %v1062 = vunpack.c.l.b16 %v1006
        %v1063 = vunpack.c.l.b16 %v1007
        %v1064 = vunpack.c.l.b16 %v1008
        %v1065 = vunpack.c.l.b16 %v1009
        %v1066 = vunpack.c.l.b16 %v1010
        %v1067 = vunpack.c.l.b16 %v1011
        %v1068 = vunpack.c.l.b16 %v1012
        %v1069 = vunpack.c.l.b16 %v1013
        %v1070 = vunpack.c.l.b16 %v1014
        %v1071 = vunpack.c.l.b16 %v1015
        %v1072 = vunpack.c.l.b16 %v1016
        %v1073 = vunpack.c.l.b16 %v1017
        %v1074 = vunpack.c.l.b16 %v1018
        %v1075 = vunpack.c.l.b16 %v1019
        %v1076 = vunpack.c.l.b16 %v1020
        %v1077 = vunpack.c.l.b16 %v1021
        %v1078 = vunpack.c.l.b16 %v1022
        %v1079 = vpack.c.b16 %v1056, %v1055
        %v1080 = vpack.c.b16 %v1058, %v1057
        %v1081 = vpack.c.b16 %v1060, %v1059
        %v1082 = vpack.c.b16 %v1062, %v1061
        %v1083 = vpack.c.b16 %v1064, %v1063
        %v1084 = vpack.c.b16 %v1066, %v1065
        %v1085 = vpack.c.b16 %v1068, %v1067
        %v1086 = vpack.c.b16 %v1070, %v1069
        %v1087 = vpack.c.b16 %v1072, %v1071
        %v1088 = vpack.c.b16 %v1074, %v1073
        %v1089 = vpack.c.b16 %v1076, %v1075
        %v1090 = vpack.c.b16 %v1078, %v1077
        %v1104 = vsel %vm694, %v997, 0
        %1106 = vmatprep.subr.bf16.mxu0 0
        %1107 = vmatpush1.bf16.msra.mxu0 %v1079
        %1108 = vmatprep.subr.bf16.mxu0 0
        %1109 = vmatpush1.bf16.msra.mxu0 %v1080
        %1110 = vmatprep.subr.bf16.mxu0 0
        %1111 = vmatpush1.bf16.msra.mxu0 %v1081
        %1112 = vmatprep.subr.bf16.mxu0 0
        %1113 = vmatpush1.bf16.msra.mxu0 %v1082
        %1114 = vmatprep.subr.bf16.mxu0 0
        %1115 = vmatpush1.bf16.msra.mxu0 %v1083
        %1116 = vmatprep.subr.bf16.mxu0 0
        %1117 = vmatpush1.bf16.msra.mxu0 %v1084
        %1118 = vmatprep.subr.bf16.mxu0 0
        %1119 = vmatpush1.bf16.msra.mxu0 %v1085
        %1120 = vmatprep.subr.bf16.mxu0 0
        %1121 = vmatpush1.bf16.msra.mxu0 %v1086
        %1122 = vmatprep.subr.bf16.mxu0 0
        %1123 = vmatpush1.bf16.msra.mxu0 %v1087
        %1124 = vmatprep.subr.bf16.mxu0 0
        %1125 = vmatpush1.bf16.msra.mxu0 %v1088
        %1126 = vmatprep.subr.bf16.mxu0 0
        %1127 = vmatpush1.bf16.msra.mxu0 %v1089
        %1128 = vmatprep.subr.bf16.mxu0 0
        %1129 = vmatpush1.bf16.msra.mxu0 %v1090
        %1130 = vmatprep.subr.bf16.mxu0 0
        %1131 = vmatpush1.bf16.msra.mxu0 0
        %1132 = vmatprep.subr.bf16.mxu0 0
        %1133 = vmatpush1.bf16.msra.mxu0 0
        %1134 = vmatprep.subr.bf16.mxu0 0
        %1135 = vmatpush1.bf16.msra.mxu0 0
        %1136 = vmatprep.subr.bf16.mxu0 0
        %1137 = vmatpush1.bf16.msra.mxu0 0
        %1138 = vmatprep.mubr.bf16.mxu0 %v1104
        %1139 = vmatmul.mubr.bf16.gmra.mrb[0].mxu0 %v996
        %v1140 = vpop.f32.mrb[0].mxu0
        %v1141 = vadd.f32 %v1029, %v1140
        %v1142 = vpop.f32.mrb[0].mxu0
        %v1143 = vpop.f32.mrb[0].mxu0
        %v1144 = vadd.f32 %v1029, %v1143
        %v1145 = vpop.f32.mrb[0].mxu0
        %1146 = vdwg.mxu0
        %v1147 = vmax.f32 %v1141, 0.0
        %v1148 = vmax.f32 %v1144, 0.0
        %v1149 = vld [vmem:[%s5] sm:$0xf]
        %v1150 = vld [vmem:[%s5 + $0x4] sm:$0xf]
        %v1151 = vld [vmem:[%s5 + $0x8] sm:$0xf]
        %v1152 = vld [vmem:[%s5 + $0xc] sm:$0xf]
        %v1153 = vpack.c.bf16 %v1148, %v1147
        %v1158 = vunpack.c.l.b16 %v1149
        %v1159 = vunpack.c.l.b16 %v1150
        %v1160 = vunpack.c.l.b16 %v1151
        %v1161 = vunpack.c.l.b16 %v1152
        %v1162 = vpack.c.b16 %v1159, %v1158
        %v1163 = vpack.c.b16 %v1161, %v1160
        %vm1164 = vcmask 130048
        %v1166 = vsel %vm1164, %v1162, 0
        %v1169 = vsel %vm1164, %v1163, 0
        %1171 = vmatprep.subr.bf16.mxu0 0
        %1172 = vmatpush1.bf16.msra.mxu0 %v1153
        %1173 = vmatprep.subr.bf16.mxu0 0
        %1174 = vmatpush1.bf16.msra.mxu0 0
        %1175 = vmatprep.subr.bf16.mxu0 0
        %1176 = vmatpush1.bf16.msra.mxu0 0
        %1177 = vmatprep.subr.bf16.mxu0 0
        %1178 = vmatpush1.bf16.msra.mxu0 0
        %1179 = vmatprep.subr.bf16.mxu0 0
        %1180 = vmatpush1.bf16.msra.mxu0 0
        %1181 = vmatprep.subr.bf16.mxu0 0
        %1182 = vmatpush1.bf16.msra.mxu0 0
        %1183 = vmatprep.subr.bf16.mxu0 0
        %1184 = vmatpush1.bf16.msra.mxu0 0
        %1185 = vmatprep.subr.bf16.mxu0 0
        %1186 = vmatpush1.bf16.msra.mxu0 0
        %1187 = vmatprep.subr.bf16.mxu0 0
        %1188 = vmatpush1.bf16.msra.mxu0 0
        %1189 = vmatprep.subr.bf16.mxu0 0
        %1190 = vmatpush1.bf16.msra.mxu0 0
        %1191 = vmatprep.subr.bf16.mxu0 0
        %1192 = vmatpush1.bf16.msra.mxu0 0
        %1193 = vmatprep.subr.bf16.mxu0 0
        %1194 = vmatpush1.bf16.msra.mxu0 0
        %1195 = vmatprep.subr.bf16.mxu0 0
        %1196 = vmatpush1.bf16.msra.mxu0 0
        %1197 = vmatprep.subr.bf16.mxu0 0
        %1198 = vmatpush1.bf16.msra.mxu0 0
        %1199 = vmatprep.subr.bf16.mxu0 0
        %1200 = vmatpush1.bf16.msra.mxu0 0
        %1201 = vmatprep.subr.bf16.mxu0 0
        %1202 = vmatpush1.bf16.msra.mxu0 0
        %1203 = vmatprep.mubr.bf16.mxu0 0
        %1204 = vmatmul.mubr.bf16.gmra.mrb[0].mxu0 %v1166
        %v1205 = vpop.f32.mrb[0].mxu0
        %v1206 = vadd.f32 0.0, %v1205
        %v1207 = vpop.f32.mrb[0].mxu0
        %v1208 = vpop.f32.mrb[0].mxu0
        %v1209 = vadd.f32 0.0, %v1208
        %v1210 = vpop.f32.mrb[0].mxu0
        %1211 = vmatprep.mubr.bf16.mxu0 0
        %1212 = vmatmul.mubr.bf16.gmra.mrb[0].mxu0 %v1169
        %v1213 = vpop.f32.mrb[0].mxu0
        %v1214 = vadd.f32 0.0, %v1213
        %v1215 = vpop.f32.mrb[0].mxu0
        %v1216 = vpop.f32.mrb[0].mxu0
        %v1217 = vadd.f32 0.0, %v1216
        %v1218 = vpop.f32.mrb[0].mxu0
        %1219 = vdwg.mxu0
        %v1220 = vadd.s32 %v623, 16
        %v1221 = vadd.s32 %v623, 24
        %vm1222 = vcmp.lt.s32.totalorder %v623, 0
        %v1223 = vsub.s32 0, %v623
        %v1224 = vsel %vm1222, %v1223, %v623
        %v1225 = vshrl.u32 %v1224, 4
        %v1226 = vand.u32 %v1224, 15
        %v1227 = vsub.s32 0, %v1226
        %v1228 = vsel %vm1222, %v1227, %v1226
        %vm1229 = vcmp.lt.s32.totalorder %v624, 0
        %v1230 = vsub.s32 0, %v624
        %v1231 = vsel %vm1229, %v1230, %v624
        %v1232 = vshrl.u32 %v1231, 4
        %v1233 = vand.u32 %v1231, 15
        %v1234 = vsub.s32 0, %v1233
        %v1235 = vsel %vm1229, %v1234, %v1233
        %vm1236 = vcmp.lt.s32.totalorder %v1220, 0
        %v1237 = vsub.s32 0, %v1220
        %v1238 = vsel %vm1236, %v1237, %v1220
        %v1239 = vshrl.u32 %v1238, 4
        %v1240 = vand.u32 %v1238, 15
        %v1241 = vsub.s32 0, %v1240
        %v1242 = vsel %vm1236, %v1241, %v1240
        %vm1243 = vcmp.lt.s32.totalorder %v1221, 0
        %v1244 = vsub.s32 0, %v1221
        %v1245 = vsel %vm1243, %v1244, %v1221
        %v1246 = vshrl.u32 %v1245, 4
        %v1247 = vand.u32 %v1245, 15
        %v1248 = vsub.s32 0, %v1247
        %v1249 = vsel %vm1243, %v1248, %v1247
        %vm1250 = vcmp.ne.s32.totalorder %v1228, 0
        %vm1251 = vcmp.ne.s32.totalorder %v1235, 0
        %vm1252 = vcmp.ne.s32.totalorder %v1242, 0
        %vm1253 = vcmp.ne.s32.totalorder %v1249, 0
        %vm1254 = vcmp.lt.s32.totalorder %v1228, 0
        %vm1255 = vcmp.lt.s32.totalorder %v1235, 0
        %vm1256 = vcmp.lt.s32.totalorder %v1242, 0
        %vm1257 = vcmp.lt.s32.totalorder %v1249, 0
        %vm1258 = vmand %vm1254, %vm1250
        %vm1259 = vmand %vm1255, %vm1251
        %vm1260 = vmand %vm1256, %vm1252
        %vm1261 = vmand %vm1257, %vm1253
        %v1262 = vadd.s32 %v1228, 16
        %v1263 = vadd.s32 %v1235, 16
        %v1264 = vadd.s32 %v1242, 16
        %v1265 = vadd.s32 %v1249, 16
        %v1266 = vsel %vm1258, %v1262, %v1228
        %v1267 = vsel %vm1259, %v1263, %v1235
        %v1268 = vsel %vm1260, %v1264, %v1242
        %v1269 = vsel %vm1261, %v1265, %v1249
        %vm1270 = vcmp.ne.s32.totalorder %v1266, 0
        %vm1271 = vcmp.ne.s32.totalorder %v1267, 0
        %vm1272 = vcmp.ne.s32.totalorder %v1268, 0
        %vm1273 = vcmp.ne.s32.totalorder %v1269, 0
        %vm1274 = vcmp.ne.s32.totalorder %v1266, 15
        %vm1275 = vcmp.ne.s32.totalorder %v1267, 15
        %vm1276 = vcmp.ne.s32.totalorder %v1268, 15
        %vm1277 = vcmp.ne.s32.totalorder %v1269, 15
        %v1278 = vrot.slane %v1206, 7
        %v1279 = vrot.slane %v1209, 7
        %v1280 = vrot.slane %v1214, 7
        %v1281 = vrot.slane %v1217, 7
        %v1282 = vsel %vm655, %v1280, %v1281
        %v1283 = vsel %vm655, %v1279, %v1280
        %v1284 = vsel %vm655, %v1278, %v1279
        %v1285 = vsel %vm655, %v1281, %v1278
        %v1286 = vsel %vm1270, 1, 0
        %v1287 = vsel %vm1271, 1, 0
        %v1288 = vsel %vm1272, 1, 0
        %v1289 = vsel %vm1273, 1, 0
        %vm1290 = vcmp.eq.s32.totalorder %v1286, 1
        %vm1291 = vcmp.eq.s32.totalorder %v1287, 1
        %vm1292 = vcmp.eq.s32.totalorder %v1288, 1
        %vm1293 = vcmp.eq.s32.totalorder %v1289, 1
        %v1294 = vsel %vm1290, %v1285, 0.0
        %v1295 = vsel %vm1291, %v1284, 0.0
        %v1296 = vsel %vm1292, %v1283, 0.0
        %v1297 = vsel %vm1293, %v1282, 0.0
        %v1298 = vrot.slane %v1206, 1
        %v1299 = vrot.slane %v1209, 1
        %v1300 = vrot.slane %v1214, 1
        %v1301 = vrot.slane %v1217, 1
        %v1302 = vsel %vm666, %v1300, %v1301
        %v1303 = vsel %vm666, %v1299, %v1300
        %v1304 = vsel %vm666, %v1298, %v1299
        %v1305 = vsel %vm666, %v1301, %v1298
        %v1306 = vsel %vm1274, 1, 0
        %v1307 = vsel %vm1275, 1, 0
        %v1308 = vsel %vm1276, 1, 0
        %v1309 = vsel %vm1277, 1, 0
        %vm1310 = vcmp.eq.s32.totalorder %v1306, 1
        %vm1311 = vcmp.eq.s32.totalorder %v1307, 1
        %vm1312 = vcmp.eq.s32.totalorder %v1308, 1
        %vm1313 = vcmp.eq.s32.totalorder %v1309, 1
        %v1314 = vsel %vm1310, %v1304, 0.0
        %v1315 = vsel %vm1311, %v1303, 0.0
        %v1316 = vsel %vm1312, %v1302, 0.0
        %v1317 = vsel %vm1313, %v1305, 0.0
        %1322 = vrot.lane.b32.xlu0 %v1206, 64
        %v1323 = vpop.permute.xlu0 %1322
        %1324 = vrot.lane.b32.xlu0 %v1209, 64
        %v1325 = vpop.permute.xlu0 %1324
        %1326 = vrot.lane.b32.xlu0 %v1214, 64
        %v1327 = vpop.permute.xlu0 %1326
        %1328 = vrot.lane.b32.xlu0 %v1217, 64
        %v1329 = vpop.permute.xlu0 %1328
        %v1334 = vsel %vm694, %v1294, %v1323
        %v1335 = vsel %vm694, %v1295, %v1325
        %v1336 = vsel %vm694, %v1296, %v1327
        %v1337 = vsel %vm694, %v1297, %v1329
        %v1338 = vpack.c.bf16 %v1335, %v1334
        %v1339 = vpack.c.bf16 %v1315, %v1314
        %v1340 = vpack.c.bf16 %v1337, %v1336
        %v1341 = vpack.c.bf16 %v1317, %v1316
        %v1342 = vld [vmem:[#allocation5] sm:$0xf]
        %v1343 = vld [vmem:[#allocation5 + $0x4] sm:$0xf]
        %v1344 = vld [vmem:[#allocation5 + $0x8] sm:$0xf]
        %v1345 = vld [vmem:[#allocation5 + $0xc] sm:$0xf]
        %v1346 = vld [vmem:[#allocation5 + $0x10] sm:$0xf]
        %v1347 = vld [vmem:[#allocation5 + $0x14] sm:$0xf]
        %v1348 = vld [vmem:[#allocation5 + $0x18] sm:$0xf]
        %v1349 = vld [vmem:[#allocation5 + $0x1c] sm:$0xf]
        %v1350 = vld [vmem:[#allocation5 + $0x20] sm:$0xf]
        %v1351 = vld [vmem:[#allocation5 + $0x24] sm:$0xf]
        %v1352 = vld [vmem:[#allocation5 + $0x28] sm:$0xf]
        %v1353 = vld [vmem:[#allocation5 + $0x2c] sm:$0xf]
        %v1354 = vld [vmem:[#allocation5 + $0x30] sm:$0xf]
        %v1355 = vld [vmem:[#allocation5 + $0x34] sm:$0xf]
        %v1356 = vld [vmem:[#allocation5 + $0x38] sm:$0xf]
        %v1357 = vld [vmem:[#allocation5 + $0x3c] sm:$0xf]
        %v1358 = vld [vmem:[#allocation5 + $0x40] sm:$0xf]
        %v1359 = vld [vmem:[#allocation5 + $0x44] sm:$0xf]
        %v1360 = vld [vmem:[#allocation5 + $0x48] sm:$0xf]
        %v1361 = vld [vmem:[#allocation5 + $0x4c] sm:$0xf]
        %v1362 = vld [vmem:[#allocation5 + $0x50] sm:$0xf]
        %v1363 = vld [vmem:[#allocation5 + $0x54] sm:$0xf]
        %v1364 = vld [vmem:[#allocation5 + $0x58] sm:$0xf]
        %v1365 = vld [vmem:[#allocation5 + $0x5c] sm:$0xf]
        %v1366 = vld [vmem:[#allocation7] sm:$0x1]
        %v1368 = vlaneseq
        %v1369 = vshrl.u32 %v1368, 7
        %v1370 = vsub.s32 0, %v1369
        %v1371 = vrot.slane %v1366, %v1370
        %v1397 = vunpack.c.l.b16 %v1342
        %v1398 = vunpack.c.l.b16 %v1343
        %v1399 = vunpack.c.l.b16 %v1344
        %v1400 = vunpack.c.l.b16 %v1345
        %v1401 = vunpack.c.l.b16 %v1346
        %v1402 = vunpack.c.l.b16 %v1347
        %v1403 = vunpack.c.l.b16 %v1348
        %v1404 = vunpack.c.l.b16 %v1349
        %v1405 = vunpack.c.l.b16 %v1350
        %v1406 = vunpack.c.l.b16 %v1351
        %v1407 = vunpack.c.l.b16 %v1352
        %v1408 = vunpack.c.l.b16 %v1353
        %v1409 = vunpack.c.l.b16 %v1354
        %v1410 = vunpack.c.l.b16 %v1355
        %v1411 = vunpack.c.l.b16 %v1356
        %v1412 = vunpack.c.l.b16 %v1357
        %v1413 = vunpack.c.l.b16 %v1358
        %v1414 = vunpack.c.l.b16 %v1359
        %v1415 = vunpack.c.l.b16 %v1360
        %v1416 = vunpack.c.l.b16 %v1361
        %v1417 = vunpack.c.l.b16 %v1362
        %v1418 = vunpack.c.l.b16 %v1363
        %v1419 = vunpack.c.l.b16 %v1364
        %v1420 = vunpack.c.l.b16 %v1365
        %v1421 = vpack.c.b16 %v1398, %v1397
        %v1422 = vpack.c.b16 %v1400, %v1399
        %v1423 = vpack.c.b16 %v1402, %v1401
        %v1424 = vpack.c.b16 %v1404, %v1403
        %v1425 = vpack.c.b16 %v1406, %v1405
        %v1426 = vpack.c.b16 %v1408, %v1407
        %v1427 = vpack.c.b16 %v1410, %v1409
        %v1428 = vpack.c.b16 %v1412, %v1411
        %v1429 = vpack.c.b16 %v1414, %v1413
        %v1430 = vpack.c.b16 %v1416, %v1415
        %v1431 = vpack.c.b16 %v1418, %v1417
        %v1432 = vpack.c.b16 %v1420, %v1419
        %v1446 = vsel %vm694, %v1339, 0
        %v1449 = vsel %vm694, %v1341, 0
        %1451 = vmatprep.subr.bf16.mxu0 0
        %1452 = vmatpush1.bf16.msra.mxu0 %v1421
        %1453 = vmatprep.subr.bf16.mxu0 0
        %1454 = vmatpush1.bf16.msra.mxu0 %v1422
        %1455 = vmatprep.subr.bf16.mxu0 0
        %1456 = vmatpush1.bf16.msra.mxu0 %v1423
        %1457 = vmatprep.subr.bf16.mxu0 0
        %1458 = vmatpush1.bf16.msra.mxu0 %v1424
        %1459 = vmatprep.subr.bf16.mxu0 0
        %1460 = vmatpush1.bf16.msra.mxu0 %v1425
        %1461 = vmatprep.subr.bf16.mxu0 0
        %1462 = vmatpush1.bf16.msra.mxu0 %v1426
        %1463 = vmatprep.subr.bf16.mxu0 0
        %1464 = vmatpush1.bf16.msra.mxu0 %v1427
        %1465 = vmatprep.subr.bf16.mxu0 0
        %1466 = vmatpush1.bf16.msra.mxu0 %v1428
        %1467 = vmatprep.subr.bf16.mxu0 0
        %1468 = vmatpush1.bf16.msra.mxu0 %v1429
        %1469 = vmatprep.subr.bf16.mxu0 0
        %1470 = vmatpush1.bf16.msra.mxu0 %v1430
        %1471 = vmatprep.subr.bf16.mxu0 0
        %1472 = vmatpush1.bf16.msra.mxu0 %v1431
        %1473 = vmatprep.subr.bf16.mxu0 0
        %1474 = vmatpush1.bf16.msra.mxu0 %v1432
        %1475 = vmatprep.subr.bf16.mxu0 0
        %1476 = vmatpush1.bf16.msra.mxu0 0
        %1477 = vmatprep.subr.bf16.mxu0 0
        %1478 = vmatpush1.bf16.msra.mxu0 0
        %1479 = vmatprep.subr.bf16.mxu0 0
        %1480 = vmatpush1.bf16.msra.mxu0 0
        %1481 = vmatprep.subr.bf16.mxu0 0
        %1482 = vmatpush1.bf16.msra.mxu0 0
        %1483 = vmatprep.mubr.bf16.mxu0 %v1446
        %1484 = vmatmul.mubr.bf16.gmra.mrb[0].mxu0 %v1338
        %v1485 = vpop.f32.mrb[0].mxu0
        %v1486 = vadd.f32 %v1371, %v1485
        %v1487 = vpop.f32.mrb[0].mxu0
        %v1488 = vpop.f32.mrb[0].mxu0
        %v1489 = vadd.f32 %v1371, %v1488
        %v1490 = vpop.f32.mrb[0].mxu0
        %1491 = vmatprep.mubr.bf16.mxu0 %v1449
        %1492 = vmatmul.mubr.bf16.gmra.mrb[0].mxu0 %v1340
        %v1493 = vpop.f32.mrb[0].mxu0
        %v1494 = vadd.f32 %v1371, %v1493
        %v1495 = vpop.f32.mrb[0].mxu0
        %v1496 = vpop.f32.mrb[0].mxu0
        %v1497 = vadd.f32 %v1371, %v1496
        %v1498 = vpop.f32.mrb[0].mxu0
        %1499 = vdwg.mxu0
        %v1500 = vmax.f32 %v1486, 0.0
        %v1501 = vmax.f32 %v1489, 0.0
        %v1502 = vmax.f32 %v1494, 0.0
        %v1503 = vmax.f32 %v1497, 0.0
        %v1504 = vrot.slane %v1500, 7
        %v1505 = vrot.slane %v1501, 7
        %v1506 = vrot.slane %v1502, 7
        %v1507 = vrot.slane %v1503, 7
        %v1508 = vsel %vm655, %v1506, %v1507
        %v1509 = vsel %vm655, %v1505, %v1506
        %v1510 = vsel %vm655, %v1504, %v1505
        %v1511 = vsel %vm655, %v1507, %v1504
        %v1512 = vsel %vm1290, %v1511, 0.0
        %v1513 = vsel %vm1291, %v1510, 0.0
        %v1514 = vsel %vm1292, %v1509, 0.0
        %v1515 = vsel %vm1293, %v1508, 0.0
        %v1516 = vrot.slane %v1500, 1
        %v1517 = vrot.slane %v1501, 1
        %v1518 = vrot.slane %v1502, 1
        %v1519 = vrot.slane %v1503, 1
        %v1520 = vsel %vm666, %v1518, %v1519
        %v1521 = vsel %vm666, %v1517, %v1518
        %v1522 = vsel %vm666, %v1516, %v1517
        %v1523 = vsel %vm666, %v1519, %v1516
        %v1524 = vsel %vm1310, %v1522, 0.0
        %v1525 = vsel %vm1311, %v1521, 0.0
        %v1526 = vsel %vm1312, %v1520, 0.0
        %v1527 = vsel %vm1313, %v1523, 0.0
        %v1528 = vpack.c.bf16 %v1513, %v1512
        %v1529 = vpack.c.bf16 %v1501, %v1500
        %v1530 = vpack.c.bf16 %v1525, %v1524
        %v1531 = vpack.c.bf16 %v1515, %v1514
        %v1532 = vpack.c.bf16 %v1503, %v1502
        %v1533 = vpack.c.bf16 %v1527, %v1526
        %v1534 = vld [vmem:[%s7] sm:$0xf]
        %v1535 = vld [vmem:[%s7 + $0x4] sm:$0xf]
        %v1536 = vld [vmem:[%s7 + $0x8] sm:$0xf]
        %v1537 = vld [vmem:[%s7 + $0xc] sm:$0xf]
        %v1538 = vld [vmem:[%s7 + $0x10] sm:$0xf]
        %v1539 = vld [vmem:[%s7 + $0x14] sm:$0xf]
        %v1540 = vld [vmem:[%s7 + $0x18] sm:$0xf]
        %v1541 = vld [vmem:[%s7 + $0x1c] sm:$0xf]
        %v1542 = vld [vmem:[%s7 + $0x20] sm:$0xf]
        %v1543 = vld [vmem:[%s7 + $0x24] sm:$0xf]
        %v1544 = vld [vmem:[%s7 + $0x28] sm:$0xf]
        %v1545 = vld [vmem:[%s7 + $0x2c] sm:$0xf]
        %v1546 = vld [vmem:[%s7 + $0x30] sm:$0xf]
        %v1547 = vld [vmem:[%s7 + $0x34] sm:$0xf]
        %v1548 = vld [vmem:[%s7 + $0x38] sm:$0xf]
        %v1549 = vld [vmem:[%s7 + $0x3c] sm:$0xf]
        %v1550 = vld [vmem:[%s7 + $0x40] sm:$0xf]
        %v1551 = vld [vmem:[%s7 + $0x44] sm:$0xf]
        %v1552 = vld [vmem:[%s7 + $0x48] sm:$0xf]
        %v1553 = vld [vmem:[%s7 + $0x4c] sm:$0xf]
        %v1554 = vld [vmem:[%s7 + $0x50] sm:$0xf]
        %v1555 = vld [vmem:[%s7 + $0x54] sm:$0xf]
        %v1556 = vld [vmem:[%s7 + $0x58] sm:$0xf]
        %v1557 = vld [vmem:[%s7 + $0x5c] sm:$0xf]
        %v1558 = vld [vmem:[%s7 + $0x60] sm:$0xf]
        %v1559 = vld [vmem:[%s7 + $0x64] sm:$0xf]
        %v1560 = vld [vmem:[%s7 + $0x68] sm:$0xf]
        %v1561 = vld [vmem:[%s7 + $0x6c] sm:$0xf]
        %v1562 = vld [vmem:[%s7 + $0x70] sm:$0xf]
        %v1563 = vld [vmem:[%s7 + $0x74] sm:$0xf]
        %v1564 = vld [vmem:[%s7 + $0x78] sm:$0xf]
        %v1565 = vld [vmem:[%s7 + $0x7c] sm:$0xf]
        %v1566 = vld [vmem:[%s7 + $0x80] sm:$0xf]
        %v1567 = vld [vmem:[%s7 + $0x84] sm:$0xf]
        %v1568 = vld [vmem:[%s7 + $0x88] sm:$0xf]
        %v1569 = vld [vmem:[%s7 + $0x8c] sm:$0xf]
        %v1570 = vld [vmem:[%s7 + $0x90] sm:$0xf]
        %v1571 = vld [vmem:[%s7 + $0x94] sm:$0xf]
        %v1572 = vld [vmem:[%s7 + $0x98] sm:$0xf]
        %v1573 = vld [vmem:[%s7 + $0x9c] sm:$0xf]
        %v1574 = vld [vmem:[%s7 + $0xa0] sm:$0xf]
        %v1575 = vld [vmem:[%s7 + $0xa4] sm:$0xf]
        %v1576 = vld [vmem:[%s7 + $0xa8] sm:$0xf]
        %v1577 = vld [vmem:[%s7 + $0xac] sm:$0xf]
        %v1578 = vld [vmem:[%s7 + $0xb0] sm:$0xf]
        %v1579 = vld [vmem:[%s7 + $0xb4] sm:$0xf]
        %v1580 = vld [vmem:[%s7 + $0xb8] sm:$0xf]
        %v1581 = vld [vmem:[%s7 + $0xbc] sm:$0xf]
        %s1582 = scalar_lea.vmem [#allocation7], 1
        %v1583 = vld [vmem:[%s1582] sm:$0x1]
        %v1585 = vlaneseq
        %v1586 = vshrl.u32 %v1585, 7
        %v1587 = vsub.s32 0, %v1586
        %v1588 = vrot.slane %v1583, %v1587
        %v1638 = vunpack.c.l.b16 %v1534
        %v1639 = vunpack.c.l.b16 %v1535
        %v1640 = vunpack.c.l.b16 %v1536
        %v1641 = vunpack.c.l.b16 %v1537
        %v1642 = vunpack.c.l.b16 %v1538
        %v1643 = vunpack.c.l.b16 %v1539
        %v1644 = vunpack.c.l.b16 %v1540
        %v1645 = vunpack.c.l.b16 %v1541
        %v1646 = vunpack.c.l.b16 %v1542
        %v1647 = vunpack.c.l.b16 %v1543
        %v1648 = vunpack.c.l.b16 %v1544
        %v1649 = vunpack.c.l.b16 %v1545
        %v1650 = vunpack.c.l.b16 %v1546
        %v1651 = vunpack.c.l.b16 %v1547
        %v1652 = vunpack.c.l.b16 %v1548
        %v1653 = vunpack.c.l.b16 %v1549
        %v1654 = vunpack.c.l.b16 %v1550
        %v1655 = vunpack.c.l.b16 %v1551
        %v1656 = vunpack.c.l.b16 %v1552
        %v1657 = vunpack.c.l.b16 %v1553
        %v1658 = vunpack.c.l.b16 %v1554
        %v1659 = vunpack.c.l.b16 %v1555
        %v1660 = vunpack.c.l.b16 %v1556
        %v1661 = vunpack.c.l.b16 %v1557
        %v1662 = vunpack.c.l.b16 %v1558
        %v1663 = vunpack.c.l.b16 %v1559
        %v1664 = vunpack.c.l.b16 %v1560
        %v1665 = vunpack.c.l.b16 %v1561
        %v1666 = vunpack.c.l.b16 %v1562
        %v1667 = vunpack.c.l.b16 %v1563
        %v1668 = vunpack.c.l.b16 %v1564
        %v1669 = vunpack.c.l.b16 %v1565
        %v1670 = vunpack.c.l.b16 %v1566
        %v1671 = vunpack.c.l.b16 %v1567
        %v1672 = vunpack.c.l.b16 %v1568
        %v1673 = vunpack.c.l.b16 %v1569
        %v1674 = vunpack.c.l.b16 %v1570
        %v1675 = vunpack.c.l.b16 %v1571
        %v1676 = vunpack.c.l.b16 %v1572
        %v1677 = vunpack.c.l.b16 %v1573
        %v1678 = vunpack.c.l.b16 %v1574
        %v1679 = vunpack.c.l.b16 %v1575
        %v1680 = vunpack.c.l.b16 %v1576
        %v1681 = vunpack.c.l.b16 %v1577
        %v1682 = vunpack.c.l.b16 %v1578
        %v1683 = vunpack.c.l.b16 %v1579
        %v1684 = vunpack.c.l.b16 %v1580
        %v1685 = vunpack.c.l.b16 %v1581
        %v1686 = vpack.c.b16 %v1639, %v1638
        %v1687 = vpack.c.b16 %v1641, %v1640
        %v1688 = vpack.c.b16 %v1643, %v1642
        %v1689 = vpack.c.b16 %v1645, %v1644
        %v1690 = vpack.c.b16 %v1647, %v1646
        %v1691 = vpack.c.b16 %v1649, %v1648
        %v1692 = vpack.c.b16 %v1651, %v1650
        %v1693 = vpack.c.b16 %v1653, %v1652
        %v1694 = vpack.c.b16 %v1655, %v1654
        %v1695 = vpack.c.b16 %v1657, %v1656
        %v1696 = vpack.c.b16 %v1659, %v1658
        %v1697 = vpack.c.b16 %v1661, %v1660
        %v1698 = vpack.c.b16 %v1663, %v1662
        %v1699 = vpack.c.b16 %v1665, %v1664
        %v1700 = vpack.c.b16 %v1667, %v1666
        %v1701 = vpack.c.b16 %v1669, %v1668
        %v1702 = vpack.c.b16 %v1671, %v1670
        %v1703 = vpack.c.b16 %v1673, %v1672
        %v1704 = vpack.c.b16 %v1675, %v1674
        %v1705 = vpack.c.b16 %v1677, %v1676
        %v1706 = vpack.c.b16 %v1679, %v1678
        %v1707 = vpack.c.b16 %v1681, %v1680
        %v1708 = vpack.c.b16 %v1683, %v1682
        %v1709 = vpack.c.b16 %v1685, %v1684
        %1734 = vmatprep.subr.bf16.mxu0 0
        %1735 = vmatpush1.bf16.msra.mxu0 %v1686
        %1736 = vmatprep.subr.bf16.mxu0 0
        %1737 = vmatpush1.bf16.msra.mxu0 %v1687
        %1738 = vmatprep.subr.bf16.mxu0 0
        %1739 = vmatpush1.bf16.msra.mxu0 %v1688
        %1740 = vmatprep.subr.bf16.mxu0 0
        %1741 = vmatpush1.bf16.msra.mxu0 %v1689
        %1742 = vmatprep.subr.bf16.mxu0 0
        %1743 = vmatpush1.bf16.msra.mxu0 %v1690
        %1744 = vmatprep.subr.bf16.mxu0 0
        %1745 = vmatpush1.bf16.msra.mxu0 %v1691
        %1746 = vmatprep.subr.bf16.mxu0 0
        %1747 = vmatpush1.bf16.msra.mxu0 %v1692
        %1748 = vmatprep.subr.bf16.mxu0 0
        %1749 = vmatpush1.bf16.msra.mxu0 %v1693
        %1750 = vmatprep.subr.bf16.mxu0 0
        %1751 = vmatpush1.bf16.msra.mxu0 %v1694
        %1752 = vmatprep.subr.bf16.mxu0 0
        %1753 = vmatpush1.bf16.msra.mxu0 %v1695
        %1754 = vmatprep.subr.bf16.mxu0 0
        %1755 = vmatpush1.bf16.msra.mxu0 %v1696
        %1756 = vmatprep.subr.bf16.mxu0 0
        %1757 = vmatpush1.bf16.msra.mxu0 %v1697
        %1758 = vmatprep.subr.bf16.mxu0 0
        %1759 = vmatpush1.bf16.msra.mxu0 %v1698
        %1760 = vmatprep.subr.bf16.mxu0 0
        %1761 = vmatpush1.bf16.msra.mxu0 %v1699
        %1762 = vmatprep.subr.bf16.mxu0 0
        %1763 = vmatpush1.bf16.msra.mxu0 %v1700
        %1764 = vmatprep.subr.bf16.mxu0 0
        %1765 = vmatpush1.bf16.msra.mxu0 %v1701
        %1766 = vmatprep.mubr.bf16.mxu0 %v1529
        %1767 = vmatmul.mubr.bf16.gmra.mrb[0].mxu0 %v1528
        %v1768 = vpop.f32.mrb[0].mxu0
        %v1769 = vadd.f32 %v1588, %v1768
        %v1770 = vpop.f32.mrb[0].mxu0
        %v1771 = vpop.f32.mrb[0].mxu0
        %v1772 = vadd.f32 %v1588, %v1771
        %v1773 = vpop.f32.mrb[0].mxu0
        %1774 = vmatprep.mubr.bf16.mxu0 %v1532
        %1775 = vmatmul.mubr.bf16.gmra.mrb[0].mxu0 %v1531
        %v1776 = vpop.f32.mrb[0].mxu0
        %v1777 = vadd.f32 %v1588, %v1776
        %v1778 = vpop.f32.mrb[0].mxu0
        %v1779 = vpop.f32.mrb[0].mxu0
        %v1780 = vadd.f32 %v1588, %v1779
        %v1781 = vpop.f32.mrb[0].mxu0
        %1782 = vdwg.mxu0
        %1783 = vmatprep.subr.bf16.mxu0 0
        %1784 = vmatpush1.bf16.msra.mxu0 %v1702
        %1785 = vmatprep.subr.bf16.mxu0 0
        %1786 = vmatpush1.bf16.msra.mxu0 %v1703
        %1787 = vmatprep.subr.bf16.mxu0 0
        %1788 = vmatpush1.bf16.msra.mxu0 %v1704
        %1789 = vmatprep.subr.bf16.mxu0 0
        %1790 = vmatpush1.bf16.msra.mxu0 %v1705
        %1791 = vmatprep.subr.bf16.mxu0 0
        %1792 = vmatpush1.bf16.msra.mxu0 %v1706
        %1793 = vmatprep.subr.bf16.mxu0 0
        %1794 = vmatpush1.bf16.msra.mxu0 %v1707
        %1795 = vmatprep.subr.bf16.mxu0 0
        %1796 = vmatpush1.bf16.msra.mxu0 %v1708
        %1797 = vmatprep.subr.bf16.mxu0 0
        %1798 = vmatpush1.bf16.msra.mxu0 %v1709
        %1799 = vmatprep.subr.bf16.mxu0 0
        %1800 = vmatpush1.bf16.msra.mxu0 0
        %1801 = vmatprep.subr.bf16.mxu0 0
        %1802 = vmatpush1.bf16.msra.mxu0 0
        %1803 = vmatprep.subr.bf16.mxu0 0
        %1804 = vmatpush1.bf16.msra.mxu0 0
        %1805 = vmatprep.subr.bf16.mxu0 0
        %1806 = vmatpush1.bf16.msra.mxu0 0
        %1807 = vmatprep.subr.bf16.mxu0 0
        %1808 = vmatpush1.bf16.msra.mxu0 0
        %1809 = vmatprep.subr.bf16.mxu0 0
        %1810 = vmatpush1.bf16.msra.mxu0 0
        %1811 = vmatprep.subr.bf16.mxu0 0
        %1812 = vmatpush1.bf16.msra.mxu0 0
        %1813 = vmatprep.subr.bf16.mxu0 0
        %1814 = vmatpush1.bf16.msra.mxu0 0
        %1815 = vmatprep.mubr.bf16.mxu0 0
        %1816 = vmatmul.mubr.bf16.gmra.mrb[0].mxu0 %v1530
        %v1817 = vpop.f32.mrb[0].mxu0
        %v1818 = vadd.f32 %v1769, %v1817
        %v1819 = vpop.f32.mrb[0].mxu0
        %v1820 = vpop.f32.mrb[0].mxu0
        %v1821 = vadd.f32 %v1772, %v1820
        %v1822 = vpop.f32.mrb[0].mxu0
        %1823 = vmatprep.mubr.bf16.mxu0 0
        %1824 = vmatmul.mubr.bf16.gmra.mrb[0].mxu0 %v1533
        %v1825 = vpop.f32.mrb[0].mxu0
        %v1826 = vadd.f32 %v1777, %v1825
        %v1827 = vpop.f32.mrb[0].mxu0
        %v1828 = vpop.f32.mrb[0].mxu0
        %v1829 = vadd.f32 %v1780, %v1828
        %v1830 = vpop.f32.mrb[0].mxu0
        %1831 = vdwg.mxu0
        %v1832 = vmax.f32 %v1818, 0.0
        %v1833 = vmax.f32 %v1821, 0.0
        %v1834 = vmax.f32 %v1826, 0.0
        %v1835 = vmax.f32 %v1829, 0.0
        %v1836 = vrot.slane %v1832, 7
        %v1837 = vrot.slane %v1833, 7
        %v1838 = vrot.slane %v1834, 7
        %v1839 = vrot.slane %v1835, 7
        %v1840 = vsel %vm655, %v1838, %v1839
        %v1841 = vsel %vm655, %v1837, %v1838
        %v1842 = vsel %vm655, %v1836, %v1837
        %v1843 = vsel %vm655, %v1839, %v1836
        %v1844 = vsel %vm1290, %v1843, 0.0
        %v1845 = vsel %vm1291, %v1842, 0.0
        %v1846 = vsel %vm1292, %v1841, 0.0
        %v1847 = vsel %vm1293, %v1840, 0.0
        %v1848 = vrot.slane %v1832, 1
        %v1849 = vrot.slane %v1833, 1
        %v1850 = vrot.slane %v1834, 1
        %v1851 = vrot.slane %v1835, 1
        %v1852 = vsel %vm666, %v1850, %v1851
        %v1853 = vsel %vm666, %v1849, %v1850
        %v1854 = vsel %vm666, %v1848, %v1849
        %v1855 = vsel %vm666, %v1851, %v1848
        %v1856 = vsel %vm1310, %v1854, 0.0
        %v1857 = vsel %vm1311, %v1853, 0.0
        %v1858 = vsel %vm1312, %v1852, 0.0
        %v1859 = vsel %vm1313, %v1855, 0.0
        %v1860 = vpack.c.bf16 %v1845, %v1844
        %v1861 = vpack.c.bf16 %v1833, %v1832
        %v1862 = vpack.c.bf16 %v1857, %v1856
        %v1863 = vpack.c.bf16 %v1847, %v1846
        %v1864 = vpack.c.bf16 %v1835, %v1834
        %v1865 = vpack.c.bf16 %v1859, %v1858
        %s1866 = scalar_lea.vmem %s7, 192
        %v1867 = vld [vmem:[%s1866] sm:$0xf]
        %v1868 = vld [vmem:[%s1866 + $0x4] sm:$0xf]
        %v1869 = vld [vmem:[%s1866 + $0x8] sm:$0xf]
        %v1870 = vld [vmem:[%s1866 + $0xc] sm:$0xf]
        %v1871 = vld [vmem:[%s1866 + $0x10] sm:$0xf]
        %v1872 = vld [vmem:[%s1866 + $0x14] sm:$0xf]
        %v1873 = vld [vmem:[%s1866 + $0x18] sm:$0xf]
        %v1874 = vld [vmem:[%s1866 + $0x1c] sm:$0xf]
        %v1875 = vld [vmem:[%s1866 + $0x20] sm:$0xf]
        %v1876 = vld [vmem:[%s1866 + $0x24] sm:$0xf]
        %v1877 = vld [vmem:[%s1866 + $0x28] sm:$0xf]
        %v1878 = vld [vmem:[%s1866 + $0x2c] sm:$0xf]
        %v1879 = vld [vmem:[%s1866 + $0x30] sm:$0xf]
        %v1880 = vld [vmem:[%s1866 + $0x34] sm:$0xf]
        %v1881 = vld [vmem:[%s1866 + $0x38] sm:$0xf]
        %v1882 = vld [vmem:[%s1866 + $0x3c] sm:$0xf]
        %v1883 = vld [vmem:[%s1866 + $0x40] sm:$0xf]
        %v1884 = vld [vmem:[%s1866 + $0x44] sm:$0xf]
        %v1885 = vld [vmem:[%s1866 + $0x48] sm:$0xf]
        %v1886 = vld [vmem:[%s1866 + $0x4c] sm:$0xf]
        %v1887 = vld [vmem:[%s1866 + $0x50] sm:$0xf]
        %v1888 = vld [vmem:[%s1866 + $0x54] sm:$0xf]
        %v1889 = vld [vmem:[%s1866 + $0x58] sm:$0xf]
        %v1890 = vld [vmem:[%s1866 + $0x5c] sm:$0xf]
        %v1891 = vld [vmem:[%s1866 + $0x60] sm:$0xf]
        %v1892 = vld [vmem:[%s1866 + $0x64] sm:$0xf]
        %v1893 = vld [vmem:[%s1866 + $0x68] sm:$0xf]
        %v1894 = vld [vmem:[%s1866 + $0x6c] sm:$0xf]
        %v1895 = vld [vmem:[%s1866 + $0x70] sm:$0xf]
        %v1896 = vld [vmem:[%s1866 + $0x74] sm:$0xf]
        %v1897 = vld [vmem:[%s1866 + $0x78] sm:$0xf]
        %v1898 = vld [vmem:[%s1866 + $0x7c] sm:$0xf]
        %v1899 = vld [vmem:[%s1866 + $0x80] sm:$0xf]
        %v1900 = vld [vmem:[%s1866 + $0x84] sm:$0xf]
        %v1901 = vld [vmem:[%s1866 + $0x88] sm:$0xf]
        %v1902 = vld [vmem:[%s1866 + $0x8c] sm:$0xf]
        %v1903 = vld [vmem:[%s1866 + $0x90] sm:$0xf]
        %v1904 = vld [vmem:[%s1866 + $0x94] sm:$0xf]
        %v1905 = vld [vmem:[%s1866 + $0x98] sm:$0xf]
        %v1906 = vld [vmem:[%s1866 + $0x9c] sm:$0xf]
        %v1907 = vld [vmem:[%s1866 + $0xa0] sm:$0xf]
        %v1908 = vld [vmem:[%s1866 + $0xa4] sm:$0xf]
        %v1909 = vld [vmem:[%s1866 + $0xa8] sm:$0xf]
        %v1910 = vld [vmem:[%s1866 + $0xac] sm:$0xf]
        %v1911 = vld [vmem:[%s1866 + $0xb0] sm:$0xf]
        %v1912 = vld [vmem:[%s1866 + $0xb4] sm:$0xf]
        %v1913 = vld [vmem:[%s1866 + $0xb8] sm:$0xf]
        %v1914 = vld [vmem:[%s1866 + $0xbc] sm:$0xf]
        %s1915 = scalar_lea.vmem [#allocation7], 2
        %v1916 = vld [vmem:[%s1915] sm:$0x1]
        %v1918 = vlaneseq
        %v1919 = vshrl.u32 %v1918, 7
        %v1920 = vsub.s32 0, %v1919
        %v1921 = vrot.slane %v1916, %v1920
        %v1971 = vunpack.c.l.b16 %v1867
        %v1972 = vunpack.c.l.b16 %v1868
        %v1973 = vunpack.c.l.b16 %v1869
        %v1974 = vunpack.c.l.b16 %v1870
        %v1975 = vunpack.c.l.b16 %v1871
        %v1976 = vunpack.c.l.b16 %v1872
        %v1977 = vunpack.c.l.b16 %v1873
        %v1978 = vunpack.c.l.b16 %v1874
        %v1979 = vunpack.c.l.b16 %v1875
        %v1980 = vunpack.c.l.b16 %v1876
        %v1981 = vunpack.c.l.b16 %v1877
        %v1982 = vunpack.c.l.b16 %v1878
        %v1983 = vunpack.c.l.b16 %v1879
        %v1984 = vunpack.c.l.b16 %v1880
        %v1985 = vunpack.c.l.b16 %v1881
        %v1986 = vunpack.c.l.b16 %v1882
        %v1987 = vunpack.c.l.b16 %v1883
        %v1988 = vunpack.c.l.b16 %v1884
        %v1989 = vunpack.c.l.b16 %v1885
        %v1990 = vunpack.c.l.b16 %v1886
        %v1991 = vunpack.c.l.b16 %v1887
        %v1992 = vunpack.c.l.b16 %v1888
        %v1993 = vunpack.c.l.b16 %v1889
        %v1994 = vunpack.c.l.b16 %v1890
        %v1995 = vunpack.c.l.b16 %v1891
        %v1996 = vunpack.c.l.b16 %v1892
        %v1997 = vunpack.c.l.b16 %v1893
        %v1998 = vunpack.c.l.b16 %v1894
        %v1999 = vunpack.c.l.b16 %v1895
        %v2000 = vunpack.c.l.b16 %v1896
        %v2001 = vunpack.c.l.b16 %v1897
        %v2002 = vunpack.c.l.b16 %v1898
        %v2003 = vunpack.c.l.b16 %v1899
        %v2004 = vunpack.c.l.b16 %v1900
        %v2005 = vunpack.c.l.b16 %v1901
        %v2006 = vunpack.c.l.b16 %v1902
        %v2007 = vunpack.c.l.b16 %v1903
        %v2008 = vunpack.c.l.b16 %v1904
        %v2009 = vunpack.c.l.b16 %v1905
        %v2010 = vunpack.c.l.b16 %v1906
        %v2011 = vunpack.c.l.b16 %v1907
        %v2012 = vunpack.c.l.b16 %v1908
        %v2013 = vunpack.c.l.b16 %v1909
        %v2014 = vunpack.c.l.b16 %v1910
        %v2015 = vunpack.c.l.b16 %v1911
        %v2016 = vunpack.c.l.b16 %v1912
        %v2017 = vunpack.c.l.b16 %v1913
        %v2018 = vunpack.c.l.b16 %v1914
        %v2019 = vpack.c.b16 %v1972, %v1971
        %v2020 = vpack.c.b16 %v1974, %v1973
        %v2021 = vpack.c.b16 %v1976, %v1975
        %v2022 = vpack.c.b16 %v1978, %v1977
        %v2023 = vpack.c.b16 %v1980, %v1979
        %v2024 = vpack.c.b16 %v1982, %v1981
        %v2025 = vpack.c.b16 %v1984, %v1983
        %v2026 = vpack.c.b16 %v1986, %v1985
        %v2027 = vpack.c.b16 %v1988, %v1987
        %v2028 = vpack.c.b16 %v1990, %v1989
        %v2029 = vpack.c.b16 %v1992, %v1991
        %v2030 = vpack.c.b16 %v1994, %v1993
        %v2031 = vpack.c.b16 %v1996, %v1995
        %v2032 = vpack.c.b16 %v1998, %v1997
        %v2033 = vpack.c.b16 %v2000, %v1999
        %v2034 = vpack.c.b16 %v2002, %v2001
        %v2035 = vpack.c.b16 %v2004, %v2003
        %v2036 = vpack.c.b16 %v2006, %v2005
        %v2037 = vpack.c.b16 %v2008, %v2007
        %v2038 = vpack.c.b16 %v2010, %v2009
        %v2039 = vpack.c.b16 %v2012, %v2011
        %v2040 = vpack.c.b16 %v2014, %v2013
        %v2041 = vpack.c.b16 %v2016, %v2015
        %v2042 = vpack.c.b16 %v2018, %v2017
        %2067 = vmatprep.subr.bf16.mxu0 0
        %2068 = vmatpush1.bf16.msra.mxu0 %v2019
        %2069 = vmatprep.subr.bf16.mxu0 0
        %2070 = vmatpush1.bf16.msra.mxu0 %v2020
        %2071 = vmatprep.subr.bf16.mxu0 0
        %2072 = vmatpush1.bf16.msra.mxu0 %v2021
        %2073 = vmatprep.subr.bf16.mxu0 0
        %2074 = vmatpush1.bf16.msra.mxu0 %v2022
        %2075 = vmatprep.subr.bf16.mxu0 0
        %2076 = vmatpush1.bf16.msra.mxu0 %v2023
        %2077 = vmatprep.subr.bf16.mxu0 0
        %2078 = vmatpush1.bf16.msra.mxu0 %v2024
        %2079 = vmatprep.subr.bf16.mxu0 0
        %2080 = vmatpush1.bf16.msra.mxu0 %v2025
        %2081 = vmatprep.subr.bf16.mxu0 0
        %2082 = vmatpush1.bf16.msra.mxu0 %v2026
        %2083 = vmatprep.subr.bf16.mxu0 0
        %2084 = vmatpush1.bf16.msra.mxu0 %v2027
        %2085 = vmatprep.subr.bf16.mxu0 0
        %2086 = vmatpush1.bf16.msra.mxu0 %v2028
        %2087 = vmatprep.subr.bf16.mxu0 0
        %2088 = vmatpush1.bf16.msra.mxu0 %v2029
        %2089 = vmatprep.subr.bf16.mxu0 0
        %2090 = vmatpush1.bf16.msra.mxu0 %v2030
        %2091 = vmatprep.subr.bf16.mxu0 0
        %2092 = vmatpush1.bf16.msra.mxu0 %v2031
        %2093 = vmatprep.subr.bf16.mxu0 0
        %2094 = vmatpush1.bf16.msra.mxu0 %v2032
        %2095 = vmatprep.subr.bf16.mxu0 0
        %2096 = vmatpush1.bf16.msra.mxu0 %v2033
        %2097 = vmatprep.subr.bf16.mxu0 0
        %2098 = vmatpush1.bf16.msra.mxu0 %v2034
        %2099 = vmatprep.mubr.bf16.mxu0 %v1861
        %2100 = vmatmul.mubr.bf16.gmra.mrb[0].mxu0 %v1860
        %v2101 = vpop.f32.mrb[0].mxu0
        %v2102 = vadd.f32 %v1921, %v2101
        %v2103 = vpop.f32.mrb[0].mxu0
        %v2104 = vpop.f32.mrb[0].mxu0
        %v2105 = vadd.f32 %v1921, %v2104
        %v2106 = vpop.f32.mrb[0].mxu0
        %2107 = vmatprep.mubr.bf16.mxu0 %v1864
        %2108 = vmatmul.mubr.bf16.gmra.mrb[0].mxu0 %v1863
        %v2109 = vpop.f32.mrb[0].mxu0
        %v2110 = vadd.f32 %v1921, %v2109
        %v2111 = vpop.f32.mrb[0].mxu0
        %v2112 = vpop.f32.mrb[0].mxu0
        %v2113 = vadd.f32 %v1921, %v2112
        %v2114 = vpop.f32.mrb[0].mxu0
        %2115 = vdwg.mxu0
        %2116 = vmatprep.subr.bf16.mxu0 0
        %2117 = vmatpush1.bf16.msra.mxu0 %v2035
        %2118 = vmatprep.subr.bf16.mxu0 0
        %2119 = vmatpush1.bf16.msra.mxu0 %v2036
        %2120 = vmatprep.subr.bf16.mxu0 0
        %2121 = vmatpush1.bf16.msra.mxu0 %v2037
        %2122 = vmatprep.subr.bf16.mxu0 0
        %2123 = vmatpush1.bf16.msra.mxu0 %v2038
        %2124 = vmatprep.subr.bf16.mxu0 0
        %2125 = vmatpush1.bf16.msra.mxu0 %v2039
        %2126 = vmatprep.subr.bf16.mxu0 0
        %2127 = vmatpush1.bf16.msra.mxu0 %v2040
        %2128 = vmatprep.subr.bf16.mxu0 0
        %2129 = vmatpush1.bf16.msra.mxu0 %v2041
        %2130 = vmatprep.subr.bf16.mxu0 0
        %2131 = vmatpush1.bf16.msra.mxu0 %v2042
        %2132 = vmatprep.subr.bf16.mxu0 0
        %2133 = vmatpush1.bf16.msra.mxu0 0
        %2134 = vmatprep.subr.bf16.mxu0 0
        %2135 = vmatpush1.bf16.msra.mxu0 0
        %2136 = vmatprep.subr.bf16.mxu0 0
        %2137 = vmatpush1.bf16.msra.mxu0 0
        %2138 = vmatprep.subr.bf16.mxu0 0
        %2139 = vmatpush1.bf16.msra.mxu0 0
        %2140 = vmatprep.subr.bf16.mxu0 0
        %2141 = vmatpush1.bf16.msra.mxu0 0
        %2142 = vmatprep.subr.bf16.mxu0 0
        %2143 = vmatpush1.bf16.msra.mxu0 0
        %2144 = vmatprep.subr.bf16.mxu0 0
        %2145 = vmatpush1.bf16.msra.mxu0 0
        %2146 = vmatprep.subr.bf16.mxu0 0
        %2147 = vmatpush1.bf16.msra.mxu0 0
        %2148 = vmatprep.mubr.bf16.mxu0 0
        %2149 = vmatmul.mubr.bf16.gmra.mrb[0].mxu0 %v1862
        %v2150 = vpop.f32.mrb[0].mxu0
        %v2151 = vadd.f32 %v2102, %v2150
        %v2152 = vpop.f32.mrb[0].mxu0
        %v2153 = vpop.f32.mrb[0].mxu0
        %v2154 = vadd.f32 %v2105, %v2153
        %v2155 = vpop.f32.mrb[0].mxu0
        %2156 = vmatprep.mubr.bf16.mxu0 0
        %2157 = vmatmul.mubr.bf16.gmra.mrb[0].mxu0 %v1865
        %v2158 = vpop.f32.mrb[0].mxu0
        %v2159 = vadd.f32 %v2110, %v2158
        %v2160 = vpop.f32.mrb[0].mxu0
        %v2161 = vpop.f32.mrb[0].mxu0
        %v2162 = vadd.f32 %v2113, %v2161
        %v2163 = vpop.f32.mrb[0].mxu0
        %2164 = vdwg.mxu0
        %v2165 = vmax.f32 %v2151, 0.0
        %v2166 = vmax.f32 %v2154, 0.0
        %v2167 = vmax.f32 %v2159, 0.0
        %v2168 = vmax.f32 %v2162, 0.0
        %v2169 = vld [vmem:[%s9] sm:$0xf]
        %v2170 = vld [vmem:[%s9 + $0x4] sm:$0xf]
        %v2171 = vld [vmem:[%s9 + $0x8] sm:$0xf]
        %v2172 = vld [vmem:[%s9 + $0xc] sm:$0xf]
        %v2173 = vld [vmem:[%s9 + $0x10] sm:$0xf]
        %v2174 = vld [vmem:[%s9 + $0x14] sm:$0xf]
        %v2175 = vld [vmem:[%s9 + $0x18] sm:$0xf]
        %v2176 = vld [vmem:[%s9 + $0x1c] sm:$0xf]
        %v2177 = vpack.c.bf16 %v2166, %v2165
        %v2178 = vpack.c.bf16 %v2168, %v2167
        %v2187 = vunpack.c.l.b16 %v2169
        %v2188 = vunpack.c.l.b16 %v2170
        %v2189 = vunpack.c.l.b16 %v2171
        %v2190 = vunpack.c.l.b16 %v2172
        %v2191 = vunpack.c.l.b16 %v2173
        %v2192 = vunpack.c.l.b16 %v2174
        %v2193 = vunpack.c.l.b16 %v2175
        %v2194 = vunpack.c.l.b16 %v2176
        %v2195 = vpack.c.b16 %v2188, %v2187
        %v2196 = vpack.c.b16 %v2190, %v2189
        %v2197 = vpack.c.b16 %v2192, %v2191
        %v2198 = vpack.c.b16 %v2194, %v2193
        %v2200 = vsel %vm691, %v2195, 0
        %v2203 = vsel %vm691, %v2196, 0
        %v2206 = vsel %vm691, %v2197, 0
        %v2209 = vsel %vm691, %v2198, 0
        %2211 = vmatprep.subr.bf16.mxu0 0
        %2212 = vmatpush1.bf16.msra.mxu0 %v2177
        %2213 = vmatprep.subr.bf16.mxu0 0
        %2214 = vmatpush1.bf16.msra.mxu0 %v2178
        %2215 = vmatprep.subr.bf16.mxu0 0
        %2216 = vmatpush1.bf16.msra.mxu0 0
        %2217 = vmatprep.subr.bf16.mxu0 0
        %2218 = vmatpush1.bf16.msra.mxu0 0
        %2219 = vmatprep.subr.bf16.mxu0 0
        %2220 = vmatpush1.bf16.msra.mxu0 0
        %2221 = vmatprep.subr.bf16.mxu0 0
        %2222 = vmatpush1.bf16.msra.mxu0 0
        %2223 = vmatprep.subr.bf16.mxu0 0
        %2224 = vmatpush1.bf16.msra.mxu0 0
        %2225 = vmatprep.subr.bf16.mxu0 0
        %2226 = vmatpush1.bf16.msra.mxu0 0
        %2227 = vmatprep.subr.bf16.mxu0 0
        %2228 = vmatpush1.bf16.msra.mxu0 0
        %2229 = vmatprep.subr.bf16.mxu0 0
        %2230 = vmatpush1.bf16.msra.mxu0 0
        %2231 = vmatprep.subr.bf16.mxu0 0
        %2232 = vmatpush1.bf16.msra.mxu0 0
        %2233 = vmatprep.subr.bf16.mxu0 0
        %2234 = vmatpush1.bf16.msra.mxu0 0
        %2235 = vmatprep.subr.bf16.mxu0 0
        %2236 = vmatpush1.bf16.msra.mxu0 0
        %2237 = vmatprep.subr.bf16.mxu0 0
        %2238 = vmatpush1.bf16.msra.mxu0 0
        %2239 = vmatprep.subr.bf16.mxu0 0
        %2240 = vmatpush1.bf16.msra.mxu0 0
        %2241 = vmatprep.subr.bf16.mxu0 0
        %2242 = vmatpush1.bf16.msra.mxu0 0
        %2243 = vmatprep.mubr.bf16.mxu0 0
        %2244 = vmatmul.mubr.bf16.gmra.mrb[0].mxu0 %v2200
        %v2245 = vpop.f32.mrb[0].mxu0
        %v2246 = vadd.f32 0.0, %v2245
        %v2247 = vpop.f32.mrb[0].mxu0
        %v2248 = vpop.f32.mrb[0].mxu0
        %v2249 = vadd.f32 0.0, %v2248
        %v2250 = vpop.f32.mrb[0].mxu0
        %2251 = vmatprep.mubr.bf16.mxu0 0
        %2252 = vmatmul.mubr.bf16.gmra.mrb[0].mxu0 %v2203
        %v2253 = vpop.f32.mrb[0].mxu0
        %v2254 = vadd.f32 0.0, %v2253
        %v2255 = vpop.f32.mrb[0].mxu0
        %v2256 = vpop.f32.mrb[0].mxu0
        %v2257 = vadd.f32 0.0, %v2256
        %v2258 = vpop.f32.mrb[0].mxu0
        %2259 = vmatprep.mubr.bf16.mxu0 0
        %2260 = vmatmul.mubr.bf16.gmra.mrb[0].mxu0 %v2206
        %v2261 = vpop.f32.mrb[0].mxu0
        %v2262 = vadd.f32 0.0, %v2261
        %v2263 = vpop.f32.mrb[0].mxu0
        %v2264 = vpop.f32.mrb[0].mxu0
        %v2265 = vadd.f32 0.0, %v2264
        %v2266 = vpop.f32.mrb[0].mxu0
        %2267 = vmatprep.mubr.bf16.mxu0 0
        %2268 = vmatmul.mubr.bf16.gmra.mrb[0].mxu0 %v2209
        %v2269 = vpop.f32.mrb[0].mxu0
        %v2270 = vadd.f32 0.0, %v2269
        %v2271 = vpop.f32.mrb[0].mxu0
        %v2272 = vpop.f32.mrb[0].mxu0
        %v2273 = vadd.f32 0.0, %v2272
        %v2274 = vpop.f32.mrb[0].mxu0
        %2275 = vdwg.mxu0
        %v2276 = vadd.s32 %v623, 32
        %v2277 = vadd.s32 %v623, 40
        %v2278 = vadd.s32 %v623, 48
        %v2279 = vadd.s32 %v623, 56
        %vm2280 = vcmp.lt.s32.totalorder %v623, 0
        %v2281 = vsub.s32 0, %v623
        %v2282 = vsel %vm2280, %v2281, %v623
        %v2283 = vshrl.u32 %v2282, 5
        %v2284 = vand.u32 %v2282, 31
        %v2285 = vsub.s32 0, %v2284
        %v2286 = vsel %vm2280, %v2285, %v2284
        %vm2287 = vcmp.lt.s32.totalorder %v624, 0
        %v2288 = vsub.s32 0, %v624
        %v2289 = vsel %vm2287, %v2288, %v624
        %v2290 = vshrl.u32 %v2289, 5
        %v2291 = vand.u32 %v2289, 31
        %v2292 = vsub.s32 0, %v2291
        %v2293 = vsel %vm2287, %v2292, %v2291
        %vm2294 = vcmp.lt.s32.totalorder %v1220, 0
        %v2295 = vsub.s32 0, %v1220
        %v2296 = vsel %vm2294, %v2295, %v1220
        %v2297 = vshrl.u32 %v2296, 5
        %v2298 = vand.u32 %v2296, 31
        %v2299 = vsub.s32 0, %v2298
        %v2300 = vsel %vm2294, %v2299, %v2298
        %vm2301 = vcmp.lt.s32.totalorder %v1221, 0
        %v2302 = vsub.s32 0, %v1221
        %v2303 = vsel %vm2301, %v2302, %v1221
        %v2304 = vshrl.u32 %v2303, 5
        %v2305 = vand.u32 %v2303, 31
        %v2306 = vsub.s32 0, %v2305
        %v2307 = vsel %vm2301, %v2306, %v2305
        %vm2308 = vcmp.lt.s32.totalorder %v2276, 0
        %v2309 = vsub.s32 0, %v2276
        %v2310 = vsel %vm2308, %v2309, %v2276
        %v2311 = vshrl.u32 %v2310, 5
        %v2312 = vand.u32 %v2310, 31
        %v2313 = vsub.s32 0, %v2312
        %v2314 = vsel %vm2308, %v2313, %v2312
        %vm2315 = vcmp.lt.s32.totalorder %v2277, 0
        %v2316 = vsub.s32 0, %v2277
        %v2317 = vsel %vm2315, %v2316, %v2277
        %v2318 = vshrl.u32 %v2317, 5
        %v2319 = vand.u32 %v2317, 31
        %v2320 = vsub.s32 0, %v2319
        %v2321 = vsel %vm2315, %v2320, %v2319
        %vm2322 = vcmp.lt.s32.totalorder %v2278, 0
        %v2323 = vsub.s32 0, %v2278
        %v2324 = vsel %vm2322, %v2323, %v2278
        %v2325 = vshrl.u32 %v2324, 5
        %v2326 = vand.u32 %v2324, 31
        %v2327 = vsub.s32 0, %v2326
        %v2328 = vsel %vm2322, %v2327, %v2326
        %vm2329 = vcmp.lt.s32.totalorder %v2279, 0
        %v2330 = vsub.s32 0, %v2279
        %v2331 = vsel %vm2329, %v2330, %v2279
        %v2332 = vshrl.u32 %v2331, 5
        %v2333 = vand.u32 %v2331, 31
        %v2334 = vsub.s32 0, %v2333
        %v2335 = vsel %vm2329, %v2334, %v2333
        %vm2336 = vcmp.ne.s32.totalorder %v2286, 0
        %vm2337 = vcmp.ne.s32.totalorder %v2293, 0
        %vm2338 = vcmp.ne.s32.totalorder %v2300, 0
        %vm2339 = vcmp.ne.s32.totalorder %v2307, 0
        %vm2340 = vcmp.ne.s32.totalorder %v2314, 0
        %vm2341 = vcmp.ne.s32.totalorder %v2321, 0
        %vm2342 = vcmp.ne.s32.totalorder %v2328, 0
        %vm2343 = vcmp.ne.s32.totalorder %v2335, 0
        %vm2344 = vcmp.lt.s32.totalorder %v2286, 0
        %vm2345 = vcmp.lt.s32.totalorder %v2293, 0
        %vm2346 = vcmp.lt.s32.totalorder %v2300, 0
        %vm2347 = vcmp.lt.s32.totalorder %v2307, 0
        %vm2348 = vcmp.lt.s32.totalorder %v2314, 0
        %vm2349 = vcmp.lt.s32.totalorder %v2321, 0
        %vm2350 = vcmp.lt.s32.totalorder %v2328, 0
        %vm2351 = vcmp.lt.s32.totalorder %v2335, 0
        %vm2352 = vmand %vm2344, %vm2336
        %vm2353 = vmand %vm2345, %vm2337
        %vm2354 = vmand %vm2346, %vm2338
        %vm2355 = vmand %vm2347, %vm2339
        %vm2356 = vmand %vm2348, %vm2340
        %vm2357 = vmand %vm2349, %vm2341
        %vm2358 = vmand %vm2350, %vm2342
        %vm2359 = vmand %vm2351, %vm2343
        %v2360 = vadd.s32 %v2286, 32
        %v2361 = vadd.s32 %v2293, 32
        %v2362 = vadd.s32 %v2300, 32
        %v2363 = vadd.s32 %v2307, 32
        %v2364 = vadd.s32 %v2314, 32
        %v2365 = vadd.s32 %v2321, 32
        %v2366 = vadd.s32 %v2328, 32
        %v2367 = vadd.s32 %v2335, 32
        %v2368 = vsel %vm2352, %v2360, %v2286
        %v2369 = vsel %vm2353, %v2361, %v2293
        %v2370 = vsel %vm2354, %v2362, %v2300
        %v2371 = vsel %vm2355, %v2363, %v2307
        %v2372 = vsel %vm2356, %v2364, %v2314
        %v2373 = vsel %vm2357, %v2365, %v2321
        %v2374 = vsel %vm2358, %v2366, %v2328
        %v2375 = vsel %vm2359, %v2367, %v2335
        %vm2376 = vcmp.ne.s32.totalorder %v2368, 0
        %vm2377 = vcmp.ne.s32.totalorder %v2369, 0
        %vm2378 = vcmp.ne.s32.totalorder %v2370, 0
        %vm2379 = vcmp.ne.s32.totalorder %v2371, 0
        %vm2380 = vcmp.ne.s32.totalorder %v2372, 0
        %vm2381 = vcmp.ne.s32.totalorder %v2373, 0
        %vm2382 = vcmp.ne.s32.totalorder %v2374, 0
        %vm2383 = vcmp.ne.s32.totalorder %v2375, 0
        %vm2384 = vcmp.ne.s32.totalorder %v2368, 31
        %vm2385 = vcmp.ne.s32.totalorder %v2369, 31
        %vm2386 = vcmp.ne.s32.totalorder %v2370, 31
        %vm2387 = vcmp.ne.s32.totalorder %v2371, 31
        %vm2388 = vcmp.ne.s32.totalorder %v2372, 31
        %vm2389 = vcmp.ne.s32.totalorder %v2373, 31
        %vm2390 = vcmp.ne.s32.totalorder %v2374, 31
        %vm2391 = vcmp.ne.s32.totalorder %v2375, 31
        %v2392 = vrot.slane %v2246, 7
        %v2393 = vrot.slane %v2249, 7
        %v2394 = vrot.slane %v2254, 7
        %v2395 = vrot.slane %v2257, 7
        %v2396 = vrot.slane %v2262, 7
        %v2397 = vrot.slane %v2265, 7
        %v2398 = vrot.slane %v2270, 7
        %v2399 = vrot.slane %v2273, 7
        %v2400 = vsel %vm655, %v2398, %v2399
        %v2401 = vsel %vm655, %v2397, %v2398
        %v2402 = vsel %vm655, %v2396, %v2397
        %v2403 = vsel %vm655, %v2395, %v2396
        %v2404 = vsel %vm655, %v2394, %v2395
        %v2405 = vsel %vm655, %v2393, %v2394
        %v2406 = vsel %vm655, %v2392, %v2393
        %v2407 = vsel %vm655, %v2399, %v2392
        %v2408 = vsel %vm2376, 1, 0
        %v2409 = vsel %vm2377, 1, 0
        %v2410 = vsel %vm2378, 1, 0
        %v2411 = vsel %vm2379, 1, 0
        %v2412 = vsel %vm2380, 1, 0
        %v2413 = vsel %vm2381, 1, 0
        %v2414 = vsel %vm2382, 1, 0
        %v2415 = vsel %vm2383, 1, 0
        %vm2416 = vcmp.eq.s32.totalorder %v2408, 1
        %vm2417 = vcmp.eq.s32.totalorder %v2409, 1
        %vm2418 = vcmp.eq.s32.totalorder %v2410, 1
        %vm2419 = vcmp.eq.s32.totalorder %v2411, 1
        %vm2420 = vcmp.eq.s32.totalorder %v2412, 1
        %vm2421 = vcmp.eq.s32.totalorder %v2413, 1
        %vm2422 = vcmp.eq.s32.totalorder %v2414, 1
        %vm2423 = vcmp.eq.s32.totalorder %v2415, 1
        %v2424 = vsel %vm2416, %v2407, 0.0
        %v2425 = vsel %vm2417, %v2406, 0.0
        %v2426 = vsel %vm2418, %v2405, 0.0
        %v2427 = vsel %vm2419, %v2404, 0.0
        %v2428 = vsel %vm2420, %v2403, 0.0
        %v2429 = vsel %vm2421, %v2402, 0.0
        %v2430 = vsel %vm2422, %v2401, 0.0
        %v2431 = vsel %vm2423, %v2400, 0.0
        %v2432 = vrot.slane %v2246, 1
        %v2433 = vrot.slane %v2249, 1
        %v2434 = vrot.slane %v2254, 1
        %v2435 = vrot.slane %v2257, 1
        %v2436 = vrot.slane %v2262, 1
        %v2437 = vrot.slane %v2265, 1
        %v2438 = vrot.slane %v2270, 1
        %v2439 = vrot.slane %v2273, 1
        %v2440 = vsel %vm666, %v2438, %v2439
        %v2441 = vsel %vm666, %v2437, %v2438
        %v2442 = vsel %vm666, %v2436, %v2437
        %v2443 = vsel %vm666, %v2435, %v2436
        %v2444 = vsel %vm666, %v2434, %v2435
        %v2445 = vsel %vm666, %v2433, %v2434
        %v2446 = vsel %vm666, %v2432, %v2433
        %v2447 = vsel %vm666, %v2439, %v2432
        %v2448 = vsel %vm2384, 1, 0
        %v2449 = vsel %vm2385, 1, 0
        %v2450 = vsel %vm2386, 1, 0
        %v2451 = vsel %vm2387, 1, 0
        %v2452 = vsel %vm2388, 1, 0
        %v2453 = vsel %vm2389, 1, 0
        %v2454 = vsel %vm2390, 1, 0
        %v2455 = vsel %vm2391, 1, 0
        %vm2456 = vcmp.eq.s32.totalorder %v2448, 1
        %vm2457 = vcmp.eq.s32.totalorder %v2449, 1
        %vm2458 = vcmp.eq.s32.totalorder %v2450, 1
        %vm2459 = vcmp.eq.s32.totalorder %v2451, 1
        %vm2460 = vcmp.eq.s32.totalorder %v2452, 1
        %vm2461 = vcmp.eq.s32.totalorder %v2453, 1
        %vm2462 = vcmp.eq.s32.totalorder %v2454, 1
        %vm2463 = vcmp.eq.s32.totalorder %v2455, 1
        %v2464 = vsel %vm2456, %v2446, 0.0
        %v2465 = vsel %vm2457, %v2445, 0.0
        %v2466 = vsel %vm2458, %v2444, 0.0
        %v2467 = vsel %vm2459, %v2443, 0.0
        %v2468 = vsel %vm2460, %v2442, 0.0
        %v2469 = vsel %vm2461, %v2441, 0.0
        %v2470 = vsel %vm2462, %v2440, 0.0
        %v2471 = vsel %vm2463, %v2447, 0.0
        %v2472 = vpack.c.bf16 %v2425, %v2424
        %v2473 = vpack.c.bf16 %v2249, %v2246
        %v2474 = vpack.c.bf16 %v2465, %v2464
        %v2475 = vpack.c.bf16 %v2427, %v2426
        %v2476 = vpack.c.bf16 %v2257, %v2254
        %v2477 = vpack.c.bf16 %v2467, %v2466
        %v2478 = vpack.c.bf16 %v2429, %v2428
        %v2479 = vpack.c.bf16 %v2265, %v2262
        %v2480 = vpack.c.bf16 %v2469, %v2468
        %v2481 = vpack.c.bf16 %v2431, %v2430
        %v2482 = vpack.c.bf16 %v2273, %v2270
        %v2483 = vpack.c.bf16 %v2471, %v2470
        %v2484 = vld [vmem:[%s10] sm:$0xff]
        %v2485 = vld [vmem:[%s10 + $0x8] sm:$0xff]
        %v2486 = vld [vmem:[%s10 + $0x10] sm:$0xff]
        %v2487 = vld [vmem:[%s10 + $0x18] sm:$0xff]
        %v2488 = vld [vmem:[%s10 + $0x20] sm:$0xff]
        %v2489 = vld [vmem:[%s10 + $0x28] sm:$0xff]
        %v2490 = vld [vmem:[%s10 + $0x30] sm:$0xff]
        %v2491 = vld [vmem:[%s10 + $0x38] sm:$0xff]
        %v2492 = vld [vmem:[%s10 + $0x40] sm:$0xff]
        %v2493 = vld [vmem:[%s10 + $0x48] sm:$0xff]
        %v2494 = vld [vmem:[%s10 + $0x50] sm:$0xff]
        %v2495 = vld [vmem:[%s10 + $0x58] sm:$0xff]
        %v2496 = vld [vmem:[%s10 + $0x60] sm:$0xff]
        %v2497 = vld [vmem:[%s10 + $0x68] sm:$0xff]
        %v2498 = vld [vmem:[%s10 + $0x70] sm:$0xff]
        %v2499 = vld [vmem:[%s10 + $0x78] sm:$0xff]
        %v2500 = vld [vmem:[%s10 + $0x80] sm:$0xff]
        %v2501 = vld [vmem:[%s10 + $0x88] sm:$0xff]
        %v2502 = vld [vmem:[%s10 + $0x90] sm:$0xff]
        %v2503 = vld [vmem:[%s10 + $0x98] sm:$0xff]
        %v2504 = vld [vmem:[%s10 + $0xa0] sm:$0xff]
        %v2505 = vld [vmem:[%s10 + $0xa8] sm:$0xff]
        %v2506 = vld [vmem:[%s10 + $0xb0] sm:$0xff]
        %v2507 = vld [vmem:[%s10 + $0xb8] sm:$0xff]
        %v2508 = vld [vmem:[%s10 + $0xc0] sm:$0xff]
        %v2509 = vld [vmem:[%s10 + $0xc8] sm:$0xff]
        %v2510 = vld [vmem:[%s10 + $0xd0] sm:$0xff]
        %v2511 = vld [vmem:[%s10 + $0xd8] sm:$0xff]
        %v2512 = vld [vmem:[%s10 + $0xe0] sm:$0xff]
        %v2513 = vld [vmem:[%s10 + $0xe8] sm:$0xff]
        %v2514 = vld [vmem:[%s10 + $0xf0] sm:$0xff]
        %v2515 = vld [vmem:[%s10 + $0xf8] sm:$0xff]
        %v2516 = vld [vmem:[%s10 + $0x100] sm:$0xff]
        %v2517 = vld [vmem:[%s10 + $0x108] sm:$0xff]
        %v2518 = vld [vmem:[%s10 + $0x110] sm:$0xff]
        %v2519 = vld [vmem:[%s10 + $0x118] sm:$0xff]
        %v2520 = vld [vmem:[%s10 + $0x120] sm:$0xff]
        %v2521 = vld [vmem:[%s10 + $0x128] sm:$0xff]
        %v2522 = vld [vmem:[%s10 + $0x130] sm:$0xff]
        %v2523 = vld [vmem:[%s10 + $0x138] sm:$0xff]
        %v2524 = vld [vmem:[%s10 + $0x140] sm:$0xff]
        %v2525 = vld [vmem:[%s10 + $0x148] sm:$0xff]
        %v2526 = vld [vmem:[%s10 + $0x150] sm:$0xff]
        %v2527 = vld [vmem:[%s10 + $0x158] sm:$0xff]
        %v2528 = vld [vmem:[%s10 + $0x160] sm:$0xff]
        %v2529 = vld [vmem:[%s10 + $0x168] sm:$0xff]
        %v2530 = vld [vmem:[%s10 + $0x170] sm:$0xff]
        %v2531 = vld [vmem:[%s10 + $0x178] sm:$0xff]
        %v2532 = vld [vmem:[#allocation10] sm:$0x3]
        %v2534 = vlaneseq
        %v2535 = vshrl.u32 %v2534, 7
        %v2536 = vsub.s32 0, %v2535
        %v2537 = vrot.slane %v2532, %v2536
        %v2538 = vlaneseq
        %v2539 = vshrl.u32 %v2538, 7
        %v2540 = vsub.s32 1, %v2539
        %v2541 = vrot.slane %v2532, %v2540
        %v2592 = vunpack.c.l.b16 %v2484
        %v2593 = vunpack.c.h.b16 %v2484
        %v2594 = vunpack.c.l.b16 %v2485
        %v2595 = vunpack.c.h.b16 %v2485
        %v2596 = vunpack.c.l.b16 %v2486
        %v2597 = vunpack.c.h.b16 %v2486
        %v2598 = vunpack.c.l.b16 %v2487
        %v2599 = vunpack.c.h.b16 %v2487
        %v2600 = vunpack.c.l.b16 %v2488
        %v2601 = vunpack.c.h.b16 %v2488
        %v2602 = vunpack.c.l.b16 %v2489
        %v2603 = vunpack.c.h.b16 %v2489
        %v2604 = vunpack.c.l.b16 %v2490
        %v2605 = vunpack.c.h.b16 %v2490
        %v2606 = vunpack.c.l.b16 %v2491
        %v2607 = vunpack.c.h.b16 %v2491
        %v2608 = vunpack.c.l.b16 %v2492
        %v2609 = vunpack.c.h.b16 %v2492
        %v2610 = vunpack.c.l.b16 %v2493
        %v2611 = vunpack.c.h.b16 %v2493
        %v2612 = vunpack.c.l.b16 %v2494
        %v2613 = vunpack.c.h.b16 %v2494
        %v2614 = vunpack.c.l.b16 %v2495
        %v2615 = vunpack.c.h.b16 %v2495
        %v2616 = vunpack.c.l.b16 %v2496
        %v2617 = vunpack.c.h.b16 %v2496
        %v2618 = vunpack.c.l.b16 %v2497
        %v2619 = vunpack.c.h.b16 %v2497
        %v2620 = vunpack.c.l.b16 %v2498
        %v2621 = vunpack.c.h.b16 %v2498
        %v2622 = vunpack.c.l.b16 %v2499
        %v2623 = vunpack.c.h.b16 %v2499
        %v2624 = vunpack.c.l.b16 %v2500
        %v2625 = vunpack.c.h.b16 %v2500
        %v2626 = vunpack.c.l.b16 %v2501
        %v2627 = vunpack.c.h.b16 %v2501
        %v2628 = vunpack.c.l.b16 %v2502
        %v2629 = vunpack.c.h.b16 %v2502
        %v2630 = vunpack.c.l.b16 %v2503
        %v2631 = vunpack.c.h.b16 %v2503
        %v2632 = vunpack.c.l.b16 %v2504
        %v2633 = vunpack.c.h.b16 %v2504
        %v2634 = vunpack.c.l.b16 %v2505
        %v2635 = vunpack.c.h.b16 %v2505
        %v2636 = vunpack.c.l.b16 %v2506
        %v2637 = vunpack.c.h.b16 %v2506
        %v2638 = vunpack.c.l.b16 %v2507
        %v2639 = vunpack.c.h.b16 %v2507
        %v2640 = vunpack.c.l.b16 %v2508
        %v2641 = vunpack.c.h.b16 %v2508
        %v2642 = vunpack.c.l.b16 %v2509
        %v2643 = vunpack.c.h.b16 %v2509
        %v2644 = vunpack.c.l.b16 %v2510
        %v2645 = vunpack.c.h.b16 %v2510
        %v2646 = vunpack.c.l.b16 %v2511
        %v2647 = vunpack.c.h.b16 %v2511
        %v2648 = vunpack.c.l.b16 %v2512
        %v2649 = vunpack.c.h.b16 %v2512
        %v2650 = vunpack.c.l.b16 %v2513
        %v2651 = vunpack.c.h.b16 %v2513
        %v2652 = vunpack.c.l.b16 %v2514
        %v2653 = vunpack.c.h.b16 %v2514
        %v2654 = vunpack.c.l.b16 %v2515
        %v2655 = vunpack.c.h.b16 %v2515
        %v2656 = vunpack.c.l.b16 %v2516
        %v2657 = vunpack.c.h.b16 %v2516
        %v2658 = vunpack.c.l.b16 %v2517
        %v2659 = vunpack.c.h.b16 %v2517
        %v2660 = vunpack.c.l.b16 %v2518
        %v2661 = vunpack.c.h.b16 %v2518
        %v2662 = vunpack.c.l.b16 %v2519
        %v2663 = vunpack.c.h.b16 %v2519
        %v2664 = vunpack.c.l.b16 %v2520
        %v2665 = vunpack.c.h.b16 %v2520
        %v2666 = vunpack.c.l.b16 %v2521
        %v2667 = vunpack.c.h.b16 %v2521
        %v2668 = vunpack.c.l.b16 %v2522
        %v2669 = vunpack.c.h.b16 %v2522
        %v2670 = vunpack.c.l.b16 %v2523
        %v2671 = vunpack.c.h.b16 %v2523
        %v2672 = vunpack.c.l.b16 %v2524
        %v2673 = vunpack.c.h.b16 %v2524
        %v2674 = vunpack.c.l.b16 %v2525
        %v2675 = vunpack.c.h.b16 %v2525
        %v2676 = vunpack.c.l.b16 %v2526
        %v2677 = vunpack.c.h.b16 %v2526
        %v2678 = vunpack.c.l.b16 %v2527
        %v2679 = vunpack.c.h.b16 %v2527
        %v2680 = vunpack.c.l.b16 %v2528
        %v2681 = vunpack.c.h.b16 %v2528
        %v2682 = vunpack.c.l.b16 %v2529
        %v2683 = vunpack.c.h.b16 %v2529
        %v2684 = vunpack.c.l.b16 %v2530
        %v2685 = vunpack.c.h.b16 %v2530
        %v2686 = vunpack.c.l.b16 %v2531
        %v2687 = vunpack.c.h.b16 %v2531
        %v2688 = vpack.c.b16 %v2594, %v2592
        %v2689 = vpack.c.b16 %v2595, %v2593
        %v2690 = vpack.c.b16 %v2598, %v2596
        %v2691 = vpack.c.b16 %v2599, %v2597
        %v2692 = vpack.c.b16 %v2602, %v2600
        %v2693 = vpack.c.b16 %v2603, %v2601
        %v2694 = vpack.c.b16 %v2606, %v2604
        %v2695 = vpack.c.b16 %v2607, %v2605
        %v2696 = vpack.c.b16 %v2610, %v2608
        %v2697 = vpack.c.b16 %v2611, %v2609
        %v2698 = vpack.c.b16 %v2614, %v2612
        %v2699 = vpack.c.b16 %v2615, %v2613
        %v2700 = vpack.c.b16 %v2618, %v2616
        %v2701 = vpack.c.b16 %v2619, %v2617
        %v2702 = vpack.c.b16 %v2622, %v2620
        %v2703 = vpack.c.b16 %v2623, %v2621
        %v2704 = vpack.c.b16 %v2626, %v2624
        %v2705 = vpack.c.b16 %v2627, %v2625
        %v2706 = vpack.c.b16 %v2630, %v2628
        %v2707 = vpack.c.b16 %v2631, %v2629
        %v2708 = vpack.c.b16 %v2634, %v2632
        %v2709 = vpack.c.b16 %v2635, %v2633
        %v2710 = vpack.c.b16 %v2638, %v2636
        %v2711 = vpack.c.b16 %v2639, %v2637
        %v2712 = vpack.c.b16 %v2642, %v2640
        %v2713 = vpack.c.b16 %v2643, %v2641
        %v2714 = vpack.c.b16 %v2646, %v2644
        %v2715 = vpack.c.b16 %v2647, %v2645
        %v2716 = vpack.c.b16 %v2650, %v2648
        %v2717 = vpack.c.b16 %v2651, %v2649
        %v2718 = vpack.c.b16 %v2654, %v2652
        %v2719 = vpack.c.b16 %v2655, %v2653
        %v2720 = vpack.c.b16 %v2658, %v2656
        %v2721 = vpack.c.b16 %v2659, %v2657
        %v2722 = vpack.c.b16 %v2662, %v2660
        %v2723 = vpack.c.b16 %v2663, %v2661
        %v2724 = vpack.c.b16 %v2666, %v2664
        %v2725 = vpack.c.b16 %v2667, %v2665
        %v2726 = vpack.c.b16 %v2670, %v2668
        %v2727 = vpack.c.b16 %v2671, %v2669
        %v2728 = vpack.c.b16 %v2674, %v2672
        %v2729 = vpack.c.b16 %v2675, %v2673
        %v2730 = vpack.c.b16 %v2678, %v2676
        %v2731 = vpack.c.b16 %v2679, %v2677
        %v2732 = vpack.c.b16 %v2682, %v2680
        %v2733 = vpack.c.b16 %v2683, %v2681
        %v2734 = vpack.c.b16 %v2686, %v2684
        %v2735 = vpack.c.b16 %v2687, %v2685
        %2784 = vmatprep.subr.bf16.mxu0 %v2689
        %2785 = vmatpush1.bf16.msra.mxu0 %v2688
        %2786 = vmatprep.subr.bf16.mxu0 %v2691
        %2787 = vmatpush1.bf16.msra.mxu0 %v2690
        %2788 = vmatprep.subr.bf16.mxu0 %v2693
        %2789 = vmatpush1.bf16.msra.mxu0 %v2692
        %2790 = vmatprep.subr.bf16.mxu0 %v2695
        %2791 = vmatpush1.bf16.msra.mxu0 %v2694
        %2792 = vmatprep.subr.bf16.mxu0 %v2697
        %2793 = vmatpush1.bf16.msra.mxu0 %v2696
        %2794 = vmatprep.subr.bf16.mxu0 %v2699
        %2795 = vmatpush1.bf16.msra.mxu0 %v2698
        %2796 = vmatprep.subr.bf16.mxu0 %v2701
        %2797 = vmatpush1.bf16.msra.mxu0 %v2700
        %2798 = vmatprep.subr.bf16.mxu0 %v2703
        %2799 = vmatpush1.bf16.msra.mxu0 %v2702
        %2800 = vmatprep.subr.bf16.mxu0 %v2705
        %2801 = vmatpush1.bf16.msra.mxu0 %v2704
        %2802 = vmatprep.subr.bf16.mxu0 %v2707
        %2803 = vmatpush1.bf16.msra.mxu0 %v2706
        %2804 = vmatprep.subr.bf16.mxu0 %v2709
        %2805 = vmatpush1.bf16.msra.mxu0 %v2708
        %2806 = vmatprep.subr.bf16.mxu0 %v2711
        %2807 = vmatpush1.bf16.msra.mxu0 %v2710
        %2808 = vmatprep.subr.bf16.mxu0 %v2713
        %2809 = vmatpush1.bf16.msra.mxu0 %v2712
        %2810 = vmatprep.subr.bf16.mxu0 %v2715
        %2811 = vmatpush1.bf16.msra.mxu0 %v2714
        %2812 = vmatprep.subr.bf16.mxu0 %v2717
        %2813 = vmatpush1.bf16.msra.mxu0 %v2716
        %2814 = vmatprep.subr.bf16.mxu0 %v2719
        %2815 = vmatpush1.bf16.msra.mxu0 %v2718
        %2816 = vmatprep.mubr.bf16.mxu0 %v2473
        %2817 = vmatmul.mubr.bf16.gmra.mrb[0].mxu0 %v2472
        %v2818 = vpop.f32.mrb[0].mxu0
        %v2819 = vadd.f32 %v2537, %v2818
        %v2820 = vpop.f32.mrb[0].mxu0
        %v2821 = vadd.f32 %v2541, %v2820
        %v2822 = vpop.f32.mrb[0].mxu0
        %v2823 = vadd.f32 %v2537, %v2822
        %v2824 = vpop.f32.mrb[0].mxu0
        %v2825 = vadd.f32 %v2541, %v2824
        %2826 = vmatprep.mubr.bf16.mxu0 %v2476
        %2827 = vmatmul.mubr.bf16.gmra.mrb[0].mxu0 %v2475
        %v2828 = vpop.f32.mrb[0].mxu0
        %v2829 = vadd.f32 %v2537, %v2828
        %v2830 = vpop.f32.mrb[0].mxu0
        %v2831 = vadd.f32 %v2541, %v2830
        %v2832 = vpop.f32.mrb[0].mxu0
        %v2833 = vadd.f32 %v2537, %v2832
        %v2834 = vpop.f32.mrb[0].mxu0
        %v2835 = vadd.f32 %v2541, %v2834
        %2836 = vmatprep.mubr.bf16.mxu0 %v2479
        %2837 = vmatmul.mubr.bf16.gmra.mrb[0].mxu0 %v2478
        %v2838 = vpop.f32.mrb[0].mxu0
        %v2839 = vadd.f32 %v2537, %v2838
        %v2840 = vpop.f32.mrb[0].mxu0
        %v2841 = vadd.f32 %v2541, %v2840
        %v2842 = vpop.f32.mrb[0].mxu0
        %v2843 = vadd.f32 %v2537, %v2842
        %v2844 = vpop.f32.mrb[0].mxu0
        %v2845 = vadd.f32 %v2541, %v2844
        %2846 = vmatprep.mubr.bf16.mxu0 %v2482
        %2847 = vmatmul.mubr.bf16.gmra.mrb[0].mxu0 %v2481
        %v2848 = vpop.f32.mrb[0].mxu0
        %v2849 = vadd.f32 %v2537, %v2848
        %v2850 = vpop.f32.mrb[0].mxu0
        %v2851 = vadd.f32 %v2541, %v2850
        %v2852 = vpop.f32.mrb[0].mxu0
        %v2853 = vadd.f32 %v2537, %v2852
        %v2854 = vpop.f32.mrb[0].mxu0
        %v2855 = vadd.f32 %v2541, %v2854
        %2856 = vdwg.mxu0
        %2857 = vmatprep.subr.bf16.mxu0 %v2721
        %2858 = vmatpush1.bf16.msra.mxu0 %v2720
        %2859 = vmatprep.subr.bf16.mxu0 %v2723
        %2860 = vmatpush1.bf16.msra.mxu0 %v2722
        %2861 = vmatprep.subr.bf16.mxu0 %v2725
        %2862 = vmatpush1.bf16.msra.mxu0 %v2724
        %2863 = vmatprep.subr.bf16.mxu0 %v2727
        %2864 = vmatpush1.bf16.msra.mxu0 %v2726
        %2865 = vmatprep.subr.bf16.mxu0 %v2729
        %2866 = vmatpush1.bf16.msra.mxu0 %v2728
        %2867 = vmatprep.subr.bf16.mxu0 %v2731
        %2868 = vmatpush1.bf16.msra.mxu0 %v2730
        %2869 = vmatprep.subr.bf16.mxu0 %v2733
        %2870 = vmatpush1.bf16.msra.mxu0 %v2732
        %2871 = vmatprep.subr.bf16.mxu0 %v2735
        %2872 = vmatpush1.bf16.msra.mxu0 %v2734
        %2873 = vmatprep.subr.bf16.mxu0 0
        %2874 = vmatpush1.bf16.msra.mxu0 0
        %2875 = vmatprep.subr.bf16.mxu0 0
        %2876 = vmatpush1.bf16.msra.mxu0 0
        %2877 = vmatprep.subr.bf16.mxu0 0
        %2878 = vmatpush1.bf16.msra.mxu0 0
        %2879 = vmatprep.subr.bf16.mxu0 0
        %2880 = vmatpush1.bf16.msra.mxu0 0
        %2881 = vmatprep.subr.bf16.mxu0 0
        %2882 = vmatpush1.bf16.msra.mxu0 0
        %2883 = vmatprep.subr.bf16.mxu0 0
        %2884 = vmatpush1.bf16.msra.mxu0 0
        %2885 = vmatprep.subr.bf16.mxu0 0
        %2886 = vmatpush1.bf16.msra.mxu0 0
        %2887 = vmatprep.subr.bf16.mxu0 0
        %2888 = vmatpush1.bf16.msra.mxu0 0
        %2889 = vmatprep.mubr.bf16.mxu0 0
        %2890 = vmatmul.mubr.bf16.gmra.mrb[0].mxu0 %v2474
        %v2891 = vpop.f32.mrb[0].mxu0
        %v2892 = vadd.f32 %v2819, %v2891
        %v2893 = vpop.f32.mrb[0].mxu0
        %v2894 = vadd.f32 %v2821, %v2893
        %v2895 = vpop.f32.mrb[0].mxu0
        %v2896 = vadd.f32 %v2823, %v2895
        %v2897 = vpop.f32.mrb[0].mxu0
        %v2898 = vadd.f32 %v2825, %v2897
        %2899 = vmatprep.mubr.bf16.mxu0 0
        %2900 = vmatmul.mubr.bf16.gmra.mrb[0].mxu0 %v2477
        %v2901 = vpop.f32.mrb[0].mxu0
        %v2902 = vadd.f32 %v2829, %v2901
        %v2903 = vpop.f32.mrb[0].mxu0
        %v2904 = vadd.f32 %v2831, %v2903
        %v2905 = vpop.f32.mrb[0].mxu0
        %v2906 = vadd.f32 %v2833, %v2905
        %v2907 = vpop.f32.mrb[0].mxu0
        %v2908 = vadd.f32 %v2835, %v2907
        %2909 = vmatprep.mubr.bf16.mxu0 0
        %2910 = vmatmul.mubr.bf16.gmra.mrb[0].mxu0 %v2480
        %v2911 = vpop.f32.mrb[0].mxu0
        %v2912 = vadd.f32 %v2839, %v2911
        %v2913 = vpop.f32.mrb[0].mxu0
        %v2914 = vadd.f32 %v2841, %v2913
        %v2915 = vpop.f32.mrb[0].mxu0
        %v2916 = vadd.f32 %v2843, %v2915
        %v2917 = vpop.f32.mrb[0].mxu0
        %v2918 = vadd.f32 %v2845, %v2917
        %2919 = vmatprep.mubr.bf16.mxu0 0
        %2920 = vmatmul.mubr.bf16.gmra.mrb[0].mxu0 %v2483
        %v2921 = vpop.f32.mrb[0].mxu0
        %v2922 = vadd.f32 %v2849, %v2921
        %v2923 = vpop.f32.mrb[0].mxu0
        %v2924 = vadd.f32 %v2851, %v2923
        %v2925 = vpop.f32.mrb[0].mxu0
        %v2926 = vadd.f32 %v2853, %v2925
        %v2927 = vpop.f32.mrb[0].mxu0
        %v2928 = vadd.f32 %v2855, %v2927
        %2929 = vdwg.mxu0
        %v2930 = vmax.f32 %v2892, 0.0
        %v2931 = vmax.f32 %v2894, 0.0
        %v2932 = vmax.f32 %v2896, 0.0
        %v2933 = vmax.f32 %v2898, 0.0
        %v2934 = vmax.f32 %v2902, 0.0
        %v2935 = vmax.f32 %v2904, 0.0
        %v2936 = vmax.f32 %v2906, 0.0
        %v2937 = vmax.f32 %v2908, 0.0
        %v2938 = vmax.f32 %v2912, 0.0
        %v2939 = vmax.f32 %v2914, 0.0
        %v2940 = vmax.f32 %v2916, 0.0
        %v2941 = vmax.f32 %v2918, 0.0
        %v2942 = vmax.f32 %v2922, 0.0
        %v2943 = vmax.f32 %v2924, 0.0
        %v2944 = vmax.f32 %v2926, 0.0
        %v2945 = vmax.f32 %v2928, 0.0
        %v2946 = vrot.slane %v2930, 7
        %v2947 = vrot.slane %v2931, 7
        %v2948 = vrot.slane %v2932, 7
        %v2949 = vrot.slane %v2933, 7
        %v2950 = vrot.slane %v2934, 7
        %v2951 = vrot.slane %v2935, 7
        %v2952 = vrot.slane %v2936, 7
        %v2953 = vrot.slane %v2937, 7
        %v2954 = vrot.slane %v2938, 7
        %v2955 = vrot.slane %v2939, 7
        %v2956 = vrot.slane %v2940, 7
        %v2957 = vrot.slane %v2941, 7
        %v2958 = vrot.slane %v2942, 7
        %v2959 = vrot.slane %v2943, 7
        %v2960 = vrot.slane %v2944, 7
        %v2961 = vrot.slane %v2945, 7
        %v2962 = vsel %vm655, %v2958, %v2960
        %v2963 = vsel %vm655, %v2959, %v2961
        %v2964 = vsel %vm655, %v2956, %v2958
        %v2965 = vsel %vm655, %v2957, %v2959
        %v2966 = vsel %vm655, %v2954, %v2956
        %v2967 = vsel %vm655, %v2955, %v2957
        %v2968 = vsel %vm655, %v2952, %v2954
        %v2969 = vsel %vm655, %v2953, %v2955
        %v2970 = vsel %vm655, %v2950, %v2952
        %v2971 = vsel %vm655, %v2951, %v2953
        %v2972 = vsel %vm655, %v2948, %v2950
        %v2973 = vsel %vm655, %v2949, %v2951
        %v2974 = vsel %vm655, %v2946, %v2948
        %v2975 = vsel %vm655, %v2947, %v2949
        %v2976 = vsel %vm655, %v2960, %v2946
        %v2977 = vsel %vm655, %v2961, %v2947
        %v2978 = vsel %vm2416, %v2976, 0.0
        %v2979 = vsel %vm2416, %v2977, 0.0
        %v2980 = vsel %vm2417, %v2974, 0.0
        %v2981 = vsel %vm2417, %v2975, 0.0
        %v2982 = vsel %vm2418, %v2972, 0.0
        %v2983 = vsel %vm2418, %v2973, 0.0
        %v2984 = vsel %vm2419, %v2970, 0.0
        %v2985 = vsel %vm2419, %v2971, 0.0
        %v2986 = vsel %vm2420, %v2968, 0.0
        %v2987 = vsel %vm2420, %v2969, 0.0
        %v2988 = vsel %vm2421, %v2966, 0.0
        %v2989 = vsel %vm2421, %v2967, 0.0
        %v2990 = vsel %vm2422, %v2964, 0.0
        %v2991 = vsel %vm2422, %v2965, 0.0
        %v2992 = vsel %vm2423, %v2962, 0.0
        %v2993 = vsel %vm2423, %v2963, 0.0
        %v2994 = vrot.slane %v2930, 1
        %v2995 = vrot.slane %v2931, 1
        %v2996 = vrot.slane %v2932, 1
        %v2997 = vrot.slane %v2933, 1
        %v2998 = vrot.slane %v2934, 1
        %v2999 = vrot.slane %v2935, 1
        %v3000 = vrot.slane %v2936, 1
        %v3001 = vrot.slane %v2937, 1
        %v3002 = vrot.slane %v2938, 1
        %v3003 = vrot.slane %v2939, 1
        %v3004 = vrot.slane %v2940, 1
        %v3005 = vrot.slane %v2941, 1
        %v3006 = vrot.slane %v2942, 1
        %v3007 = vrot.slane %v2943, 1
        %v3008 = vrot.slane %v2944, 1
        %v3009 = vrot.slane %v2945, 1
        %v3010 = vsel %vm666, %v3006, %v3008
        %v3011 = vsel %vm666, %v3007, %v3009
        %v3012 = vsel %vm666, %v3004, %v3006
        %v3013 = vsel %vm666, %v3005, %v3007
        %v3014 = vsel %vm666, %v3002, %v3004
        %v3015 = vsel %vm666, %v3003, %v3005
        %v3016 = vsel %vm666, %v3000, %v3002
        %v3017 = vsel %vm666, %v3001, %v3003
        %v3018 = vsel %vm666, %v2998, %v3000
        %v3019 = vsel %vm666, %v2999, %v3001
        %v3020 = vsel %vm666, %v2996, %v2998
        %v3021 = vsel %vm666, %v2997, %v2999
        %v3022 = vsel %vm666, %v2994, %v2996
        %v3023 = vsel %vm666, %v2995, %v2997
        %v3024 = vsel %vm666, %v3008, %v2994
        %v3025 = vsel %vm666, %v3009, %v2995
        %v3026 = vsel %vm2456, %v3022, 0.0
        %v3027 = vsel %vm2456, %v3023, 0.0
        %v3028 = vsel %vm2457, %v3020, 0.0
        %v3029 = vsel %vm2457, %v3021, 0.0
        %v3030 = vsel %vm2458, %v3018, 0.0
        %v3031 = vsel %vm2458, %v3019, 0.0
        %v3032 = vsel %vm2459, %v3016, 0.0
        %v3033 = vsel %vm2459, %v3017, 0.0
        %v3034 = vsel %vm2460, %v3014, 0.0
        %v3035 = vsel %vm2460, %v3015, 0.0
        %v3036 = vsel %vm2461, %v3012, 0.0
        %v3037 = vsel %vm2461, %v3013, 0.0
        %v3038 = vsel %vm2462, %v3010, 0.0
        %v3039 = vsel %vm2462, %v3011, 0.0
        %v3040 = vsel %vm2463, %v3024, 0.0
        %v3041 = vsel %vm2463, %v3025, 0.0
        %v3042 = vpack.c.bf16 %v2980, %v2978
        %v3043 = vpack.c.bf16 %v2981, %v2979
        %v3044 = vpack.c.bf16 %v2932, %v2930
        %v3045 = vpack.c.bf16 %v2933, %v2931
        %v3046 = vpack.c.bf16 %v3028, %v3026
        %v3047 = vpack.c.bf16 %v3029, %v3027
        %v3048 = vpack.c.bf16 %v2984, %v2982
        %v3049 = vpack.c.bf16 %v2985, %v2983
        %v3050 = vpack.c.bf16 %v2936, %v2934
        %v3051 = vpack.c.bf16 %v2937, %v2935
        %v3052 = vpack.c.bf16 %v3032, %v3030
        %v3053 = vpack.c.bf16 %v3033, %v3031
        %v3054 = vpack.c.bf16 %v2988, %v2986
        %v3055 = vpack.c.bf16 %v2989, %v2987
        %v3056 = vpack.c.bf16 %v2940, %v2938
        %v3057 = vpack.c.bf16 %v2941, %v2939
        %v3058 = vpack.c.bf16 %v3036, %v3034
        %v3059 = vpack.c.bf16 %v3037, %v3035
        %v3060 = vpack.c.bf16 %v2992, %v2990
        %v3061 = vpack.c.bf16 %v2993, %v2991
        %v3062 = vpack.c.bf16 %v2944, %v2942
        %v3063 = vpack.c.bf16 %v2945, %v2943
        %v3064 = vpack.c.bf16 %v3040, %v3038
        %v3065 = vpack.c.bf16 %v3041, %v3039
        %v3066 = vld [vmem:[#allocation8] sm:$0xff]
        %v3067 = vld [vmem:[#allocation8 + $0x8] sm:$0xff]
        %v3068 = vld [vmem:[#allocation8 + $0x10] sm:$0xff]
        %v3069 = vld [vmem:[#allocation8 + $0x18] sm:$0xff]
        %v3070 = vld [vmem:[#allocation8 + $0x20] sm:$0xff]
        %v3071 = vld [vmem:[#allocation8 + $0x28] sm:$0xff]
        %v3072 = vld [vmem:[#allocation8 + $0x30] sm:$0xff]
        %v3073 = vld [vmem:[#allocation8 + $0x38] sm:$0xff]
        %v3074 = vld [vmem:[#allocation8 + $0x40] sm:$0xff]
        %v3075 = vld [vmem:[#allocation8 + $0x48] sm:$0xff]
        %v3076 = vld [vmem:[#allocation8 + $0x50] sm:$0xff]
        %v3077 = vld [vmem:[#allocation8 + $0x58] sm:$0xff]
        %v3078 = vld [vmem:[#allocation8 + $0x60] sm:$0xff]
        %v3079 = vld [vmem:[#allocation8 + $0x68] sm:$0xff]
        %v3080 = vld [vmem:[#allocation8 + $0x70] sm:$0xff]
        %v3081 = vld [vmem:[#allocation8 + $0x78] sm:$0xff]
        %v3082 = vld [vmem:[#allocation8 + $0x80] sm:$0xff]
        %v3083 = vld [vmem:[#allocation8 + $0x88] sm:$0xff]
        %v3084 = vld [vmem:[#allocation8 + $0x90] sm:$0xff]
        %v3085 = vld [vmem:[#allocation8 + $0x98] sm:$0xff]
        %v3086 = vld [vmem:[#allocation8 + $0xa0] sm:$0xff]
        %v3087 = vld [vmem:[#allocation8 + $0xa8] sm:$0xff]
        %v3088 = vld [vmem:[#allocation8 + $0xb0] sm:$0xff]
        %v3089 = vld [vmem:[#allocation8 + $0xb8] sm:$0xff]
        %v3090 = vld [vmem:[#allocation8 + $0xc0] sm:$0xff]
        %v3091 = vld [vmem:[#allocation8 + $0xc8] sm:$0xff]
        %v3092 = vld [vmem:[#allocation8 + $0xd0] sm:$0xff]
        %v3093 = vld [vmem:[#allocation8 + $0xd8] sm:$0xff]
        %v3094 = vld [vmem:[#allocation8 + $0xe0] sm:$0xff]
        %v3095 = vld [vmem:[#allocation8 + $0xe8] sm:$0xff]
        %v3096 = vld [vmem:[#allocation8 + $0xf0] sm:$0xff]
        %v3097 = vld [vmem:[#allocation8 + $0xf8] sm:$0xff]
        %v3098 = vld [vmem:[#allocation8 + $0x100] sm:$0xff]
        %v3099 = vld [vmem:[#allocation8 + $0x108] sm:$0xff]
        %v3100 = vld [vmem:[#allocation8 + $0x110] sm:$0xff]
        %v3101 = vld [vmem:[#allocation8 + $0x118] sm:$0xff]
        %v3102 = vld [vmem:[#allocation8 + $0x120] sm:$0xff]
        %v3103 = vld [vmem:[#allocation8 + $0x128] sm:$0xff]
        %v3104 = vld [vmem:[#allocation8 + $0x130] sm:$0xff]
        %v3105 = vld [vmem:[#allocation8 + $0x138] sm:$0xff]
        %v3106 = vld [vmem:[#allocation8 + $0x140] sm:$0xff]
        %v3107 = vld [vmem:[#allocation8 + $0x148] sm:$0xff]
        %v3108 = vld [vmem:[#allocation8 + $0x150] sm:$0xff]
        %v3109 = vld [vmem:[#allocation8 + $0x158] sm:$0xff]
        %v3110 = vld [vmem:[#allocation8 + $0x160] sm:$0xff]
        %v3111 = vld [vmem:[#allocation8 + $0x168] sm:$0xff]
        %v3112 = vld [vmem:[#allocation8 + $0x170] sm:$0xff]
        %v3113 = vld [vmem:[#allocation8 + $0x178] sm:$0xff]
        %v3114 = vld [vmem:[#allocation8 + $0x180] sm:$0xff]
        %v3115 = vld [vmem:[#allocation8 + $0x188] sm:$0xff]
        %v3116 = vld [vmem:[#allocation8 + $0x190] sm:$0xff]
        %v3117 = vld [vmem:[#allocation8 + $0x198] sm:$0xff]
        %v3118 = vld [vmem:[#allocation8 + $0x1a0] sm:$0xff]
        %v3119 = vld [vmem:[#allocation8 + $0x1a8] sm:$0xff]
        %v3120 = vld [vmem:[#allocation8 + $0x1b0] sm:$0xff]
        %v3121 = vld [vmem:[#allocation8 + $0x1b8] sm:$0xff]
        %v3122 = vld [vmem:[#allocation8 + $0x1c0] sm:$0xff]
        %v3123 = vld [vmem:[#allocation8 + $0x1c8] sm:$0xff]
        %v3124 = vld [vmem:[#allocation8 + $0x1d0] sm:$0xff]
        %v3125 = vld [vmem:[#allocation8 + $0x1d8] sm:$0xff]
        %v3126 = vld [vmem:[#allocation8 + $0x1e0] sm:$0xff]
        %v3127 = vld [vmem:[#allocation8 + $0x1e8] sm:$0xff]
        %v3128 = vld [vmem:[#allocation8 + $0x1f0] sm:$0xff]
        %v3129 = vld [vmem:[#allocation8 + $0x1f8] sm:$0xff]
        %v3130 = vld [vmem:[#allocation8 + $0x200] sm:$0xff]
        %v3131 = vld [vmem:[#allocation8 + $0x208] sm:$0xff]
        %v3132 = vld [vmem:[#allocation8 + $0x210] sm:$0xff]
        %v3133 = vld [vmem:[#allocation8 + $0x218] sm:$0xff]
        %v3134 = vld [vmem:[#allocation8 + $0x220] sm:$0xff]
        %v3135 = vld [vmem:[#allocation8 + $0x228] sm:$0xff]
        %v3136 = vld [vmem:[#allocation8 + $0x230] sm:$0xff]
        %v3137 = vld [vmem:[#allocation8 + $0x238] sm:$0xff]
        %v3138 = vld [vmem:[#allocation8 + $0x240] sm:$0xff]
        %v3139 = vld [vmem:[#allocation8 + $0x248] sm:$0xff]
        %v3140 = vld [vmem:[#allocation8 + $0x250] sm:$0xff]
        %v3141 = vld [vmem:[#allocation8 + $0x258] sm:$0xff]
        %v3142 = vld [vmem:[#allocation8 + $0x260] sm:$0xff]
        %v3143 = vld [vmem:[#allocation8 + $0x268] sm:$0xff]
        %v3144 = vld [vmem:[#allocation8 + $0x270] sm:$0xff]
        %v3145 = vld [vmem:[#allocation8 + $0x278] sm:$0xff]
        %v3146 = vld [vmem:[#allocation8 + $0x280] sm:$0xff]
        %v3147 = vld [vmem:[#allocation8 + $0x288] sm:$0xff]
        %v3148 = vld [vmem:[#allocation8 + $0x290] sm:$0xff]
        %v3149 = vld [vmem:[#allocation8 + $0x298] sm:$0xff]
        %v3150 = vld [vmem:[#allocation8 + $0x2a0] sm:$0xff]
        %v3151 = vld [vmem:[#allocation8 + $0x2a8] sm:$0xff]
        %v3152 = vld [vmem:[#allocation8 + $0x2b0] sm:$0xff]
        %v3153 = vld [vmem:[#allocation8 + $0x2b8] sm:$0xff]
        %v3154 = vld [vmem:[#allocation8 + $0x2c0] sm:$0xff]
        %v3155 = vld [vmem:[#allocation8 + $0x2c8] sm:$0xff]
        %v3156 = vld [vmem:[#allocation8 + $0x2d0] sm:$0xff]
        %v3157 = vld [vmem:[#allocation8 + $0x2d8] sm:$0xff]
        %v3158 = vld [vmem:[#allocation8 + $0x2e0] sm:$0xff]
        %v3159 = vld [vmem:[#allocation8 + $0x2e8] sm:$0xff]
        %v3160 = vld [vmem:[#allocation8 + $0x2f0] sm:$0xff]
        %v3161 = vld [vmem:[#allocation8 + $0x2f8] sm:$0xff]
        %s3162 = scalar_lea.vmem [#allocation10], 2
        %v3163 = vld [vmem:[%s3162] sm:$0x3]
        %v3165 = vlaneseq
        %v3166 = vshrl.u32 %v3165, 7
        %v3167 = vsub.s32 0, %v3166
        %v3168 = vrot.slane %v3163, %v3167
        %v3169 = vlaneseq
        %v3170 = vshrl.u32 %v3169, 7
        %v3171 = vsub.s32 1, %v3170
        %v3172 = vrot.slane %v3163, %v3171
        %v3271 = vunpack.c.l.b16 %v3066
        %v3272 = vunpack.c.h.b16 %v3066
        %v3273 = vunpack.c.l.b16 %v3067
        %v3274 = vunpack.c.h.b16 %v3067
        %v3275 = vunpack.c.l.b16 %v3068
        %v3276 = vunpack.c.h.b16 %v3068
        %v3277 = vunpack.c.l.b16 %v3069
        %v3278 = vunpack.c.h.b16 %v3069
        %v3279 = vunpack.c.l.b16 %v3070
        %v3280 = vunpack.c.h.b16 %v3070
        %v3281 = vunpack.c.l.b16 %v3071
        %v3282 = vunpack.c.h.b16 %v3071
        %v3283 = vunpack.c.l.b16 %v3072
        %v3284 = vunpack.c.h.b16 %v3072
        %v3285 = vunpack.c.l.b16 %v3073
        %v3286 = vunpack.c.h.b16 %v3073
        %v3287 = vunpack.c.l.b16 %v3074
        %v3288 = vunpack.c.h.b16 %v3074
        %v3289 = vunpack.c.l.b16 %v3075
        %v3290 = vunpack.c.h.b16 %v3075
        %v3291 = vunpack.c.l.b16 %v3076
        %v3292 = vunpack.c.h.b16 %v3076
        %v3293 = vunpack.c.l.b16 %v3077
        %v3294 = vunpack.c.h.b16 %v3077
        %v3295 = vunpack.c.l.b16 %v3078
        %v3296 = vunpack.c.h.b16 %v3078
        %v3297 = vunpack.c.l.b16 %v3079
        %v3298 = vunpack.c.h.b16 %v3079
        %v3299 = vunpack.c.l.b16 %v3080
        %v3300 = vunpack.c.h.b16 %v3080
        %v3301 = vunpack.c.l.b16 %v3081
        %v3302 = vunpack.c.h.b16 %v3081
        %v3303 = vunpack.c.l.b16 %v3082
        %v3304 = vunpack.c.h.b16 %v3082
        %v3305 = vunpack.c.l.b16 %v3083
        %v3306 = vunpack.c.h.b16 %v3083
        %v3307 = vunpack.c.l.b16 %v3084
        %v3308 = vunpack.c.h.b16 %v3084
        %v3309 = vunpack.c.l.b16 %v3085
        %v3310 = vunpack.c.h.b16 %v3085
        %v3311 = vunpack.c.l.b16 %v3086
        %v3312 = vunpack.c.h.b16 %v3086
        %v3313 = vunpack.c.l.b16 %v3087
        %v3314 = vunpack.c.h.b16 %v3087
        %v3315 = vunpack.c.l.b16 %v3088
        %v3316 = vunpack.c.h.b16 %v3088
        %v3317 = vunpack.c.l.b16 %v3089
        %v3318 = vunpack.c.h.b16 %v3089
        %v3319 = vunpack.c.l.b16 %v3090
        %v3320 = vunpack.c.h.b16 %v3090
        %v3321 = vunpack.c.l.b16 %v3091
        %v3322 = vunpack.c.h.b16 %v3091
        %v3323 = vunpack.c.l.b16 %v3092
        %v3324 = vunpack.c.h.b16 %v3092
        %v3325 = vunpack.c.l.b16 %v3093
        %v3326 = vunpack.c.h.b16 %v3093
        %v3327 = vunpack.c.l.b16 %v3094
        %v3328 = vunpack.c.h.b16 %v3094
        %v3329 = vunpack.c.l.b16 %v3095
        %v3330 = vunpack.c.h.b16 %v3095
        %v3331 = vunpack.c.l.b16 %v3096
        %v3332 = vunpack.c.h.b16 %v3096
        %v3333 = vunpack.c.l.b16 %v3097
        %v3334 = vunpack.c.h.b16 %v3097
        %v3335 = vunpack.c.l.b16 %v3098
        %v3336 = vunpack.c.h.b16 %v3098
        %v3337 = vunpack.c.l.b16 %v3099
        %v3338 = vunpack.c.h.b16 %v3099
        %v3339 = vunpack.c.l.b16 %v3100
        %v3340 = vunpack.c.h.b16 %v3100
        %v3341 = vunpack.c.l.b16 %v3101
        %v3342 = vunpack.c.h.b16 %v3101
        %v3343 = vunpack.c.l.b16 %v3102
        %v3344 = vunpack.c.h.b16 %v3102
        %v3345 = vunpack.c.l.b16 %v3103
        %v3346 = vunpack.c.h.b16 %v3103
        %v3347 = vunpack.c.l.b16 %v3104
        %v3348 = vunpack.c.h.b16 %v3104
        %v3349 = vunpack.c.l.b16 %v3105
        %v3350 = vunpack.c.h.b16 %v3105
        %v3351 = vunpack.c.l.b16 %v3106
        %v3352 = vunpack.c.h.b16 %v3106
        %v3353 = vunpack.c.l.b16 %v3107
        %v3354 = vunpack.c.h.b16 %v3107
        %v3355 = vunpack.c.l.b16 %v3108
        %v3356 = vunpack.c.h.b16 %v3108
        %v3357 = vunpack.c.l.b16 %v3109
        %v3358 = vunpack.c.h.b16 %v3109
        %v3359 = vunpack.c.l.b16 %v3110
        %v3360 = vunpack.c.h.b16 %v3110
        %v3361 = vunpack.c.l.b16 %v3111
        %v3362 = vunpack.c.h.b16 %v3111
        %v3363 = vunpack.c.l.b16 %v3112
        %v3364 = vunpack.c.h.b16 %v3112
        %v3365 = vunpack.c.l.b16 %v3113
        %v3366 = vunpack.c.h.b16 %v3113
        %v3367 = vunpack.c.l.b16 %v3114
        %v3368 = vunpack.c.h.b16 %v3114
        %v3369 = vunpack.c.l.b16 %v3115
        %v3370 = vunpack.c.h.b16 %v3115
        %v3371 = vunpack.c.l.b16 %v3116
        %v3372 = vunpack.c.h.b16 %v3116
        %v3373 = vunpack.c.l.b16 %v3117
        %v3374 = vunpack.c.h.b16 %v3117
        %v3375 = vunpack.c.l.b16 %v3118
        %v3376 = vunpack.c.h.b16 %v3118
        %v3377 = vunpack.c.l.b16 %v3119
        %v3378 = vunpack.c.h.b16 %v3119
        %v3379 = vunpack.c.l.b16 %v3120
        %v3380 = vunpack.c.h.b16 %v3120
        %v3381 = vunpack.c.l.b16 %v3121
        %v3382 = vunpack.c.h.b16 %v3121
        %v3383 = vunpack.c.l.b16 %v3122
        %v3384 = vunpack.c.h.b16 %v3122
        %v3385 = vunpack.c.l.b16 %v3123
        %v3386 = vunpack.c.h.b16 %v3123
        %v3387 = vunpack.c.l.b16 %v3124
        %v3388 = vunpack.c.h.b16 %v3124
        %v3389 = vunpack.c.l.b16 %v3125
        %v3390 = vunpack.c.h.b16 %v3125
        %v3391 = vunpack.c.l.b16 %v3126
        %v3392 = vunpack.c.h.b16 %v3126
        %v3393 = vunpack.c.l.b16 %v3127
        %v3394 = vunpack.c.h.b16 %v3127
        %v3395 = vunpack.c.l.b16 %v3128
        %v3396 = vunpack.c.h.b16 %v3128
        %v3397 = vunpack.c.l.b16 %v3129
        %v3398 = vunpack.c.h.b16 %v3129
        %v3399 = vunpack.c.l.b16 %v3130
        %v3400 = vunpack.c.h.b16 %v3130
        %v3401 = vunpack.c.l.b16 %v3131
        %v3402 = vunpack.c.h.b16 %v3131
        %v3403 = vunpack.c.l.b16 %v3132
        %v3404 = vunpack.c.h.b16 %v3132
        %v3405 = vunpack.c.l.b16 %v3133
        %v3406 = vunpack.c.h.b16 %v3133
        %v3407 = vunpack.c.l.b16 %v3134
        %v3408 = vunpack.c.h.b16 %v3134
        %v3409 = vunpack.c.l.b16 %v3135
        %v3410 = vunpack.c.h.b16 %v3135
        %v3411 = vunpack.c.l.b16 %v3136
        %v3412 = vunpack.c.h.b16 %v3136
        %v3413 = vunpack.c.l.b16 %v3137
        %v3414 = vunpack.c.h.b16 %v3137
        %v3415 = vunpack.c.l.b16 %v3138
        %v3416 = vunpack.c.h.b16 %v3138
        %v3417 = vunpack.c.l.b16 %v3139
        %v3418 = vunpack.c.h.b16 %v3139
        %v3419 = vunpack.c.l.b16 %v3140
        %v3420 = vunpack.c.h.b16 %v3140
        %v3421 = vunpack.c.l.b16 %v3141
        %v3422 = vunpack.c.h.b16 %v3141
        %v3423 = vunpack.c.l.b16 %v3142
        %v3424 = vunpack.c.h.b16 %v3142
        %v3425 = vunpack.c.l.b16 %v3143
        %v3426 = vunpack.c.h.b16 %v3143
        %v3427 = vunpack.c.l.b16 %v3144
        %v3428 = vunpack.c.h.b16 %v3144
        %v3429 = vunpack.c.l.b16 %v3145
        %v3430 = vunpack.c.h.b16 %v3145
        %v3431 = vunpack.c.l.b16 %v3146
        %v3432 = vunpack.c.h.b16 %v3146
        %v3433 = vunpack.c.l.b16 %v3147
        %v3434 = vunpack.c.h.b16 %v3147
        %v3435 = vunpack.c.l.b16 %v3148
        %v3436 = vunpack.c.h.b16 %v3148
        %v3437 = vunpack.c.l.b16 %v3149
        %v3438 = vunpack.c.h.b16 %v3149
        %v3439 = vunpack.c.l.b16 %v3150
        %v3440 = vunpack.c.h.b16 %v3150
        %v3441 = vunpack.c.l.b16 %v3151
        %v3442 = vunpack.c.h.b16 %v3151
        %v3443 = vunpack.c.l.b16 %v3152
        %v3444 = vunpack.c.h.b16 %v3152
        %v3445 = vunpack.c.l.b16 %v3153
        %v3446 = vunpack.c.h.b16 %v3153
        %v3447 = vunpack.c.l.b16 %v3154
        %v3448 = vunpack.c.h.b16 %v3154
        %v3449 = vunpack.c.l.b16 %v3155
        %v3450 = vunpack.c.h.b16 %v3155
        %v3451 = vunpack.c.l.b16 %v3156
        %v3452 = vunpack.c.h.b16 %v3156
        %v3453 = vunpack.c.l.b16 %v3157
        %v3454 = vunpack.c.h.b16 %v3157
        %v3455 = vunpack.c.l.b16 %v3158
        %v3456 = vunpack.c.h.b16 %v3158
        %v3457 = vunpack.c.l.b16 %v3159
        %v3458 = vunpack.c.h.b16 %v3159
        %v3459 = vunpack.c.l.b16 %v3160
        %v3460 = vunpack.c.h.b16 %v3160
        %v3461 = vunpack.c.l.b16 %v3161
        %v3462 = vunpack.c.h.b16 %v3161
        %v3463 = vpack.c.b16 %v3273, %v3271
        %v3464 = vpack.c.b16 %v3274, %v3272
        %v3465 = vpack.c.b16 %v3277, %v3275
        %v3466 = vpack.c.b16 %v3278, %v3276
        %v3467 = vpack.c.b16 %v3281, %v3279
        %v3468 = vpack.c.b16 %v3282, %v3280
        %v3469 = vpack.c.b16 %v3285, %v3283
        %v3470 = vpack.c.b16 %v3286, %v3284
        %v3471 = vpack.c.b16 %v3289, %v3287
        %v3472 = vpack.c.b16 %v3290, %v3288
        %v3473 = vpack.c.b16 %v3293, %v3291
        %v3474 = vpack.c.b16 %v3294, %v3292
        %v3475 = vpack.c.b16 %v3297, %v3295
        %v3476 = vpack.c.b16 %v3298, %v3296
        %v3477 = vpack.c.b16 %v3301, %v3299
        %v3478 = vpack.c.b16 %v3302, %v3300
        %v3479 = vpack.c.b16 %v3305, %v3303
        %v3480 = vpack.c.b16 %v3306, %v3304
        %v3481 = vpack.c.b16 %v3309, %v3307
        %v3482 = vpack.c.b16 %v3310, %v3308
        %v3483 = vpack.c.b16 %v3313, %v3311
        %v3484 = vpack.c.b16 %v3314, %v3312
        %v3485 = vpack.c.b16 %v3317, %v3315
        %v3486 = vpack.c.b16 %v3318, %v3316
        %v3487 = vpack.c.b16 %v3321, %v3319
        %v3488 = vpack.c.b16 %v3322, %v3320
        %v3489 = vpack.c.b16 %v3325, %v3323
        %v3490 = vpack.c.b16 %v3326, %v3324
        %v3491 = vpack.c.b16 %v3329, %v3327
        %v3492 = vpack.c.b16 %v3330, %v3328
        %v3493 = vpack.c.b16 %v3333, %v3331
        %v3494 = vpack.c.b16 %v3334, %v3332
        %v3495 = vpack.c.b16 %v3337, %v3335
        %v3496 = vpack.c.b16 %v3338, %v3336
        %v3497 = vpack.c.b16 %v3341, %v3339
        %v3498 = vpack.c.b16 %v3342, %v3340
        %v3499 = vpack.c.b16 %v3345, %v3343
        %v3500 = vpack.c.b16 %v3346, %v3344
        %v3501 = vpack.c.b16 %v3349, %v3347
        %v3502 = vpack.c.b16 %v3350, %v3348
        %v3503 = vpack.c.b16 %v3353, %v3351
        %v3504 = vpack.c.b16 %v3354, %v3352
        %v3505 = vpack.c.b16 %v3357, %v3355
        %v3506 = vpack.c.b16 %v3358, %v3356
        %v3507 = vpack.c.b16 %v3361, %v3359
        %v3508 = vpack.c.b16 %v3362, %v3360
        %v3509 = vpack.c.b16 %v3365, %v3363
        %v3510 = vpack.c.b16 %v3366, %v3364
        %v3511 = vpack.c.b16 %v3369, %v3367
        %v3512 = vpack.c.b16 %v3370, %v3368
        %v3513 = vpack.c.b16 %v3373, %v3371
        %v3514 = vpack.c.b16 %v3374, %v3372
        %v3515 = vpack.c.b16 %v3377, %v3375
        %v3516 = vpack.c.b16 %v3378, %v3376
        %v3517 = vpack.c.b16 %v3381, %v3379
        %v3518 = vpack.c.b16 %v3382, %v3380
        %v3519 = vpack.c.b16 %v3385, %v3383
        %v3520 = vpack.c.b16 %v3386, %v3384
        %v3521 = vpack.c.b16 %v3389, %v3387
        %v3522 = vpack.c.b16 %v3390, %v3388
        %v3523 = vpack.c.b16 %v3393, %v3391
        %v3524 = vpack.c.b16 %v3394, %v3392
        %v3525 = vpack.c.b16 %v3397, %v3395
        %v3526 = vpack.c.b16 %v3398, %v3396
        %v3527 = vpack.c.b16 %v3401, %v3399
        %v3528 = vpack.c.b16 %v3402, %v3400
        %v3529 = vpack.c.b16 %v3405, %v3403
        %v3530 = vpack.c.b16 %v3406, %v3404
        %v3531 = vpack.c.b16 %v3409, %v3407
        %v3532 = vpack.c.b16 %v3410, %v3408
        %v3533 = vpack.c.b16 %v3413, %v3411
        %v3534 = vpack.c.b16 %v3414, %v3412
        %v3535 = vpack.c.b16 %v3417, %v3415
        %v3536 = vpack.c.b16 %v3418, %v3416
        %v3537 = vpack.c.b16 %v3421, %v3419
        %v3538 = vpack.c.b16 %v3422, %v3420
        %v3539 = vpack.c.b16 %v3425, %v3423
        %v3540 = vpack.c.b16 %v3426, %v3424
        %v3541 = vpack.c.b16 %v3429, %v3427
        %v3542 = vpack.c.b16 %v3430, %v3428
        %v3543 = vpack.c.b16 %v3433, %v3431
        %v3544 = vpack.c.b16 %v3434, %v3432
        %v3545 = vpack.c.b16 %v3437, %v3435
        %v3546 = vpack.c.b16 %v3438, %v3436
        %v3547 = vpack.c.b16 %v3441, %v3439
        %v3548 = vpack.c.b16 %v3442, %v3440
        %v3549 = vpack.c.b16 %v3445, %v3443
        %v3550 = vpack.c.b16 %v3446, %v3444
        %v3551 = vpack.c.b16 %v3449, %v3447
        %v3552 = vpack.c.b16 %v3450, %v3448
        %v3553 = vpack.c.b16 %v3453, %v3451
        %v3554 = vpack.c.b16 %v3454, %v3452
        %v3555 = vpack.c.b16 %v3457, %v3455
        %v3556 = vpack.c.b16 %v3458, %v3456
        %v3557 = vpack.c.b16 %v3461, %v3459
        %v3558 = vpack.c.b16 %v3462, %v3460
        %3655 = vmatprep.subr.bf16.mxu0 %v3464
        %3656 = vmatpush1.bf16.msra.mxu0 %v3463
        %3657 = vmatprep.subr.bf16.mxu0 %v3466
        %3658 = vmatpush1.bf16.msra.mxu0 %v3465
        %3659 = vmatprep.subr.bf16.mxu0 %v3468
        %3660 = vmatpush1.bf16.msra.mxu0 %v3467
        %3661 = vmatprep.subr.bf16.mxu0 %v3470
        %3662 = vmatpush1.bf16.msra.mxu0 %v3469
        %3663 = vmatprep.subr.bf16.mxu0 %v3472
        %3664 = vmatpush1.bf16.msra.mxu0 %v3471
        %3665 = vmatprep.subr.bf16.mxu0 %v3474
        %3666 = vmatpush1.bf16.msra.mxu0 %v3473
        %3667 = vmatprep.subr.bf16.mxu0 %v3476
        %3668 = vmatpush1.bf16.msra.mxu0 %v3475
        %3669 = vmatprep.subr.bf16.mxu0 %v3478
        %3670 = vmatpush1.bf16.msra.mxu0 %v3477
        %3671 = vmatprep.subr.bf16.mxu0 %v3480
        %3672 = vmatpush1.bf16.msra.mxu0 %v3479
        %3673 = vmatprep.subr.bf16.mxu0 %v3482
        %3674 = vmatpush1.bf16.msra.mxu0 %v3481
        %3675 = vmatprep.subr.bf16.mxu0 %v3484
        %3676 = vmatpush1.bf16.msra.mxu0 %v3483
        %3677 = vmatprep.subr.bf16.mxu0 %v3486
        %3678 = vmatpush1.bf16.msra.mxu0 %v3485
        %3679 = vmatprep.subr.bf16.mxu0 %v3488
        %3680 = vmatpush1.bf16.msra.mxu0 %v3487
        %3681 = vmatprep.subr.bf16.mxu0 %v3490
        %3682 = vmatpush1.bf16.msra.mxu0 %v3489
        %3683 = vmatprep.subr.bf16.mxu0 %v3492
        %3684 = vmatpush1.bf16.msra.mxu0 %v3491
        %3685 = vmatprep.subr.bf16.mxu0 %v3494
        %3686 = vmatpush1.bf16.msra.mxu0 %v3493
        %3687 = vmatprep.mubr.bf16.mxu0 %v3043
        %3688 = vmatmul.mubr.bf16.gmra.mrb[0].mxu0 %v3042
        %v3689 = vpop.f32.mrb[0].mxu0
        %v3690 = vadd.f32 %v3168, %v3689
        %v3691 = vpop.f32.mrb[0].mxu0
        %v3692 = vadd.f32 %v3172, %v3691
        %v3693 = vpop.f32.mrb[0].mxu0
        %v3694 = vadd.f32 %v3168, %v3693
        %v3695 = vpop.f32.mrb[0].mxu0
        %v3696 = vadd.f32 %v3172, %v3695
        %3697 = vmatprep.mubr.bf16.mxu0 %v3049
        %3698 = vmatmul.mubr.bf16.gmra.mrb[0].mxu0 %v3048
        %v3699 = vpop.f32.mrb[0].mxu0
        %v3700 = vadd.f32 %v3168, %v3699
        %v3701 = vpop.f32.mrb[0].mxu0
        %v3702 = vadd.f32 %v3172, %v3701
        %v3703 = vpop.f32.mrb[0].mxu0
        %v3704 = vadd.f32 %v3168, %v3703
        %v3705 = vpop.f32.mrb[0].mxu0
        %v3706 = vadd.f32 %v3172, %v3705
        %3707 = vmatprep.mubr.bf16.mxu0 %v3055
        %3708 = vmatmul.mubr.bf16.gmra.mrb[0].mxu0 %v3054
        %v3709 = vpop.f32.mrb[0].mxu0
        %v3710 = vadd.f32 %v3168, %v3709
        %v3711 = vpop.f32.mrb[0].mxu0
        %v3712 = vadd.f32 %v3172, %v3711
        %v3713 = vpop.f32.mrb[0].mxu0
        %v3714 = vadd.f32 %v3168, %v3713
        %v3715 = vpop.f32.mrb[0].mxu0
        %v3716 = vadd.f32 %v3172, %v3715
        %3717 = vmatprep.mubr.bf16.mxu0 %v3061
        %3718 = vmatmul.mubr.bf16.gmra.mrb[0].mxu0 %v3060
        %v3719 = vpop.f32.mrb[0].mxu0
        %v3720 = vadd.f32 %v3168, %v3719
        %v3721 = vpop.f32.mrb[0].mxu0
        %v3722 = vadd.f32 %v3172, %v3721
        %v3723 = vpop.f32.mrb[0].mxu0
        %v3724 = vadd.f32 %v3168, %v3723
        %v3725 = vpop.f32.mrb[0].mxu0
        %v3726 = vadd.f32 %v3172, %v3725
        %3727 = vdwg.mxu0
        %3728 = vmatprep.subr.bf16.mxu0 %v3496
        %3729 = vmatpush1.bf16.msra.mxu0 %v3495
        %3730 = vmatprep.subr.bf16.mxu0 %v3498
        %3731 = vmatpush1.bf16.msra.mxu0 %v3497
        %3732 = vmatprep.subr.bf16.mxu0 %v3500
        %3733 = vmatpush1.bf16.msra.mxu0 %v3499
        %3734 = vmatprep.subr.bf16.mxu0 %v3502
        %3735 = vmatpush1.bf16.msra.mxu0 %v3501
        %3736 = vmatprep.subr.bf16.mxu0 %v3504
        %3737 = vmatpush1.bf16.msra.mxu0 %v3503
        %3738 = vmatprep.subr.bf16.mxu0 %v3506
        %3739 = vmatpush1.bf16.msra.mxu0 %v3505
        %3740 = vmatprep.subr.bf16.mxu0 %v3508
        %3741 = vmatpush1.bf16.msra.mxu0 %v3507
        %3742 = vmatprep.subr.bf16.mxu0 %v3510
        %3743 = vmatpush1.bf16.msra.mxu0 %v3509
        %3744 = vmatprep.subr.bf16.mxu0 %v3512
        %3745 = vmatpush1.bf16.msra.mxu0 %v3511
        %3746 = vmatprep.subr.bf16.mxu0 %v3514
        %3747 = vmatpush1.bf16.msra.mxu0 %v3513
        %3748 = vmatprep.subr.bf16.mxu0 %v3516
        %3749 = vmatpush1.bf16.msra.mxu0 %v3515
        %3750 = vmatprep.subr.bf16.mxu0 %v3518
        %3751 = vmatpush1.bf16.msra.mxu0 %v3517
        %3752 = vmatprep.subr.bf16.mxu0 %v3520
        %3753 = vmatpush1.bf16.msra.mxu0 %v3519
        %3754 = vmatprep.subr.bf16.mxu0 %v3522
        %3755 = vmatpush1.bf16.msra.mxu0 %v3521
        %3756 = vmatprep.subr.bf16.mxu0 %v3524
        %3757 = vmatpush1.bf16.msra.mxu0 %v3523
        %3758 = vmatprep.subr.bf16.mxu0 %v3526
        %3759 = vmatpush1.bf16.msra.mxu0 %v3525
        %3760 = vmatprep.mubr.bf16.mxu0 %v3045
        %3761 = vmatmul.mubr.bf16.gmra.mrb[0].mxu0 %v3044
        %v3762 = vpop.f32.mrb[0].mxu0
        %v3763 = vadd.f32 %v3690, %v3762
        %v3764 = vpop.f32.mrb[0].mxu0
        %v3765 = vadd.f32 %v3692, %v3764
        %v3766 = vpop.f32.mrb[0].mxu0
        %v3767 = vadd.f32 %v3694, %v3766
        %v3768 = vpop.f32.mrb[0].mxu0
        %v3769 = vadd.f32 %v3696, %v3768
        %3770 = vmatprep.mubr.bf16.mxu0 %v3051
        %3771 = vmatmul.mubr.bf16.gmra.mrb[0].mxu0 %v3050
        %v3772 = vpop.f32.mrb[0].mxu0
        %v3773 = vadd.f32 %v3700, %v3772
        %v3774 = vpop.f32.mrb[0].mxu0
        %v3775 = vadd.f32 %v3702, %v3774
        %v3776 = vpop.f32.mrb[0].mxu0
        %v3777 = vadd.f32 %v3704, %v3776
        %v3778 = vpop.f32.mrb[0].mxu0
        %v3779 = vadd.f32 %v3706, %v3778
        %3780 = vmatprep.mubr.bf16.mxu0 %v3057
        %3781 = vmatmul.mubr.bf16.gmra.mrb[0].mxu0 %v3056
        %v3782 = vpop.f32.mrb[0].mxu0
        %v3783 = vadd.f32 %v3710, %v3782
        %v3784 = vpop.f32.mrb[0].mxu0
        %v3785 = vadd.f32 %v3712, %v3784
        %v3786 = vpop.f32.mrb[0].mxu0
        %v3787 = vadd.f32 %v3714, %v3786
        %v3788 = vpop.f32.mrb[0].mxu0
        %v3789 = vadd.f32 %v3716, %v3788
        %3790 = vmatprep.mubr.bf16.mxu0 %v3063
        %3791 = vmatmul.mubr.bf16.gmra.mrb[0].mxu0 %v3062
        %v3792 = vpop.f32.mrb[0].mxu0
        %v3793 = vadd.f32 %v3720, %v3792
        %v3794 = vpop.f32.mrb[0].mxu0
        %v3795 = vadd.f32 %v3722, %v3794
        %v3796 = vpop.f32.mrb[0].mxu0
        %v3797 = vadd.f32 %v3724, %v3796
        %v3798 = vpop.f32.mrb[0].mxu0
        %v3799 = vadd.f32 %v3726, %v3798
        %3800 = vdwg.mxu0
        %3801 = vmatprep.subr.bf16.mxu0 %v3528
        %3802 = vmatpush1.bf16.msra.mxu0 %v3527
        %3803 = vmatprep.subr.bf16.mxu0 %v3530
        %3804 = vmatpush1.bf16.msra.mxu0 %v3529
        %3805 = vmatprep.subr.bf16.mxu0 %v3532
        %3806 = vmatpush1.bf16.msra.mxu0 %v3531
        %3807 = vmatprep.subr.bf16.mxu0 %v3534
        %3808 = vmatpush1.bf16.msra.mxu0 %v3533
        %3809 = vmatprep.subr.bf16.mxu0 %v3536
        %3810 = vmatpush1.bf16.msra.mxu0 %v3535
        %3811 = vmatprep.subr.bf16.mxu0 %v3538
        %3812 = vmatpush1.bf16.msra.mxu0 %v3537
        %3813 = vmatprep.subr.bf16.mxu0 %v3540
        %3814 = vmatpush1.bf16.msra.mxu0 %v3539
        %3815 = vmatprep.subr.bf16.mxu0 %v3542
        %3816 = vmatpush1.bf16.msra.mxu0 %v3541
        %3817 = vmatprep.subr.bf16.mxu0 %v3544
        %3818 = vmatpush1.bf16.msra.mxu0 %v3543
        %3819 = vmatprep.subr.bf16.mxu0 %v3546
        %3820 = vmatpush1.bf16.msra.mxu0 %v3545
        %3821 = vmatprep.subr.bf16.mxu0 %v3548
        %3822 = vmatpush1.bf16.msra.mxu0 %v3547
        %3823 = vmatprep.subr.bf16.mxu0 %v3550
        %3824 = vmatpush1.bf16.msra.mxu0 %v3549
        %3825 = vmatprep.subr.bf16.mxu0 %v3552
        %3826 = vmatpush1.bf16.msra.mxu0 %v3551
        %3827 = vmatprep.subr.bf16.mxu0 %v3554
        %3828 = vmatpush1.bf16.msra.mxu0 %v3553
        %3829 = vmatprep.subr.bf16.mxu0 %v3556
        %3830 = vmatpush1.bf16.msra.mxu0 %v3555
        %3831 = vmatprep.subr.bf16.mxu0 %v3558
        %3832 = vmatpush1.bf16.msra.mxu0 %v3557
        %3833 = vmatprep.mubr.bf16.mxu0 %v3047
        %3834 = vmatmul.mubr.bf16.gmra.mrb[0].mxu0 %v3046
        %v3835 = vpop.f32.mrb[0].mxu0
        %v3836 = vadd.f32 %v3763, %v3835
        %v3837 = vpop.f32.mrb[0].mxu0
        %v3838 = vadd.f32 %v3765, %v3837
        %v3839 = vpop.f32.mrb[0].mxu0
        %v3840 = vadd.f32 %v3767, %v3839
        %v3841 = vpop.f32.mrb[0].mxu0
        %v3842 = vadd.f32 %v3769, %v3841
        %3843 = vmatprep.mubr.bf16.mxu0 %v3053
        %3844 = vmatmul.mubr.bf16.gmra.mrb[0].mxu0 %v3052
        %v3845 = vpop.f32.mrb[0].mxu0
        %v3846 = vadd.f32 %v3773, %v3845
        %v3847 = vpop.f32.mrb[0].mxu0
        %v3848 = vadd.f32 %v3775, %v3847
        %v3849 = vpop.f32.mrb[0].mxu0
        %v3850 = vadd.f32 %v3777, %v3849
        %v3851 = vpop.f32.mrb[0].mxu0
        %v3852 = vadd.f32 %v3779, %v3851
        %3853 = vmatprep.mubr.bf16.mxu0 %v3059
        %3854 = vmatmul.mubr.bf16.gmra.mrb[0].mxu0 %v3058
        %v3855 = vpop.f32.mrb[0].mxu0
        %v3856 = vadd.f32 %v3783, %v3855
        %v3857 = vpop.f32.mrb[0].mxu0
        %v3858 = vadd.f32 %v3785, %v3857
        %v3859 = vpop.f32.mrb[0].mxu0
        %v3860 = vadd.f32 %v3787, %v3859
        %v3861 = vpop.f32.mrb[0].mxu0
        %v3862 = vadd.f32 %v3789, %v3861
        %3863 = vmatprep.mubr.bf16.mxu0 %v3065
        %3864 = vmatmul.mubr.bf16.gmra.mrb[0].mxu0 %v3064
        %v3865 = vpop.f32.mrb[0].mxu0
        %v3866 = vadd.f32 %v3793, %v3865
        %v3867 = vpop.f32.mrb[0].mxu0
        %v3868 = vadd.f32 %v3795, %v3867
        %v3869 = vpop.f32.mrb[0].mxu0
        %v3870 = vadd.f32 %v3797, %v3869
        %v3871 = vpop.f32.mrb[0].mxu0
        %v3872 = vadd.f32 %v3799, %v3871
        %3873 = vdwg.mxu0
        %v3874 = vmax.f32 %v3836, 0.0
        %v3875 = vmax.f32 %v3838, 0.0
        %v3876 = vmax.f32 %v3840, 0.0
        %v3877 = vmax.f32 %v3842, 0.0
        %v3878 = vmax.f32 %v3846, 0.0
        %v3879 = vmax.f32 %v3848, 0.0
        %v3880 = vmax.f32 %v3850, 0.0
        %v3881 = vmax.f32 %v3852, 0.0
        %v3882 = vmax.f32 %v3856, 0.0
        %v3883 = vmax.f32 %v3858, 0.0
        %v3884 = vmax.f32 %v3860, 0.0
        %v3885 = vmax.f32 %v3862, 0.0
        %v3886 = vmax.f32 %v3866, 0.0
        %v3887 = vmax.f32 %v3868, 0.0
        %v3888 = vmax.f32 %v3870, 0.0
        %v3889 = vmax.f32 %v3872, 0.0
        %v3890 = vrot.slane %v3874, 7
        %v3891 = vrot.slane %v3875, 7
        %v3892 = vrot.slane %v3876, 7
        %v3893 = vrot.slane %v3877, 7
        %v3894 = vrot.slane %v3878, 7
        %v3895 = vrot.slane %v3879, 7
        %v3896 = vrot.slane %v3880, 7
        %v3897 = vrot.slane %v3881, 7
        %v3898 = vrot.slane %v3882, 7
        %v3899 = vrot.slane %v3883, 7
        %v3900 = vrot.slane %v3884, 7
        %v3901 = vrot.slane %v3885, 7
        %v3902 = vrot.slane %v3886, 7
        %v3903 = vrot.slane %v3887, 7
        %v3904 = vrot.slane %v3888, 7
        %v3905 = vrot.slane %v3889, 7
        %v3906 = vsel %vm655, %v3902, %v3904
        %v3907 = vsel %vm655, %v3903, %v3905
        %v3908 = vsel %vm655, %v3900, %v3902
        %v3909 = vsel %vm655, %v3901, %v3903
        %v3910 = vsel %vm655, %v3898, %v3900
        %v3911 = vsel %vm655, %v3899, %v3901
        %v3912 = vsel %vm655, %v3896, %v3898
        %v3913 = vsel %vm655, %v3897, %v3899
        %v3914 = vsel %vm655, %v3894, %v3896
        %v3915 = vsel %vm655, %v3895, %v3897
        %v3916 = vsel %vm655, %v3892, %v3894
        %v3917 = vsel %vm655, %v3893, %v3895
        %v3918 = vsel %vm655, %v3890, %v3892
        %v3919 = vsel %vm655, %v3891, %v3893
        %v3920 = vsel %vm655, %v3904, %v3890
        %v3921 = vsel %vm655, %v3905, %v3891
        %v3922 = vsel %vm2416, %v3920, 0.0
        %v3923 = vsel %vm2416, %v3921, 0.0
        %v3924 = vsel %vm2417, %v3918, 0.0
        %v3925 = vsel %vm2417, %v3919, 0.0
        %v3926 = vsel %vm2418, %v3916, 0.0
        %v3927 = vsel %vm2418, %v3917, 0.0
        %v3928 = vsel %vm2419, %v3914, 0.0
        %v3929 = vsel %vm2419, %v3915, 0.0
        %v3930 = vsel %vm2420, %v3912, 0.0
        %v3931 = vsel %vm2420, %v3913, 0.0
        %v3932 = vsel %vm2421, %v3910, 0.0
        %v3933 = vsel %vm2421, %v3911, 0.0
        %v3934 = vsel %vm2422, %v3908, 0.0
        %v3935 = vsel %vm2422, %v3909, 0.0
        %v3936 = vsel %vm2423, %v3906, 0.0
        %v3937 = vsel %vm2423, %v3907, 0.0
        %v3938 = vrot.slane %v3874, 1
        %v3939 = vrot.slane %v3875, 1
        %v3940 = vrot.slane %v3876, 1
        %v3941 = vrot.slane %v3877, 1
        %v3942 = vrot.slane %v3878, 1
        %v3943 = vrot.slane %v3879, 1
        %v3944 = vrot.slane %v3880, 1
        %v3945 = vrot.slane %v3881, 1
        %v3946 = vrot.slane %v3882, 1
        %v3947 = vrot.slane %v3883, 1
        %v3948 = vrot.slane %v3884, 1
        %v3949 = vrot.slane %v3885, 1
        %v3950 = vrot.slane %v3886, 1
        %v3951 = vrot.slane %v3887, 1
        %v3952 = vrot.slane %v3888, 1
        %v3953 = vrot.slane %v3889, 1
        %v3954 = vsel %vm666, %v3950, %v3952
        %v3955 = vsel %vm666, %v3951, %v3953
        %v3956 = vsel %vm666, %v3948, %v3950
        %v3957 = vsel %vm666, %v3949, %v3951
        %v3958 = vsel %vm666, %v3946, %v3948
        %v3959 = vsel %vm666, %v3947, %v3949
        %v3960 = vsel %vm666, %v3944, %v3946
        %v3961 = vsel %vm666, %v3945, %v3947
        %v3962 = vsel %vm666, %v3942, %v3944
        %v3963 = vsel %vm666, %v3943, %v3945
        %v3964 = vsel %vm666, %v3940, %v3942
        %v3965 = vsel %vm666, %v3941, %v3943
        %v3966 = vsel %vm666, %v3938, %v3940
        %v3967 = vsel %vm666, %v3939, %v3941
        %v3968 = vsel %vm666, %v3952, %v3938
        %v3969 = vsel %vm666, %v3953, %v3939
        %v3970 = vsel %vm2456, %v3966, 0.0
        %v3971 = vsel %vm2456, %v3967, 0.0
        %v3972 = vsel %vm2457, %v3964, 0.0
        %v3973 = vsel %vm2457, %v3965, 0.0
        %v3974 = vsel %vm2458, %v3962, 0.0
        %v3975 = vsel %vm2458, %v3963, 0.0
        %v3976 = vsel %vm2459, %v3960, 0.0
        %v3977 = vsel %vm2459, %v3961, 0.0
        %v3978 = vsel %vm2460, %v3958, 0.0
        %v3979 = vsel %vm2460, %v3959, 0.0
        %v3980 = vsel %vm2461, %v3956, 0.0
        %v3981 = vsel %vm2461, %v3957, 0.0
        %v3982 = vsel %vm2462, %v3954, 0.0
        %v3983 = vsel %vm2462, %v3955, 0.0
        %v3984 = vsel %vm2463, %v3968, 0.0
        %v3985 = vsel %vm2463, %v3969, 0.0
        %v3986 = vpack.c.bf16 %v3924, %v3922
        %v3987 = vpack.c.bf16 %v3925, %v3923
        %v3988 = vpack.c.bf16 %v3876, %v3874
        %v3989 = vpack.c.bf16 %v3877, %v3875
        %v3990 = vpack.c.bf16 %v3972, %v3970
        %v3991 = vpack.c.bf16 %v3973, %v3971
        %v3992 = vpack.c.bf16 %v3928, %v3926
        %v3993 = vpack.c.bf16 %v3929, %v3927
        %v3994 = vpack.c.bf16 %v3880, %v3878
        %v3995 = vpack.c.bf16 %v3881, %v3879
        %v3996 = vpack.c.bf16 %v3976, %v3974
        %v3997 = vpack.c.bf16 %v3977, %v3975
        %v3998 = vpack.c.bf16 %v3932, %v3930
        %v3999 = vpack.c.bf16 %v3933, %v3931
        %v4000 = vpack.c.bf16 %v3884, %v3882
        %v4001 = vpack.c.bf16 %v3885, %v3883
        %v4002 = vpack.c.bf16 %v3980, %v3978
        %v4003 = vpack.c.bf16 %v3981, %v3979
        %v4004 = vpack.c.bf16 %v3936, %v3934
        %v4005 = vpack.c.bf16 %v3937, %v3935
        %v4006 = vpack.c.bf16 %v3888, %v3886
        %v4007 = vpack.c.bf16 %v3889, %v3887
        %v4008 = vpack.c.bf16 %v3984, %v3982
        %v4009 = vpack.c.bf16 %v3985, %v3983
        %s4010 = scalar_lea.vmem [#allocation8], 768
        %v4011 = vld [vmem:[%s4010] sm:$0xff]
        %v4012 = vld [vmem:[%s4010 + $0x8] sm:$0xff]
        %v4013 = vld [vmem:[%s4010 + $0x10] sm:$0xff]
        %v4014 = vld [vmem:[%s4010 + $0x18] sm:$0xff]
        %v4015 = vld [vmem:[%s4010 + $0x20] sm:$0xff]
        %v4016 = vld [vmem:[%s4010 + $0x28] sm:$0xff]
        %v4017 = vld [vmem:[%s4010 + $0x30] sm:$0xff]
        %v4018 = vld [vmem:[%s4010 + $0x38] sm:$0xff]
        %v4019 = vld [vmem:[%s4010 + $0x40] sm:$0xff]
        %v4020 = vld [vmem:[%s4010 + $0x48] sm:$0xff]
        %v4021 = vld [vmem:[%s4010 + $0x50] sm:$0xff]
        %v4022 = vld [vmem:[%s4010 + $0x58] sm:$0xff]
        %v4023 = vld [vmem:[%s4010 + $0x60] sm:$0xff]
        %v4024 = vld [vmem:[%s4010 + $0x68] sm:$0xff]
        %v4025 = vld [vmem:[%s4010 + $0x70] sm:$0xff]
        %v4026 = vld [vmem:[%s4010 + $0x78] sm:$0xff]
        %v4027 = vld [vmem:[%s4010 + $0x80] sm:$0xff]
        %v4028 = vld [vmem:[%s4010 + $0x88] sm:$0xff]
        %v4029 = vld [vmem:[%s4010 + $0x90] sm:$0xff]
        %v4030 = vld [vmem:[%s4010 + $0x98] sm:$0xff]
        %v4031 = vld [vmem:[%s4010 + $0xa0] sm:$0xff]
        %v4032 = vld [vmem:[%s4010 + $0xa8] sm:$0xff]
        %v4033 = vld [vmem:[%s4010 + $0xb0] sm:$0xff]
        %v4034 = vld [vmem:[%s4010 + $0xb8] sm:$0xff]
        %v4035 = vld [vmem:[%s4010 + $0xc0] sm:$0xff]
        %v4036 = vld [vmem:[%s4010 + $0xc8] sm:$0xff]
        %v4037 = vld [vmem:[%s4010 + $0xd0] sm:$0xff]
        %v4038 = vld [vmem:[%s4010 + $0xd8] sm:$0xff]
        %v4039 = vld [vmem:[%s4010 + $0xe0] sm:$0xff]
        %v4040 = vld [vmem:[%s4010 + $0xe8] sm:$0xff]
        %v4041 = vld [vmem:[%s4010 + $0xf0] sm:$0xff]
        %v4042 = vld [vmem:[%s4010 + $0xf8] sm:$0xff]
        %v4043 = vld [vmem:[%s4010 + $0x100] sm:$0xff]
        %v4044 = vld [vmem:[%s4010 + $0x108] sm:$0xff]
        %v4045 = vld [vmem:[%s4010 + $0x110] sm:$0xff]
        %v4046 = vld [vmem:[%s4010 + $0x118] sm:$0xff]
        %v4047 = vld [vmem:[%s4010 + $0x120] sm:$0xff]
        %v4048 = vld [vmem:[%s4010 + $0x128] sm:$0xff]
        %v4049 = vld [vmem:[%s4010 + $0x130] sm:$0xff]
        %v4050 = vld [vmem:[%s4010 + $0x138] sm:$0xff]
        %v4051 = vld [vmem:[%s4010 + $0x140] sm:$0xff]
        %v4052 = vld [vmem:[%s4010 + $0x148] sm:$0xff]
        %v4053 = vld [vmem:[%s4010 + $0x150] sm:$0xff]
        %v4054 = vld [vmem:[%s4010 + $0x158] sm:$0xff]
        %v4055 = vld [vmem:[%s4010 + $0x160] sm:$0xff]
        %v4056 = vld [vmem:[%s4010 + $0x168] sm:$0xff]
        %v4057 = vld [vmem:[%s4010 + $0x170] sm:$0xff]
        %v4058 = vld [vmem:[%s4010 + $0x178] sm:$0xff]
        %v4059 = vld [vmem:[%s4010 + $0x180] sm:$0xff]
        %v4060 = vld [vmem:[%s4010 + $0x188] sm:$0xff]
        %v4061 = vld [vmem:[%s4010 + $0x190] sm:$0xff]
        %v4062 = vld [vmem:[%s4010 + $0x198] sm:$0xff]
        %v4063 = vld [vmem:[%s4010 + $0x1a0] sm:$0xff]
        %v4064 = vld [vmem:[%s4010 + $0x1a8] sm:$0xff]
        %v4065 = vld [vmem:[%s4010 + $0x1b0] sm:$0xff]
        %v4066 = vld [vmem:[%s4010 + $0x1b8] sm:$0xff]
        %v4067 = vld [vmem:[%s4010 + $0x1c0] sm:$0xff]
        %v4068 = vld [vmem:[%s4010 + $0x1c8] sm:$0xff]
        %v4069 = vld [vmem:[%s4010 + $0x1d0] sm:$0xff]
        %v4070 = vld [vmem:[%s4010 + $0x1d8] sm:$0xff]
        %v4071 = vld [vmem:[%s4010 + $0x1e0] sm:$0xff]
        %v4072 = vld [vmem:[%s4010 + $0x1e8] sm:$0xff]
        %v4073 = vld [vmem:[%s4010 + $0x1f0] sm:$0xff]
        %v4074 = vld [vmem:[%s4010 + $0x1f8] sm:$0xff]
        %v4075 = vld [vmem:[%s4010 + $0x200] sm:$0xff]
        %v4076 = vld [vmem:[%s4010 + $0x208] sm:$0xff]
        %v4077 = vld [vmem:[%s4010 + $0x210] sm:$0xff]
        %v4078 = vld [vmem:[%s4010 + $0x218] sm:$0xff]
        %v4079 = vld [vmem:[%s4010 + $0x220] sm:$0xff]
        %v4080 = vld [vmem:[%s4010 + $0x228] sm:$0xff]
        %v4081 = vld [vmem:[%s4010 + $0x230] sm:$0xff]
        %v4082 = vld [vmem:[%s4010 + $0x238] sm:$0xff]
        %v4083 = vld [vmem:[%s4010 + $0x240] sm:$0xff]
        %v4084 = vld [vmem:[%s4010 + $0x248] sm:$0xff]
        %v4085 = vld [vmem:[%s4010 + $0x250] sm:$0xff]
        %v4086 = vld [vmem:[%s4010 + $0x258] sm:$0xff]
        %v4087 = vld [vmem:[%s4010 + $0x260] sm:$0xff]
        %v4088 = vld [vmem:[%s4010 + $0x268] sm:$0xff]
        %v4089 = vld [vmem:[%s4010 + $0x270] sm:$0xff]
        %v4090 = vld [vmem:[%s4010 + $0x278] sm:$0xff]
        %v4091 = vld [vmem:[%s4010 + $0x280] sm:$0xff]
        %v4092 = vld [vmem:[%s4010 + $0x288] sm:$0xff]
        %v4093 = vld [vmem:[%s4010 + $0x290] sm:$0xff]
        %v4094 = vld [vmem:[%s4010 + $0x298] sm:$0xff]
        %v4095 = vld [vmem:[%s4010 + $0x2a0] sm:$0xff]
        %v4096 = vld [vmem:[%s4010 + $0x2a8] sm:$0xff]
        %v4097 = vld [vmem:[%s4010 + $0x2b0] sm:$0xff]
        %v4098 = vld [vmem:[%s4010 + $0x2b8] sm:$0xff]
        %v4099 = vld [vmem:[%s4010 + $0x2c0] sm:$0xff]
        %v4100 = vld [vmem:[%s4010 + $0x2c8] sm:$0xff]
        %v4101 = vld [vmem:[%s4010 + $0x2d0] sm:$0xff]
        %v4102 = vld [vmem:[%s4010 + $0x2d8] sm:$0xff]
        %v4103 = vld [vmem:[%s4010 + $0x2e0] sm:$0xff]
        %v4104 = vld [vmem:[%s4010 + $0x2e8] sm:$0xff]
        %v4105 = vld [vmem:[%s4010 + $0x2f0] sm:$0xff]
        %v4106 = vld [vmem:[%s4010 + $0x2f8] sm:$0xff]
        %s4107 = scalar_lea.vmem [#allocation10], 4
        %v4108 = vld [vmem:[%s4107] sm:$0x3]
        %v4110 = vlaneseq
        %v4111 = vshrl.u32 %v4110, 7
        %v4112 = vsub.s32 0, %v4111
        %v4113 = vrot.slane %v4108, %v4112
        %v4114 = vlaneseq
        %v4115 = vshrl.u32 %v4114, 7
        %v4116 = vsub.s32 1, %v4115
        %v4117 = vrot.slane %v4108, %v4116
        %v4216 = vunpack.c.l.b16 %v4011
        %v4217 = vunpack.c.h.b16 %v4011
        %v4218 = vunpack.c.l.b16 %v4012
        %v4219 = vunpack.c.h.b16 %v4012
        %v4220 = vunpack.c.l.b16 %v4013
        %v4221 = vunpack.c.h.b16 %v4013
        %v4222 = vunpack.c.l.b16 %v4014
        %v4223 = vunpack.c.h.b16 %v4014
        %v4224 = vunpack.c.l.b16 %v4015
        %v4225 = vunpack.c.h.b16 %v4015
        %v4226 = vunpack.c.l.b16 %v4016
        %v4227 = vunpack.c.h.b16 %v4016
        %v4228 = vunpack.c.l.b16 %v4017
        %v4229 = vunpack.c.h.b16 %v4017
        %v4230 = vunpack.c.l.b16 %v4018
        %v4231 = vunpack.c.h.b16 %v4018
        %v4232 = vunpack.c.l.b16 %v4019
        %v4233 = vunpack.c.h.b16 %v4019
        %v4234 = vunpack.c.l.b16 %v4020
        %v4235 = vunpack.c.h.b16 %v4020
        %v4236 = vunpack.c.l.b16 %v4021
        %v4237 = vunpack.c.h.b16 %v4021
        %v4238 = vunpack.c.l.b16 %v4022
        %v4239 = vunpack.c.h.b16 %v4022
        %v4240 = vunpack.c.l.b16 %v4023
        %v4241 = vunpack.c.h.b16 %v4023
        %v4242 = vunpack.c.l.b16 %v4024
        %v4243 = vunpack.c.h.b16 %v4024
        %v4244 = vunpack.c.l.b16 %v4025
        %v4245 = vunpack.c.h.b16 %v4025
        %v4246 = vunpack.c.l.b16 %v4026
        %v4247 = vunpack.c.h.b16 %v4026
        %v4248 = vunpack.c.l.b16 %v4027
        %v4249 = vunpack.c.h.b16 %v4027
        %v4250 = vunpack.c.l.b16 %v4028
        %v4251 = vunpack.c.h.b16 %v4028
        %v4252 = vunpack.c.l.b16 %v4029
        %v4253 = vunpack.c.h.b16 %v4029
        %v4254 = vunpack.c.l.b16 %v4030
        %v4255 = vunpack.c.h.b16 %v4030
        %v4256 = vunpack.c.l.b16 %v4031
        %v4257 = vunpack.c.h.b16 %v4031
        %v4258 = vunpack.c.l.b16 %v4032
        %v4259 = vunpack.c.h.b16 %v4032
        %v4260 = vunpack.c.l.b16 %v4033
        %v4261 = vunpack.c.h.b16 %v4033
        %v4262 = vunpack.c.l.b16 %v4034
        %v4263 = vunpack.c.h.b16 %v4034
        %v4264 = vunpack.c.l.b16 %v4035
        %v4265 = vunpack.c.h.b16 %v4035
        %v4266 = vunpack.c.l.b16 %v4036
        %v4267 = vunpack.c.h.b16 %v4036
        %v4268 = vunpack.c.l.b16 %v4037
        %v4269 = vunpack.c.h.b16 %v4037
        %v4270 = vunpack.c.l.b16 %v4038
        %v4271 = vunpack.c.h.b16 %v4038
        %v4272 = vunpack.c.l.b16 %v4039
        %v4273 = vunpack.c.h.b16 %v4039
        %v4274 = vunpack.c.l.b16 %v4040
        %v4275 = vunpack.c.h.b16 %v4040
        %v4276 = vunpack.c.l.b16 %v4041
        %v4277 = vunpack.c.h.b16 %v4041
        %v4278 = vunpack.c.l.b16 %v4042
        %v4279 = vunpack.c.h.b16 %v4042
        %v4280 = vunpack.c.l.b16 %v4043
        %v4281 = vunpack.c.h.b16 %v4043
        %v4282 = vunpack.c.l.b16 %v4044
        %v4283 = vunpack.c.h.b16 %v4044
        %v4284 = vunpack.c.l.b16 %v4045
        %v4285 = vunpack.c.h.b16 %v4045
        %v4286 = vunpack.c.l.b16 %v4046
        %v4287 = vunpack.c.h.b16 %v4046
        %v4288 = vunpack.c.l.b16 %v4047
        %v4289 = vunpack.c.h.b16 %v4047
        %v4290 = vunpack.c.l.b16 %v4048
        %v4291 = vunpack.c.h.b16 %v4048
        %v4292 = vunpack.c.l.b16 %v4049
        %v4293 = vunpack.c.h.b16 %v4049
        %v4294 = vunpack.c.l.b16 %v4050
        %v4295 = vunpack.c.h.b16 %v4050
        %v4296 = vunpack.c.l.b16 %v4051
        %v4297 = vunpack.c.h.b16 %v4051
        %v4298 = vunpack.c.l.b16 %v4052
        %v4299 = vunpack.c.h.b16 %v4052
        %v4300 = vunpack.c.l.b16 %v4053
        %v4301 = vunpack.c.h.b16 %v4053
        %v4302 = vunpack.c.l.b16 %v4054
        %v4303 = vunpack.c.h.b16 %v4054
        %v4304 = vunpack.c.l.b16 %v4055
        %v4305 = vunpack.c.h.b16 %v4055
        %v4306 = vunpack.c.l.b16 %v4056
        %v4307 = vunpack.c.h.b16 %v4056
        %v4308 = vunpack.c.l.b16 %v4057
        %v4309 = vunpack.c.h.b16 %v4057
        %v4310 = vunpack.c.l.b16 %v4058
        %v4311 = vunpack.c.h.b16 %v4058
        %v4312 = vunpack.c.l.b16 %v4059
        %v4313 = vunpack.c.h.b16 %v4059
        %v4314 = vunpack.c.l.b16 %v4060
        %v4315 = vunpack.c.h.b16 %v4060
        %v4316 = vunpack.c.l.b16 %v4061
        %v4317 = vunpack.c.h.b16 %v4061
        %v4318 = vunpack.c.l.b16 %v4062
        %v4319 = vunpack.c.h.b16 %v4062
        %v4320 = vunpack.c.l.b16 %v4063
        %v4321 = vunpack.c.h.b16 %v4063
        %v4322 = vunpack.c.l.b16 %v4064
        %v4323 = vunpack.c.h.b16 %v4064
        %v4324 = vunpack.c.l.b16 %v4065
        %v4325 = vunpack.c.h.b16 %v4065
        %v4326 = vunpack.c.l.b16 %v4066
        %v4327 = vunpack.c.h.b16 %v4066
        %v4328 = vunpack.c.l.b16 %v4067
        %v4329 = vunpack.c.h.b16 %v4067
        %v4330 = vunpack.c.l.b16 %v4068
        %v4331 = vunpack.c.h.b16 %v4068
        %v4332 = vunpack.c.l.b16 %v4069
        %v4333 = vunpack.c.h.b16 %v4069
        %v4334 = vunpack.c.l.b16 %v4070
        %v4335 = vunpack.c.h.b16 %v4070
        %v4336 = vunpack.c.l.b16 %v4071
        %v4337 = vunpack.c.h.b16 %v4071
        %v4338 = vunpack.c.l.b16 %v4072
        %v4339 = vunpack.c.h.b16 %v4072
        %v4340 = vunpack.c.l.b16 %v4073
        %v4341 = vunpack.c.h.b16 %v4073
        %v4342 = vunpack.c.l.b16 %v4074
        %v4343 = vunpack.c.h.b16 %v4074
        %v4344 = vunpack.c.l.b16 %v4075
        %v4345 = vunpack.c.h.b16 %v4075
        %v4346 = vunpack.c.l.b16 %v4076
        %v4347 = vunpack.c.h.b16 %v4076
        %v4348 = vunpack.c.l.b16 %v4077
        %v4349 = vunpack.c.h.b16 %v4077
        %v4350 = vunpack.c.l.b16 %v4078
        %v4351 = vunpack.c.h.b16 %v4078
        %v4352 = vunpack.c.l.b16 %v4079
        %v4353 = vunpack.c.h.b16 %v4079
        %v4354 = vunpack.c.l.b16 %v4080
        %v4355 = vunpack.c.h.b16 %v4080
        %v4356 = vunpack.c.l.b16 %v4081
        %v4357 = vunpack.c.h.b16 %v4081
        %v4358 = vunpack.c.l.b16 %v4082
        %v4359 = vunpack.c.h.b16 %v4082
        %v4360 = vunpack.c.l.b16 %v4083
        %v4361 = vunpack.c.h.b16 %v4083
        %v4362 = vunpack.c.l.b16 %v4084
        %v4363 = vunpack.c.h.b16 %v4084
        %v4364 = vunpack.c.l.b16 %v4085
        %v4365 = vunpack.c.h.b16 %v4085
        %v4366 = vunpack.c.l.b16 %v4086
        %v4367 = vunpack.c.h.b16 %v4086
        %v4368 = vunpack.c.l.b16 %v4087
        %v4369 = vunpack.c.h.b16 %v4087
        %v4370 = vunpack.c.l.b16 %v4088
        %v4371 = vunpack.c.h.b16 %v4088
        %v4372 = vunpack.c.l.b16 %v4089
        %v4373 = vunpack.c.h.b16 %v4089
        %v4374 = vunpack.c.l.b16 %v4090
        %v4375 = vunpack.c.h.b16 %v4090
        %v4376 = vunpack.c.l.b16 %v4091
        %v4377 = vunpack.c.h.b16 %v4091
        %v4378 = vunpack.c.l.b16 %v4092
        %v4379 = vunpack.c.h.b16 %v4092
        %v4380 = vunpack.c.l.b16 %v4093
        %v4381 = vunpack.c.h.b16 %v4093
        %v4382 = vunpack.c.l.b16 %v4094
        %v4383 = vunpack.c.h.b16 %v4094
        %v4384 = vunpack.c.l.b16 %v4095
        %v4385 = vunpack.c.h.b16 %v4095
        %v4386 = vunpack.c.l.b16 %v4096
        %v4387 = vunpack.c.h.b16 %v4096
        %v4388 = vunpack.c.l.b16 %v4097
        %v4389 = vunpack.c.h.b16 %v4097
        %v4390 = vunpack.c.l.b16 %v4098
        %v4391 = vunpack.c.h.b16 %v4098
        %v4392 = vunpack.c.l.b16 %v4099
        %v4393 = vunpack.c.h.b16 %v4099
        %v4394 = vunpack.c.l.b16 %v4100
        %v4395 = vunpack.c.h.b16 %v4100
        %v4396 = vunpack.c.l.b16 %v4101
        %v4397 = vunpack.c.h.b16 %v4101
        %v4398 = vunpack.c.l.b16 %v4102
        %v4399 = vunpack.c.h.b16 %v4102
        %v4400 = vunpack.c.l.b16 %v4103
        %v4401 = vunpack.c.h.b16 %v4103
        %v4402 = vunpack.c.l.b16 %v4104
        %v4403 = vunpack.c.h.b16 %v4104
        %v4404 = vunpack.c.l.b16 %v4105
        %v4405 = vunpack.c.h.b16 %v4105
        %v4406 = vunpack.c.l.b16 %v4106
        %v4407 = vunpack.c.h.b16 %v4106
        %v4408 = vpack.c.b16 %v4218, %v4216
        %v4409 = vpack.c.b16 %v4219, %v4217
        %v4410 = vpack.c.b16 %v4222, %v4220
        %v4411 = vpack.c.b16 %v4223, %v4221
        %v4412 = vpack.c.b16 %v4226, %v4224
        %v4413 = vpack.c.b16 %v4227, %v4225
        %v4414 = vpack.c.b16 %v4230, %v4228
        %v4415 = vpack.c.b16 %v4231, %v4229
        %v4416 = vpack.c.b16 %v4234, %v4232
        %v4417 = vpack.c.b16 %v4235, %v4233
        %v4418 = vpack.c.b16 %v4238, %v4236
        %v4419 = vpack.c.b16 %v4239, %v4237
        %v4420 = vpack.c.b16 %v4242, %v4240
        %v4421 = vpack.c.b16 %v4243, %v4241
        %v4422 = vpack.c.b16 %v4246, %v4244
        %v4423 = vpack.c.b16 %v4247, %v4245
        %v4424 = vpack.c.b16 %v4250, %v4248
        %v4425 = vpack.c.b16 %v4251, %v4249
        %v4426 = vpack.c.b16 %v4254, %v4252
        %v4427 = vpack.c.b16 %v4255, %v4253
        %v4428 = vpack.c.b16 %v4258, %v4256
        %v4429 = vpack.c.b16 %v4259, %v4257
        %v4430 = vpack.c.b16 %v4262, %v4260
        %v4431 = vpack.c.b16 %v4263, %v4261
        %v4432 = vpack.c.b16 %v4266, %v4264
        %v4433 = vpack.c.b16 %v4267, %v4265
        %v4434 = vpack.c.b16 %v4270, %v4268
        %v4435 = vpack.c.b16 %v4271, %v4269
        %v4436 = vpack.c.b16 %v4274, %v4272
        %v4437 = vpack.c.b16 %v4275, %v4273
        %v4438 = vpack.c.b16 %v4278, %v4276
        %v4439 = vpack.c.b16 %v4279, %v4277
        %v4440 = vpack.c.b16 %v4282, %v4280
        %v4441 = vpack.c.b16 %v4283, %v4281
        %v4442 = vpack.c.b16 %v4286, %v4284
        %v4443 = vpack.c.b16 %v4287, %v4285
        %v4444 = vpack.c.b16 %v4290, %v4288
        %v4445 = vpack.c.b16 %v4291, %v4289
        %v4446 = vpack.c.b16 %v4294, %v4292
        %v4447 = vpack.c.b16 %v4295, %v4293
        %v4448 = vpack.c.b16 %v4298, %v4296
        %v4449 = vpack.c.b16 %v4299, %v4297
        %v4450 = vpack.c.b16 %v4302, %v4300
        %v4451 = vpack.c.b16 %v4303, %v4301
        %v4452 = vpack.c.b16 %v4306, %v4304
        %v4453 = vpack.c.b16 %v4307, %v4305
        %v4454 = vpack.c.b16 %v4310, %v4308
        %v4455 = vpack.c.b16 %v4311, %v4309
        %v4456 = vpack.c.b16 %v4314, %v4312
        %v4457 = vpack.c.b16 %v4315, %v4313
        %v4458 = vpack.c.b16 %v4318, %v4316
        %v4459 = vpack.c.b16 %v4319, %v4317
        %v4460 = vpack.c.b16 %v4322, %v4320
        %v4461 = vpack.c.b16 %v4323, %v4321
        %v4462 = vpack.c.b16 %v4326, %v4324
        %v4463 = vpack.c.b16 %v4327, %v4325
        %v4464 = vpack.c.b16 %v4330, %v4328
        %v4465 = vpack.c.b16 %v4331, %v4329
        %v4466 = vpack.c.b16 %v4334, %v4332
        %v4467 = vpack.c.b16 %v4335, %v4333
        %v4468 = vpack.c.b16 %v4338, %v4336
        %v4469 = vpack.c.b16 %v4339, %v4337
        %v4470 = vpack.c.b16 %v4342, %v4340
        %v4471 = vpack.c.b16 %v4343, %v4341
        %v4472 = vpack.c.b16 %v4346, %v4344
        %v4473 = vpack.c.b16 %v4347, %v4345
        %v4474 = vpack.c.b16 %v4350, %v4348
        %v4475 = vpack.c.b16 %v4351, %v4349
        %v4476 = vpack.c.b16 %v4354, %v4352
        %v4477 = vpack.c.b16 %v4355, %v4353
        %v4478 = vpack.c.b16 %v4358, %v4356
        %v4479 = vpack.c.b16 %v4359, %v4357
        %v4480 = vpack.c.b16 %v4362, %v4360
        %v4481 = vpack.c.b16 %v4363, %v4361
        %v4482 = vpack.c.b16 %v4366, %v4364
        %v4483 = vpack.c.b16 %v4367, %v4365
        %v4484 = vpack.c.b16 %v4370, %v4368
        %v4485 = vpack.c.b16 %v4371, %v4369
        %v4486 = vpack.c.b16 %v4374, %v4372
        %v4487 = vpack.c.b16 %v4375, %v4373
        %v4488 = vpack.c.b16 %v4378, %v4376
        %v4489 = vpack.c.b16 %v4379, %v4377
        %v4490 = vpack.c.b16 %v4382, %v4380
        %v4491 = vpack.c.b16 %v4383, %v4381
        %v4492 = vpack.c.b16 %v4386, %v4384
        %v4493 = vpack.c.b16 %v4387, %v4385
        %v4494 = vpack.c.b16 %v4390, %v4388
        %v4495 = vpack.c.b16 %v4391, %v4389
        %v4496 = vpack.c.b16 %v4394, %v4392
        %v4497 = vpack.c.b16 %v4395, %v4393
        %v4498 = vpack.c.b16 %v4398, %v4396
        %v4499 = vpack.c.b16 %v4399, %v4397
        %v4500 = vpack.c.b16 %v4402, %v4400
        %v4501 = vpack.c.b16 %v4403, %v4401
        %v4502 = vpack.c.b16 %v4406, %v4404
        %v4503 = vpack.c.b16 %v4407, %v4405
        %4600 = vmatprep.subr.bf16.mxu0 %v4409
        %4601 = vmatpush1.bf16.msra.mxu0 %v4408
        %4602 = vmatprep.subr.bf16.mxu0 %v4411
        %4603 = vmatpush1.bf16.msra.mxu0 %v4410
        %4604 = vmatprep.subr.bf16.mxu0 %v4413
        %4605 = vmatpush1.bf16.msra.mxu0 %v4412
        %4606 = vmatprep.subr.bf16.mxu0 %v4415
        %4607 = vmatpush1.bf16.msra.mxu0 %v4414
        %4608 = vmatprep.subr.bf16.mxu0 %v4417
        %4609 = vmatpush1.bf16.msra.mxu0 %v4416
        %4610 = vmatprep.subr.bf16.mxu0 %v4419
        %4611 = vmatpush1.bf16.msra.mxu0 %v4418
        %4612 = vmatprep.subr.bf16.mxu0 %v4421
        %4613 = vmatpush1.bf16.msra.mxu0 %v4420
        %4614 = vmatprep.subr.bf16.mxu0 %v4423
        %4615 = vmatpush1.bf16.msra.mxu0 %v4422
        %4616 = vmatprep.subr.bf16.mxu0 %v4425
        %4617 = vmatpush1.bf16.msra.mxu0 %v4424
        %4618 = vmatprep.subr.bf16.mxu0 %v4427
        %4619 = vmatpush1.bf16.msra.mxu0 %v4426
        %4620 = vmatprep.subr.bf16.mxu0 %v4429
        %4621 = vmatpush1.bf16.msra.mxu0 %v4428
        %4622 = vmatprep.subr.bf16.mxu0 %v4431
        %4623 = vmatpush1.bf16.msra.mxu0 %v4430
        %4624 = vmatprep.subr.bf16.mxu0 %v4433
        %4625 = vmatpush1.bf16.msra.mxu0 %v4432
        %4626 = vmatprep.subr.bf16.mxu0 %v4435
        %4627 = vmatpush1.bf16.msra.mxu0 %v4434
        %4628 = vmatprep.subr.bf16.mxu0 %v4437
        %4629 = vmatpush1.bf16.msra.mxu0 %v4436
        %4630 = vmatprep.subr.bf16.mxu0 %v4439
        %4631 = vmatpush1.bf16.msra.mxu0 %v4438
        %4632 = vmatprep.mubr.bf16.mxu0 %v3987
        %4633 = vmatmul.mubr.bf16.gmra.mrb[0].mxu0 %v3986
        %v4634 = vpop.f32.mrb[0].mxu0
        %v4635 = vadd.f32 %v4113, %v4634
        %v4636 = vpop.f32.mrb[0].mxu0
        %v4637 = vadd.f32 %v4117, %v4636
        %v4638 = vpop.f32.mrb[0].mxu0
        %v4639 = vadd.f32 %v4113, %v4638
        %v4640 = vpop.f32.mrb[0].mxu0
        %v4641 = vadd.f32 %v4117, %v4640
        %4642 = vmatprep.mubr.bf16.mxu0 %v3993
        %4643 = vmatmul.mubr.bf16.gmra.mrb[0].mxu0 %v3992
        %v4644 = vpop.f32.mrb[0].mxu0
        %v4645 = vadd.f32 %v4113, %v4644
        %v4646 = vpop.f32.mrb[0].mxu0
        %v4647 = vadd.f32 %v4117, %v4646
        %v4648 = vpop.f32.mrb[0].mxu0
        %v4649 = vadd.f32 %v4113, %v4648
        %v4650 = vpop.f32.mrb[0].mxu0
        %v4651 = vadd.f32 %v4117, %v4650
        %4652 = vmatprep.mubr.bf16.mxu0 %v3999
        %4653 = vmatmul.mubr.bf16.gmra.mrb[0].mxu0 %v3998
        %v4654 = vpop.f32.mrb[0].mxu0
        %v4655 = vadd.f32 %v4113, %v4654
        %v4656 = vpop.f32.mrb[0].mxu0
        %v4657 = vadd.f32 %v4117, %v4656
        %v4658 = vpop.f32.mrb[0].mxu0
        %v4659 = vadd.f32 %v4113, %v4658
        %v4660 = vpop.f32.mrb[0].mxu0
        %v4661 = vadd.f32 %v4117, %v4660
        %4662 = vmatprep.mubr.bf16.mxu0 %v4005
        %4663 = vmatmul.mubr.bf16.gmra.mrb[0].mxu0 %v4004
        %v4664 = vpop.f32.mrb[0].mxu0
        %v4665 = vadd.f32 %v4113, %v4664
        %v4666 = vpop.f32.mrb[0].mxu0
        %v4667 = vadd.f32 %v4117, %v4666
        %v4668 = vpop.f32.mrb[0].mxu0
        %v4669 = vadd.f32 %v4113, %v4668
        %v4670 = vpop.f32.mrb[0].mxu0
        %v4671 = vadd.f32 %v4117, %v4670
        %4672 = vdwg.mxu0
        %4673 = vmatprep.subr.bf16.mxu0 %v4441
        %4674 = vmatpush1.bf16.msra.mxu0 %v4440
        %4675 = vmatprep.subr.bf16.mxu0 %v4443
        %4676 = vmatpush1.bf16.msra.mxu0 %v4442
        %4677 = vmatprep.subr.bf16.mxu0 %v4445
        %4678 = vmatpush1.bf16.msra.mxu0 %v4444
        %4679 = vmatprep.subr.bf16.mxu0 %v4447
        %4680 = vmatpush1.bf16.msra.mxu0 %v4446
        %4681 = vmatprep.subr.bf16.mxu0 %v4449
        %4682 = vmatpush1.bf16.msra.mxu0 %v4448
        %4683 = vmatprep.subr.bf16.mxu0 %v4451
        %4684 = vmatpush1.bf16.msra.mxu0 %v4450
        %4685 = vmatprep.subr.bf16.mxu0 %v4453
        %4686 = vmatpush1.bf16.msra.mxu0 %v4452
        %4687 = vmatprep.subr.bf16.mxu0 %v4455
        %4688 = vmatpush1.bf16.msra.mxu0 %v4454
        %4689 = vmatprep.subr.bf16.mxu0 %v4457
        %4690 = vmatpush1.bf16.msra.mxu0 %v4456
        %4691 = vmatprep.subr.bf16.mxu0 %v4459
        %4692 = vmatpush1.bf16.msra.mxu0 %v4458
        %4693 = vmatprep.subr.bf16.mxu0 %v4461
        %4694 = vmatpush1.bf16.msra.mxu0 %v4460
        %4695 = vmatprep.subr.bf16.mxu0 %v4463
        %4696 = vmatpush1.bf16.msra.mxu0 %v4462
        %4697 = vmatprep.subr.bf16.mxu0 %v4465
        %4698 = vmatpush1.bf16.msra.mxu0 %v4464
        %4699 = vmatprep.subr.bf16.mxu0 %v4467
        %4700 = vmatpush1.bf16.msra.mxu0 %v4466
        %4701 = vmatprep.subr.bf16.mxu0 %v4469
        %4702 = vmatpush1.bf16.msra.mxu0 %v4468
        %4703 = vmatprep.subr.bf16.mxu0 %v4471
        %4704 = vmatpush1.bf16.msra.mxu0 %v4470
        %4705 = vmatprep.mubr.bf16.mxu0 %v3989
        %4706 = vmatmul.mubr.bf16.gmra.mrb[0].mxu0 %v3988
        %v4707 = vpop.f32.mrb[0].mxu0
        %v4708 = vadd.f32 %v4635, %v4707
        %v4709 = vpop.f32.mrb[0].mxu0
        %v4710 = vadd.f32 %v4637, %v4709
        %v4711 = vpop.f32.mrb[0].mxu0
        %v4712 = vadd.f32 %v4639, %v4711
        %v4713 = vpop.f32.mrb[0].mxu0
        %v4714 = vadd.f32 %v4641, %v4713
        %4715 = vmatprep.mubr.bf16.mxu0 %v3995
        %4716 = vmatmul.mubr.bf16.gmra.mrb[0].mxu0 %v3994
        %v4717 = vpop.f32.mrb[0].mxu0
        %v4718 = vadd.f32 %v4645, %v4717
        %v4719 = vpop.f32.mrb[0].mxu0
        %v4720 = vadd.f32 %v4647, %v4719
        %v4721 = vpop.f32.mrb[0].mxu0
        %v4722 = vadd.f32 %v4649, %v4721
        %v4723 = vpop.f32.mrb[0].mxu0
        %v4724 = vadd.f32 %v4651, %v4723
        %4725 = vmatprep.mubr.bf16.mxu0 %v4001
        %4726 = vmatmul.mubr.bf16.gmra.mrb[0].mxu0 %v4000
        %v4727 = vpop.f32.mrb[0].mxu0
        %v4728 = vadd.f32 %v4655, %v4727
        %v4729 = vpop.f32.mrb[0].mxu0
        %v4730 = vadd.f32 %v4657, %v4729
        %v4731 = vpop.f32.mrb[0].mxu0
        %v4732 = vadd.f32 %v4659, %v4731
        %v4733 = vpop.f32.mrb[0].mxu0
        %v4734 = vadd.f32 %v4661, %v4733
        %4735 = vmatprep.mubr.bf16.mxu0 %v4007
        %4736 = vmatmul.mubr.bf16.gmra.mrb[0].mxu0 %v4006
        %v4737 = vpop.f32.mrb[0].mxu0
        %v4738 = vadd.f32 %v4665, %v4737
        %v4739 = vpop.f32.mrb[0].mxu0
        %v4740 = vadd.f32 %v4667, %v4739
        %v4741 = vpop.f32.mrb[0].mxu0
        %v4742 = vadd.f32 %v4669, %v4741
        %v4743 = vpop.f32.mrb[0].mxu0
        %v4744 = vadd.f32 %v4671, %v4743
        %4745 = vdwg.mxu0
        %4746 = vmatprep.subr.bf16.mxu0 %v4473
        %4747 = vmatpush1.bf16.msra.mxu0 %v4472
        %4748 = vmatprep.subr.bf16.mxu0 %v4475
        %4749 = vmatpush1.bf16.msra.mxu0 %v4474
        %4750 = vmatprep.subr.bf16.mxu0 %v4477
        %4751 = vmatpush1.bf16.msra.mxu0 %v4476
        %4752 = vmatprep.subr.bf16.mxu0 %v4479
        %4753 = vmatpush1.bf16.msra.mxu0 %v4478
        %4754 = vmatprep.subr.bf16.mxu0 %v4481
        %4755 = vmatpush1.bf16.msra.mxu0 %v4480
        %4756 = vmatprep.subr.bf16.mxu0 %v4483
        %4757 = vmatpush1.bf16.msra.mxu0 %v4482
        %4758 = vmatprep.subr.bf16.mxu0 %v4485
        %4759 = vmatpush1.bf16.msra.mxu0 %v4484
        %4760 = vmatprep.subr.bf16.mxu0 %v4487
        %4761 = vmatpush1.bf16.msra.mxu0 %v4486
        %4762 = vmatprep.subr.bf16.mxu0 %v4489
        %4763 = vmatpush1.bf16.msra.mxu0 %v4488
        %4764 = vmatprep.subr.bf16.mxu0 %v4491
        %4765 = vmatpush1.bf16.msra.mxu0 %v4490
        %4766 = vmatprep.subr.bf16.mxu0 %v4493
        %4767 = vmatpush1.bf16.msra.mxu0 %v4492
        %4768 = vmatprep.subr.bf16.mxu0 %v4495
        %4769 = vmatpush1.bf16.msra.mxu0 %v4494
        %4770 = vmatprep.subr.bf16.mxu0 %v4497
        %4771 = vmatpush1.bf16.msra.mxu0 %v4496
        %4772 = vmatprep.subr.bf16.mxu0 %v4499
        %4773 = vmatpush1.bf16.msra.mxu0 %v4498
        %4774 = vmatprep.subr.bf16.mxu0 %v4501
        %4775 = vmatpush1.bf16.msra.mxu0 %v4500
        %4776 = vmatprep.subr.bf16.mxu0 %v4503
        %4777 = vmatpush1.bf16.msra.mxu0 %v4502
        %4778 = vmatprep.mubr.bf16.mxu0 %v3991
        %4779 = vmatmul.mubr.bf16.gmra.mrb[0].mxu0 %v3990
        %v4780 = vpop.f32.mrb[0].mxu0
        %v4781 = vadd.f32 %v4708, %v4780
        %v4782 = vpop.f32.mrb[0].mxu0
        %v4783 = vadd.f32 %v4710, %v4782
        %v4784 = vpop.f32.mrb[0].mxu0
        %v4785 = vadd.f32 %v4712, %v4784
        %v4786 = vpop.f32.mrb[0].mxu0
        %v4787 = vadd.f32 %v4714, %v4786
        %4788 = vmatprep.mubr.bf16.mxu0 %v3997
        %4789 = vmatmul.mubr.bf16.gmra.mrb[0].mxu0 %v3996
        %v4790 = vpop.f32.mrb[0].mxu0
        %v4791 = vadd.f32 %v4718, %v4790
        %v4792 = vpop.f32.mrb[0].mxu0
        %v4793 = vadd.f32 %v4720, %v4792
        %v4794 = vpop.f32.mrb[0].mxu0
        %v4795 = vadd.f32 %v4722, %v4794
        %v4796 = vpop.f32.mrb[0].mxu0
        %v4797 = vadd.f32 %v4724, %v4796
        %4798 = vmatprep.mubr.bf16.mxu0 %v4003
        %4799 = vmatmul.mubr.bf16.gmra.mrb[0].mxu0 %v4002
        %v4800 = vpop.f32.mrb[0].mxu0
        %v4801 = vadd.f32 %v4728, %v4800
        %v4802 = vpop.f32.mrb[0].mxu0
        %v4803 = vadd.f32 %v4730, %v4802
        %v4804 = vpop.f32.mrb[0].mxu0
        %v4805 = vadd.f32 %v4732, %v4804
        %v4806 = vpop.f32.mrb[0].mxu0
        %v4807 = vadd.f32 %v4734, %v4806
        %4808 = vmatprep.mubr.bf16.mxu0 %v4009
        %4809 = vmatmul.mubr.bf16.gmra.mrb[0].mxu0 %v4008
        %v4810 = vpop.f32.mrb[0].mxu0
        %v4811 = vadd.f32 %v4738, %v4810
        %v4812 = vpop.f32.mrb[0].mxu0
        %v4813 = vadd.f32 %v4740, %v4812
        %v4814 = vpop.f32.mrb[0].mxu0
        %v4815 = vadd.f32 %v4742, %v4814
        %v4816 = vpop.f32.mrb[0].mxu0
        %v4817 = vadd.f32 %v4744, %v4816
        %4818 = vdwg.mxu0
        %v4819 = vmax.f32 %v4781, 0.0
        %v4820 = vmax.f32 %v4783, 0.0
        %v4821 = vmax.f32 %v4785, 0.0
        %v4822 = vmax.f32 %v4787, 0.0
        %v4823 = vmax.f32 %v4791, 0.0
        %v4824 = vmax.f32 %v4793, 0.0
        %v4825 = vmax.f32 %v4795, 0.0
        %v4826 = vmax.f32 %v4797, 0.0
        %v4827 = vmax.f32 %v4801, 0.0
        %v4828 = vmax.f32 %v4803, 0.0
        %v4829 = vmax.f32 %v4805, 0.0
        %v4830 = vmax.f32 %v4807, 0.0
        %v4831 = vmax.f32 %v4811, 0.0
        %v4832 = vmax.f32 %v4813, 0.0
        %v4833 = vmax.f32 %v4815, 0.0
        %v4834 = vmax.f32 %v4817, 0.0
        %v4835 = vpack.c.bf16 %v4821, %v4819
        %v4836 = vpack.c.bf16 %v4822, %v4820
        %v4837 = vpack.c.bf16 %v4825, %v4823
        %v4838 = vpack.c.bf16 %v4826, %v4824
        %v4839 = vpack.c.bf16 %v4829, %v4827
        %v4840 = vpack.c.bf16 %v4830, %v4828
        %v4841 = vpack.c.bf16 %v4833, %v4831
        %v4842 = vpack.c.bf16 %v4834, %v4832
        %v4843 = vld [vmem:[%s13] sm:$0xf]
        %v4844 = vld [vmem:[%s13 + $0x4] sm:$0xf]
        %v4845 = vld [vmem:[%s13 + $0x8] sm:$0xf]
        %v4846 = vld [vmem:[%s13 + $0xc] sm:$0xf]
        %v4847 = vld [vmem:[%s13 + $0x10] sm:$0xf]
        %v4848 = vld [vmem:[%s13 + $0x14] sm:$0xf]
        %v4849 = vld [vmem:[%s13 + $0x18] sm:$0xf]
        %v4850 = vld [vmem:[%s13 + $0x1c] sm:$0xf]
        %v4851 = vld [vmem:[%s13 + $0x20] sm:$0xf]
        %v4852 = vld [vmem:[%s13 + $0x24] sm:$0xf]
        %v4853 = vld [vmem:[%s13 + $0x28] sm:$0xf]
        %v4854 = vld [vmem:[%s13 + $0x2c] sm:$0xf]
        %v4855 = vld [vmem:[%s13 + $0x30] sm:$0xf]
        %v4856 = vld [vmem:[%s13 + $0x34] sm:$0xf]
        %v4857 = vld [vmem:[%s13 + $0x38] sm:$0xf]
        %v4858 = vld [vmem:[%s13 + $0x3c] sm:$0xf]
        %v4859 = vld [vmem:[%s13 + $0x40] sm:$0xf]
        %v4860 = vld [vmem:[%s13 + $0x44] sm:$0xf]
        %v4861 = vld [vmem:[%s13 + $0x48] sm:$0xf]
        %v4862 = vld [vmem:[%s13 + $0x4c] sm:$0xf]
        %v4863 = vld [vmem:[%s13 + $0x50] sm:$0xf]
        %v4864 = vld [vmem:[%s13 + $0x54] sm:$0xf]
        %v4865 = vld [vmem:[%s13 + $0x58] sm:$0xf]
        %v4866 = vld [vmem:[%s13 + $0x5c] sm:$0xf]
        %v4867 = vld [vmem:[%s13 + $0x60] sm:$0xf]
        %v4868 = vld [vmem:[%s13 + $0x64] sm:$0xf]
        %v4869 = vld [vmem:[%s13 + $0x68] sm:$0xf]
        %v4870 = vld [vmem:[%s13 + $0x6c] sm:$0xf]
        %v4871 = vld [vmem:[%s13 + $0x70] sm:$0xf]
        %v4872 = vld [vmem:[%s13 + $0x74] sm:$0xf]
        %v4873 = vld [vmem:[%s13 + $0x78] sm:$0xf]
        %v4874 = vld [vmem:[%s13 + $0x7c] sm:$0xf]
        %v4875 = vld [vmem:[%s14] sm:$0x1]
        %v4877 = vlaneseq
        %v4878 = vshrl.u32 %v4877, 7
        %v4879 = vsub.s32 0, %v4878
        %v4880 = vrot.slane %v4875, %v4879
        %v4914 = vunpack.c.l.b16 %v4843
        %v4915 = vunpack.c.l.b16 %v4844
        %v4916 = vunpack.c.l.b16 %v4845
        %v4917 = vunpack.c.l.b16 %v4846
        %v4918 = vunpack.c.l.b16 %v4847
        %v4919 = vunpack.c.l.b16 %v4848
        %v4920 = vunpack.c.l.b16 %v4849
        %v4921 = vunpack.c.l.b16 %v4850
        %v4922 = vunpack.c.l.b16 %v4851
        %v4923 = vunpack.c.l.b16 %v4852
        %v4924 = vunpack.c.l.b16 %v4853
        %v4925 = vunpack.c.l.b16 %v4854
        %v4926 = vunpack.c.l.b16 %v4855
        %v4927 = vunpack.c.l.b16 %v4856
        %v4928 = vunpack.c.l.b16 %v4857
        %v4929 = vunpack.c.l.b16 %v4858
        %v4930 = vunpack.c.l.b16 %v4859
        %v4931 = vunpack.c.l.b16 %v4860
        %v4932 = vunpack.c.l.b16 %v4861
        %v4933 = vunpack.c.l.b16 %v4862
        %v4934 = vunpack.c.l.b16 %v4863
        %v4935 = vunpack.c.l.b16 %v4864
        %v4936 = vunpack.c.l.b16 %v4865
        %v4937 = vunpack.c.l.b16 %v4866
        %v4938 = vunpack.c.l.b16 %v4867
        %v4939 = vunpack.c.l.b16 %v4868
        %v4940 = vunpack.c.l.b16 %v4869
        %v4941 = vunpack.c.l.b16 %v4870
        %v4942 = vunpack.c.l.b16 %v4871
        %v4943 = vunpack.c.l.b16 %v4872
        %v4944 = vunpack.c.l.b16 %v4873
        %v4945 = vunpack.c.l.b16 %v4874
        %v4946 = vpack.c.b16 %v4915, %v4914
        %v4947 = vpack.c.b16 %v4917, %v4916
        %v4948 = vpack.c.b16 %v4919, %v4918
        %v4949 = vpack.c.b16 %v4921, %v4920
        %v4950 = vpack.c.b16 %v4923, %v4922
        %v4951 = vpack.c.b16 %v4925, %v4924
        %v4952 = vpack.c.b16 %v4927, %v4926
        %v4953 = vpack.c.b16 %v4929, %v4928
        %v4954 = vpack.c.b16 %v4931, %v4930
        %v4955 = vpack.c.b16 %v4933, %v4932
        %v4956 = vpack.c.b16 %v4935, %v4934
        %v4957 = vpack.c.b16 %v4937, %v4936
        %v4958 = vpack.c.b16 %v4939, %v4938
        %v4959 = vpack.c.b16 %v4941, %v4940
        %v4960 = vpack.c.b16 %v4943, %v4942
        %v4961 = vpack.c.b16 %v4945, %v4944
        %4978 = vmatprep.subr.bf16.mxu0 0
        %4979 = vmatpush1.bf16.msra.mxu0 %v4946
        %4980 = vmatprep.subr.bf16.mxu0 0
        %4981 = vmatpush1.bf16.msra.mxu0 %v4947
        %4982 = vmatprep.subr.bf16.mxu0 0
        %4983 = vmatpush1.bf16.msra.mxu0 %v4948
        %4984 = vmatprep.subr.bf16.mxu0 0
        %4985 = vmatpush1.bf16.msra.mxu0 %v4949
        %4986 = vmatprep.subr.bf16.mxu0 0
        %4987 = vmatpush1.bf16.msra.mxu0 %v4950
        %4988 = vmatprep.subr.bf16.mxu0 0
        %4989 = vmatpush1.bf16.msra.mxu0 %v4951
        %4990 = vmatprep.subr.bf16.mxu0 0
        %4991 = vmatpush1.bf16.msra.mxu0 %v4952
        %4992 = vmatprep.subr.bf16.mxu0 0
        %4993 = vmatpush1.bf16.msra.mxu0 %v4953
        %4994 = vmatprep.subr.bf16.mxu0 0
        %4995 = vmatpush1.bf16.msra.mxu0 %v4954
        %4996 = vmatprep.subr.bf16.mxu0 0
        %4997 = vmatpush1.bf16.msra.mxu0 %v4955
        %4998 = vmatprep.subr.bf16.mxu0 0
        %4999 = vmatpush1.bf16.msra.mxu0 %v4956
        %5000 = vmatprep.subr.bf16.mxu0 0
        %5001 = vmatpush1.bf16.msra.mxu0 %v4957
        %5002 = vmatprep.subr.bf16.mxu0 0
        %5003 = vmatpush1.bf16.msra.mxu0 %v4958
        %5004 = vmatprep.subr.bf16.mxu0 0
        %5005 = vmatpush1.bf16.msra.mxu0 %v4959
        %5006 = vmatprep.subr.bf16.mxu0 0
        %5007 = vmatpush1.bf16.msra.mxu0 %v4960
        %5008 = vmatprep.subr.bf16.mxu0 0
        %5009 = vmatpush1.bf16.msra.mxu0 %v4961
        %5010 = vmatprep.mubr.bf16.mxu0 %v4836
        %5011 = vmatmul.mubr.bf16.gmra.mrb[0].mxu0 %v4835
        %v5012 = vpop.f32.mrb[0].mxu0
        %v5013 = vadd.f32 %v4880, %v5012
        %v5014 = vpop.f32.mrb[0].mxu0
        %v5015 = vpop.f32.mrb[0].mxu0
        %v5016 = vadd.f32 %v4880, %v5015
        %v5017 = vpop.f32.mrb[0].mxu0
        %5018 = vmatprep.mubr.bf16.mxu0 %v4838
        %5019 = vmatmul.mubr.bf16.gmra.mrb[0].mxu0 %v4837
        %v5020 = vpop.f32.mrb[0].mxu0
        %v5021 = vadd.f32 %v4880, %v5020
        %v5022 = vpop.f32.mrb[0].mxu0
        %v5023 = vpop.f32.mrb[0].mxu0
        %v5024 = vadd.f32 %v4880, %v5023
        %v5025 = vpop.f32.mrb[0].mxu0
        %5026 = vmatprep.mubr.bf16.mxu0 %v4840
        %5027 = vmatmul.mubr.bf16.gmra.mrb[0].mxu0 %v4839
        %v5028 = vpop.f32.mrb[0].mxu0
        %v5029 = vadd.f32 %v4880, %v5028
        %v5030 = vpop.f32.mrb[0].mxu0
        %v5031 = vpop.f32.mrb[0].mxu0
        %v5032 = vadd.f32 %v4880, %v5031
        %v5033 = vpop.f32.mrb[0].mxu0
        %5034 = vmatprep.mubr.bf16.mxu0 %v4842
        %5035 = vmatmul.mubr.bf16.gmra.mrb[0].mxu0 %v4841
        %v5036 = vpop.f32.mrb[0].mxu0
        %v5037 = vadd.f32 %v4880, %v5036
        %v5038 = vpop.f32.mrb[0].mxu0
        %v5039 = vpop.f32.mrb[0].mxu0
        %v5040 = vadd.f32 %v4880, %v5039
        %v5041 = vpop.f32.mrb[0].mxu0
        %5042 = vdwg.mxu0
        %5043 = vst.msk [vmem:[%s558] sm:$0xff] %vm691, %v5013
        %5044 = vst.msk [vmem:[%s558 + $0x8] sm:$0xff] %vm691, %v5016
        %5045 = vst.msk [vmem:[%s558 + $0x10] sm:$0xff] %vm691, %v5021
        %5046 = vst.msk [vmem:[%s558 + $0x18] sm:$0xff] %vm691, %v5024
        %5047 = vst.msk [vmem:[%s558 + $0x20] sm:$0xff] %vm691, %v5029
        %5048 = vst.msk [vmem:[%s558 + $0x28] sm:$0xff] %vm691, %v5032
        %5049 = vst.msk [vmem:[%s558 + $0x30] sm:$0xff] %vm691, %v5037
        %5050 = vst.msk [vmem:[%s558 + $0x38] sm:$0xff] %vm691, %v5040
        %s5051 = sand.u32 %s360, 1
        %s5052 = scalar_lea.sflag [#allocation4], %s5051
        %s5053 = sand.u32 %s360, 1
        %s5054 = smul.addr %s5053, 64
        %s5055 = scalar_lea.vmem [#allocation11], %s5054
        // Predicated region
        $region101: #{reconstructor_forward.1} parent=79 // pred_check
          %p5056 = pneg %p370
        $region102: #{reconstructor_forward.1} parent=79 // pred_check_branch
          %5058 = sbr.rel (%p5056) target = $region104
        $region103: #{reconstructor_forward.1} parent=79 // pred_region
          %s5060 = ssub.s32 1024, 1024
          %5061 = vsyncadd %s5052, %s5060
          %s5062 = smul.addr %s32, 8
          %s5063 = smul.addr %s5062, 128
          %s5064 = scalar_lea.hbm %s15, %s5063
          %s5065 = sshll.u32 %s5055, 4
          %s5066 = int_to_ptr.vmem [resolvable:$true] %s5065
          %5071 = dma.vmem_to_hbm [thread:$0]  %s5066, 1024, %s5064, %s5052, 128, 128, 8
        $region104: #{reconstructor_forward.1} parent=79 // pred_fallthru
          _
      $region80: #{reconstructor_forward.1} parent=5 // pred_fallthru
        _
      %p5072 = scmp.le.s32.totalorder 2, %s27
      // Predicated region
      $region105: #{reconstructor_forward.1} parent=5 // pred_check
        %p5073 = pneg %p5072
      $region106: #{reconstructor_forward.1} parent=5 // pred_check_branch
        %5075 = sbr.rel (%p5073) target = $region108
      $region107: #{reconstructor_forward.1} parent=5 // pred_region
        %s5076 = ssub.s32 %s27, 2
        // Predicated region
        $region109: #{reconstructor_forward.1} parent=107 // pred_check
          %p5077 = pneg %p376
        $region110: #{reconstructor_forward.1} parent=107 // pred_check_branch
          %5079 = sbr.rel (%p5077) target = $region112
        $region111: #{reconstructor_forward.1} parent=107 // pred_region
          %s5080 = sand.u32 %s361, 1
          %s5081 = scalar_lea.sflag [#allocation4], %s5080
          %s5082 = sand.u32 %s361, 1
          %s5083 = smul.addr %s5082, 64
          %s5084 = scalar_lea.vmem [#allocation11], %s5083
          %5085 = dma.done %s5081, 1024
        $region112: #{reconstructor_forward.1} parent=107 // pred_fallthru
          _
      $region108: #{reconstructor_forward.1} parent=5 // pred_fallthru
        _
    $region6: #{reconstructor_forward.1} parent=1 // loop_footer
      %s31 = sadd.s32 1, %s27
    $region7: #{reconstructor_forward.1} parent=1 // loop_footer_branch
      %26 = sbr.rel target = $region3
    $region8: #{reconstructor_forward.1} parent=1 // loop_exit
      _
    %5086 = vsyncpa [#allocation3], 1
    %s5087 = scalar_lea.sflag [#allocation3], 1
    %5088 = vsyncpa %s5087, 1
    %5089 = vsyncpa [#allocation6], 1
    %5090 = vsyncpa [#allocation9], 1
    %5091 = vsyncpa [#allocation4], 1
    %s5092 = scalar_lea.sflag [#allocation4], 1
    %5093 = vsyncpa %s5092, 1

</llo_original>
